<compile_context>
chip_gen: v7x
topology: tpu7x:2x2x1
jax: 0.10.0
libtpu: 0.0.40
codegen_flags: <defaults>
</compile_context>

<pallas_src>
import functools

import jax
import jax.numpy as jnp
from jax.experimental import pallas as pl
from jax.experimental.pallas import tpu as pltpu

K_RAW = 28 * 28   # 784
K_PAD = 896       # 7 * 128, lane-aligned K for the layer-1 matmul
H1 = 1024
H2 = 512


def _elementwise_dtype():
    """bf16 elementwise on chips with a bf16 VALU (v6e/v7x); f32 otherwise."""
    try:
        kind = jax.devices()[0].device_kind.lower()
    except Exception:
        return jnp.float32
    if ("v6" in kind) or ("v7" in kind) or ("7x" in kind):
        return jnp.bfloat16
    return jnp.float32


def discriminator_kernel(x_ref, w1_ref, b1_ref, w2_ref, b2_ref, w3_ref, b3_ref,
                         o_ref, *, ew_dtype):
    # Layer 1: (TB,896)bf16 @ (896,1024)bf16 -> f32 accumulation on the MXU.
    h1 = jnp.dot(x_ref[...], w1_ref[...], preferred_element_type=jnp.float32)
    h1 = (h1 + b1_ref[...]).astype(ew_dtype)
    h1 = jnp.where(h1 > 0, h1, 0.2 * h1)                      # LeakyReLU(0.2)

    # Layer 2: bf16 into the MXU, f32 accumulation, elementwise in ew_dtype.
    h2 = jnp.dot(h1.astype(jnp.bfloat16), w2_ref[...],
                 preferred_element_type=jnp.float32)
    h2 = (h2 + b2_ref[...]).astype(ew_dtype)
    h2 = jnp.where(h2 > 0, h2, 0.2 * h2)

    # Layer 3 (out_features=1): contract w3 (1,512) against h2 (TB,512) along
    # the feature axis -> a lane-dense (1, TB) logits row, so the output store
    # is an unmasked, 128-lane-aligned write (no (TB,1) masked partial store).
    logits = jax.lax.dot_general(
        w3_ref[...], h2.astype(jnp.bfloat16),
        dimension_numbers=(((1,), (1,)), ((), ())),
        preferred_element_type=jnp.float32)
    o_ref[...] = jax.nn.sigmoid(logits + b3_ref[...])


def prepare_params(params):
    """One-time conversion OUTSIDE the hot path.

    w1 is zero-padded along K (784 -> 896) and cast to bf16; w2/w3 cast to
    bf16; biases stay f32.  Call this once and reuse the result every step.
    """
    w1, b1, w2, b2, w3, b3 = params
    w1p = jnp.pad(w1, ((0, K_PAD - K_RAW), (0, 0))).astype(jnp.bfloat16)
    return (w1p, b1.astype(jnp.float32),
            w2.astype(jnp.bfloat16), b2.astype(jnp.float32),
            w3.astype(jnp.bfloat16), b3.astype(jnp.float32))


def _tiling(B):
    """Batch tile size (multiple of 16, <=512 rows) and tile count.

    Multi-tile TB is a multiple of 128 so the lane-dense (1, TB) output blocks
    satisfy the 128-lane block constraint.
    """
    if B <= 512:
        return max(16, ((B + 15) // 16) * 16), 1
    ntiles = -(-B // 512)
    per_tile = -(-B // ntiles)
    return (-(-per_tile // 128)) * 128, ntiles


def _forward(x_nchw, prepared):
    """x_nchw: (B, 1, 28, 28) float32, prepared: output of prepare_params."""
    B = x_nchw.shape[0]
    w1, b1, w2, b2, w3, b3 = prepared
    TB, ntiles = _tiling(B)
    B_pad = TB * ntiles

    # nn.Flatten + bf16 cast + zero-pad (batch -> B_pad, K -> 896).  With
    # allow_input_fusion below, XLA may fuse this producer chain straight into
    # the pallas_call input instead of materializing it in HBM.
    x_flat = x_nchw.reshape(B, K_RAW).astype(jnp.bfloat16)
    x_flat = jnp.pad(x_flat, ((0, B_pad - B), (0, K_PAD - K_RAW)))

    kernel = functools.partial(discriminator_kernel,
                               ew_dtype=_elementwise_dtype())
    const = lambda i: (0, 0)   # weights/biases: DMA'd once, stay VMEM-resident

    out_row = pl.pallas_call(
        kernel,
        out_shape=jax.ShapeDtypeStruct((1, B_pad), jnp.float32),
        grid=(ntiles,),
        in_specs=[
            pl.BlockSpec((TB, K_PAD), lambda i: (i, 0)),   # x, batch-tiled
            pl.BlockSpec((K_PAD, H1), const),              # w1 bf16 (resident)
            pl.BlockSpec((1, H1), const),                  # b1 f32
            pl.BlockSpec((H1, H2), const),                 # w2 bf16 (resident)
            pl.BlockSpec((1, H2), const),                  # b2 f32
            pl.BlockSpec((1, H2), const),                  # w3 bf16 row
            pl.BlockSpec((1, 1), const),                   # b3 f32
        ],
        out_specs=pl.BlockSpec((1, TB), lambda i: (0, i)),
        compiler_params=pltpu.CompilerParams(
            # v7x: shard batch tiles across both TensorCores when there is
            # more than one tile (the ~2.6 MiB bf16 weight re-DMA per core is
            # ~1 us); single-tile batches stay on one TC.
            dimension_semantics=(("parallel",) if ntiles > 1
                                 else ("arbitrary",)),
            vmem_limit_bytes=32 * 1024 * 1024,
            # Only the x producer (reshape/cast/pad) is fusible; weights are
            # already in their kernel dtype/layout.
            allow_input_fusion=[True, False, False, False, False, False, False],
        ),
    )(x_flat, w1, b1, w2, b2, w3, b3)

    # (1, B_pad) lane-dense row -> (B, 1) column, dropping padded batch rows.
    return out_row.reshape(B_pad, 1)[:B]


discriminator_forward = jax.jit(_forward)


def init_params(key):
    """Deterministic f32 init matching the PyTorch layer shapes.

    Linear weights for layers 1/2 are stored transposed (in, out) so the kernel
    computes x @ W; layer-3 weight is stored as a (1, 512) row.
    """
    k1, k2, k3 = jax.random.split(key, 3)

    def lin(k, fan_in, fan_out):
        bound = 1.0 / jnp.sqrt(fan_in)
        kw, kb = jax.random.split(k)
        w = jax.random.uniform(kw, (fan_in, fan_out), jnp.float32,
                               minval=-bound, maxval=bound)
        b = jax.random.uniform(kb, (1, fan_out), jnp.float32,
                               minval=-bound, maxval=bound)
        return w, b

    w1, b1 = lin(k1, K_RAW, H1)
    w2, b2 = lin(k2, H1, H2)
    w3t, b3 = lin(k3, H2, 1)         # (512, 1)
    w3 = w3t.T                        # (1, 512) row
    return (w1, b1, w2, b2, w3, b3)


def reference_forward(x_nchw, params):
    """Pure-JAX f32 reference for correctness checking."""
    w1, b1, w2, b2, w3, b3 = params
    x = x_nchw.reshape(x_nchw.shape[0], -1)
    h1 = x @ w1 + b1
    h1 = jnp.where(h1 > 0, h1, 0.2 * h1)
    h2 = h1 @ w2 + b2
    h2 = jnp.where(h2 > 0, h2, 0.2 * h2)
    return jax.nn.sigmoid(h2 @ w3.T + b3)


if __name__ == "__main__":
    key = jax.random.PRNGKey(0)
    kx, kp = jax.random.split(key)

    B = 8
    x = jax.random.normal(kx, (B, 1, 28, 28), dtype=jnp.float32)  # NCHW
    params = init_params(kp)            # f32 master params
    prepared = prepare_params(params)   # one-time bf16 conversion (cold path)

    out = jax.block_until_ready(discriminator_forward(x, prepared))
    ref = reference_forward(x, params)

    assert out.shape == (B, 1), out.shape
    # bf16 weights/activations (and bf16 elementwise on v6e/v7x) vs f32
    # reference: relaxed tolerance.
    max_err = float(jnp.max(jnp.abs(out - ref)))
    assert jnp.allclose(out, ref, atol=2.5e-2, rtol=2.5e-2), (
        f"mismatch, max_err={max_err}")

    print("KERNEL_OK")
</pallas_src>

<mosaic_0001>
module attributes {stable_mosaic.version = 11 : i64} {
  func.func @discriminator_kernel(%arg0: i32, %arg1: memref<16x896xbf16, #tpu.memory_space<vmem>>, %arg2: memref<896x1024xbf16, #tpu.memory_space<vmem>>, %arg3: memref<1x1024xf32, #tpu.memory_space<vmem>>, %arg4: memref<1024x512xbf16, #tpu.memory_space<vmem>>, %arg5: memref<1x512xf32, #tpu.memory_space<vmem>>, %arg6: memref<1x512xbf16, #tpu.memory_space<vmem>>, %arg7: memref<1x1xf32, #tpu.memory_space<vmem>>, %arg8: memref<1x16xf32, #tpu.memory_space<vmem>>) attributes {dimension_semantics = [#tpu.dimension_semantics<arbitrary>], iteration_bounds = array<i64: 1>, scalar_prefetch = 0 : i64, scratch_operands = 0 : i64, tpu.core_type = #tpu.core_type<tc>, window_params = [{transform_indices = @transform_0, window_bounds = array<i64: 16, 896>}, {pipeline_mode = #tpu.pipeline_mode<synchronous>, transform_indices = @transform_1, window_bounds = array<i64: 896, 1024>}, {pipeline_mode = #tpu.pipeline_mode<synchronous>, transform_indices = @transform_2, window_bounds = array<i64: 1, 1024>}, {pipeline_mode = #tpu.pipeline_mode<synchronous>, transform_indices = @transform_3, window_bounds = array<i64: 1024, 512>}, {pipeline_mode = #tpu.pipeline_mode<synchronous>, transform_indices = @transform_4, window_bounds = array<i64: 1, 512>}, {pipeline_mode = #tpu.pipeline_mode<synchronous>, transform_indices = @transform_5, window_bounds = array<i64: 1, 512>}, {pipeline_mode = #tpu.pipeline_mode<synchronous>, transform_indices = @transform_6, window_bounds = array<i64: 1, 1>}, {transform_indices = @transform_7, window_bounds = array<i64: 1, 16>}]} {
    %c0 = arith.constant 0 : index
    %c0_0 = arith.constant 0 : index
    %0 = vector.load %arg1[%c0, %c0_0] : memref<16x896xbf16, #tpu.memory_space<vmem>>, vector<16x896xbf16>
    %c0_1 = arith.constant 0 : index
    %c0_2 = arith.constant 0 : index
    %1 = vector.load %arg2[%c0_1, %c0_2] : memref<896x1024xbf16, #tpu.memory_space<vmem>>, vector<896x1024xbf16>
    %cst = arith.constant dense<0.000000e+00> : vector<16x1024xf32>
    %2 = tpu.matmul %0, %1, %cst {dimension_numbers = #tpu.dot_dimension_numbers<[1], [0], [0], [1], [0, 0, 1, 1], [], []>} : vector<16x896xbf16>, vector<896x1024xbf16>, vector<16x1024xf32> -> vector<16x1024xf32>
    %c0_3 = arith.constant 0 : index
    %c0_4 = arith.constant 0 : index
    %3 = vector.load %arg3[%c0_3, %c0_4] : memref<1x1024xf32, #tpu.memory_space<vmem>>, vector<1x1024xf32>
    %4 = vector.broadcast %3 : vector<1x1024xf32> to vector<16x1024xf32>
    %5 = arith.addf %2, %4 : vector<16x1024xf32>
    %cst_5 = arith.constant 0.000000e+00 : f32
    %6 = vector.broadcast %cst_5 : f32 to vector<16x1024xf32>
    %7 = arith.cmpf ogt, %5, %6 : vector<16x1024xf32>
    %cst_6 = arith.constant 2.000000e-01 : f32
    %8 = vector.broadcast %cst_6 : f32 to vector<16x1024xf32>
    %9 = arith.mulf %8, %5 : vector<16x1024xf32>
    %10 = arith.select %7, %5, %9 : vector<16x1024xi1>, vector<16x1024xf32>
    %11 = arith.truncf %10 : vector<16x1024xf32> to vector<16x1024xbf16>
    %c0_7 = arith.constant 0 : index
    %c0_8 = arith.constant 0 : index
    %12 = vector.load %arg4[%c0_7, %c0_8] : memref<1024x512xbf16, #tpu.memory_space<vmem>>, vector<1024x512xbf16>
    %cst_9 = arith.constant dense<0.000000e+00> : vector<16x512xf32>
    %13 = tpu.matmul %11, %12, %cst_9 {dimension_numbers = #tpu.dot_dimension_numbers<[1], [0], [0], [1], [0, 0, 1, 1], [], []>} : vector<16x1024xbf16>, vector<1024x512xbf16>, vector<16x512xf32> -> vector<16x512xf32>
    %c0_10 = arith.constant 0 : index
    %c0_11 = arith.constant 0 : index
    %14 = vector.load %arg5[%c0_10, %c0_11] : memref<1x512xf32, #tpu.memory_space<vmem>>, vector<1x512xf32>
    %15 = vector.broadcast %14 : vector<1x512xf32> to vector<16x512xf32>
    %16 = arith.addf %13, %15 : vector<16x512xf32>
    %cst_12 = arith.constant 0.000000e+00 : f32
    %17 = vector.broadcast %cst_12 : f32 to vector<16x512xf32>
    %18 = arith.cmpf ogt, %16, %17 : vector<16x512xf32>
    %cst_13 = arith.constant 2.000000e-01 : f32
    %19 = vector.broadcast %cst_13 : f32 to vector<16x512xf32>
    %20 = arith.mulf %19, %16 : vector<16x512xf32>
    %21 = arith.select %18, %16, %20 : vector<16x512xi1>, vector<16x512xf32>
    %c0_14 = arith.constant 0 : index
    %c0_15 = arith.constant 0 : index
    %22 = vector.load %arg6[%c0_14, %c0_15] : memref<1x512xbf16, #tpu.memory_space<vmem>>, vector<1x512xbf16>
    %23 = arith.truncf %21 : vector<16x512xf32> to vector<16x512xbf16>
    %cst_16 = arith.constant dense<0.000000e+00> : vector<1x16xf32>
    %24 = tpu.matmul %22, %23, %cst_16 {dimension_numbers = #tpu.dot_dimension_numbers<[1], [1], [0], [0], [0, 0, 1, 0], [], []>} : vector<1x512xbf16>, vector<16x512xbf16>, vector<1x16xf32> -> vector<1x16xf32>
    %c0_17 = arith.constant 0 : index
    %c0_18 = arith.constant 0 : index
    %25 = vector.load %arg7[%c0_17, %c0_18] : memref<1x1xf32, #tpu.memory_space<vmem>>, vector<1x1xf32>
    %26 = vector.broadcast %25 : vector<1x1xf32> to vector<1x16xf32>
    %27 = arith.addf %24, %26 : vector<1x16xf32>
    %28 = arith.negf %27 : vector<1x16xf32>
    %29 = math.exp %28 : vector<1x16xf32>
    %cst_19 = arith.constant 1.000000e+00 : f32
    %30 = vector.broadcast %cst_19 : f32 to vector<1x16xf32>
    %31 = arith.addf %30, %29 : vector<1x16xf32>
    %32 = arith.divf %30, %31 : vector<1x16xf32>
    %c0_20 = arith.constant 0 : index
    %c0_21 = arith.constant 0 : index
    %33 = vector.load %arg8[%c0_20, %c0_21] : memref<1x16xf32, #tpu.memory_space<vmem>>, vector<1x16xf32>
    tpu.vector_store %arg8[%c0_20, %c0_21], %32 {strides = array<i32>} : memref<1x16xf32, #tpu.memory_space<vmem>>, vector<1x16xf32>,
    return
  }
  func.func @transform_0(%arg0: i32) -> (i32, i32) {
    %c0_i32 = arith.constant 0 : i32
    %c0_i32_0 = arith.constant 0 : i32
    return %arg0, %c0_i32 : i32, i32
  }
  func.func @transform_1(%arg0: i32) -> (i32, i32) {
    %c0_i32 = arith.constant 0 : i32
    %c0_i32_0 = arith.constant 0 : i32
    %c0_i32_1 = arith.constant 0 : i32
    return %c0_i32, %c0_i32_0 : i32, i32
  }
  func.func @transform_2(%arg0: i32) -> (i32, i32) {
    %c0_i32 = arith.constant 0 : i32
    %c0_i32_0 = arith.constant 0 : i32
    %c0_i32_1 = arith.constant 0 : i32
    return %c0_i32, %c0_i32_0 : i32, i32
  }
  func.func @transform_3(%arg0: i32) -> (i32, i32) {
    %c0_i32 = arith.constant 0 : i32
    %c0_i32_0 = arith.constant 0 : i32
    %c0_i32_1 = arith.constant 0 : i32
    return %c0_i32, %c0_i32_0 : i32, i32
  }
  func.func @transform_4(%arg0: i32) -> (i32, i32) {
    %c0_i32 = arith.constant 0 : i32
    %c0_i32_0 = arith.constant 0 : i32
    %c0_i32_1 = arith.constant 0 : i32
    return %c0_i32, %c0_i32_0 : i32, i32
  }
  func.func @transform_5(%arg0: i32) -> (i32, i32) {
    %c0_i32 = arith.constant 0 : i32
    %c0_i32_0 = arith.constant 0 : i32
    %c0_i32_1 = arith.constant 0 : i32
    return %c0_i32, %c0_i32_0 : i32, i32
  }
  func.func @transform_6(%arg0: i32) -> (i32, i32) {
    %c0_i32 = arith.constant 0 : i32
    %c0_i32_0 = arith.constant 0 : i32
    %c0_i32_1 = arith.constant 0 : i32
    return %c0_i32, %c0_i32_0 : i32, i32
  }
  func.func @transform_7(%arg0: i32) -> (i32, i32) {
    %c0_i32 = arith.constant 0 : i32
    %c0_i32_0 = arith.constant 0 : i32
    return %c0_i32, %arg0 : i32, i32
  }
}

</mosaic_0001>

<llo_original>
// kernel: _forward.2
$region0: #{_forward.2}
  #allocation0 [shape = 'u32[]', space=smem, size = 0x4, offset = 0x4, fixed_abs, tag = 'smem constant byte address 0x4 - core index']
  #allocation1 [shape = 'u32[144,128]{1,0:T(1,128)}', space=vmem, size = 0x12000, scoped, tag = 'internal scratch']
  #allocation2 [shape = 'u32[2048]{0}', space=vmem, size = 0x2000, scoped, tag = 'scoped memory for _forward.2']
  #allocation3 [shape = 'u32[2048]{0}', space=vmem, size = 0x2000, scoped, tag = 'scoped memory for _forward.2']
  #allocation4 [shape = 'u32[2048]{0}', space=vmem, size = 0x2000, scoped, tag = 'scoped memory for _forward.2']
  #allocation5 [shape = 'u32[2048]{0}', space=vmem, size = 0x2000, scoped, tag = 'scoped memory for _forward.2']
  #allocation6 [shape = 'u32[2048]{0}', space=vmem, size = 0x2000, scoped, tag = 'scoped memory for _forward.2']
  #allocation7 [shape = 'f32[1,1]{1,0:T(1,128)S(1)}', space=vmem, size = 0x200, scoped, tag = 'scoped memory for _forward.2']
  %s0 = inlined_call_operand.hbm [shape: bf16[896,1024], index: 0, kind: input, shape index: {}]
  %s1 = inlined_call_operand.hbm [shape: f32[1,1024], index: 1, kind: input, shape index: {}]
  %s2 = inlined_call_operand.hbm [shape: bf16[1024,512], index: 2, kind: input, shape index: {}]
  %s3 = inlined_call_operand.hbm [shape: f32[1,512], index: 3, kind: input, shape index: {}]
  %s4 = inlined_call_operand.hbm [shape: bf16[1,512], index: 4, kind: input, shape index: {}]
  %s5 = inlined_call_operand.<no memory space> [shape: f32[1,1], index: 5, kind: input, shape index: {}]
  %s6 = inlined_call_operand.vmem [shape: bf16[8,784], index: 6, kind: input, shape index: {}]
  %s7 = inlined_call_operand.<no memory space> [shape: bf16[], index: 7, kind: input, shape index: {}]
  %s8 = inlined_call_operand.vmem [shape: f32[1,16], index: 8, kind: output, shape index: {}]
  %s9 = sld [smem:[#allocation0]]
  $region58: #{_forward.2} parent=0
    _
  %s11 = ssub.s32 1, %s9
  %s12 = scalar_select 0, %s11, %s9
  %v13 = vstv %s7
  %v14 = vunpack.i.l.bf16 %v13
  %v16 = vunpack.i.h.bf16 %v13
  %v18 = vstv %s5
  %19 = vst [vmem:[#allocation7] sm:$0x1] %v18
  $region1: #{_forward.2} parent=0
    #allocation8 [shape = 'u8[1835008]{0}', space=vmem, size = 0x1c0000, scoped, tag = 'input window, operand 1, single buffered']
    #allocation9 [shape = 's32[1]{0}', space=sflag, size = 0x4, scoped, tag = 'scoped memory for _forward.2']
    #allocation10 [shape = 'u8[4096]{0}', space=vmem, size = 0x1000, scoped, tag = 'input window, operand 2, single buffered']
    #allocation11 [shape = 's32[1]{0}', space=sflag, size = 0x4, scoped, tag = 'scoped memory for _forward.2']
    #allocation12 [shape = 'u8[1048576]{0}', space=vmem, size = 0x100000, scoped, tag = 'input window, operand 3, single buffered']
    #allocation13 [shape = 'u8[2048]{0}', space=vmem, size = 0x800, scoped, tag = 'input window, operand 4, single buffered']
    #allocation14 [shape = 's32[1]{0}', space=sflag, size = 0x4, scoped, tag = 'scoped memory for _forward.2']
    #allocation15 [shape = 'u8[2048]{0}', space=vmem, size = 0x800, scoped, tag = 'input window, operand 5, single buffered']
    #allocation16 [shape = 'u8[28672]{0}', space=vmem, size = 0x7000, dematerialized = true, scoped, tag = 'FusionAdapter Buffer %fusion.1 = bf16[16,896]{1,0:T(8,128)(2,1)} fusion(%param_6.1, %param_7), kind=kLoop, calls=%fused_computation.2.clone, metadata={op_name="jit(_forward)/jit(_pad)/pad" stack_frame_id=8}']
    %20 = vsyncpa [#allocation9], 0
    %21 = vsyncpa [#allocation11], 0
    %22 = vsyncpa [#allocation14], 0
    // Predicated region
    $region2: #{_forward.2} parent=1 // pred_check
      _
    $region3: #{_forward.2} parent=1 // pred_check_branch
      %24 = sbr.rel (0) target = $region5
    $region4: #{_forward.2} parent=1 // pred_region
      _
    $region5: #{_forward.2} parent=1 // pred_fallthru
      _
    // Predicated region
    $region6: #{_forward.2} parent=1 // pred_check
      _
    $region7: #{_forward.2} parent=1 // pred_check_branch
      %26 = sbr.rel (0) target = $region9
    $region8: #{_forward.2} parent=1 // pred_region
      %s28 = ssub.s32 57344, 57344
      %29 = vsyncadd [#allocation9], %s28
      %s30 = sshll.u32 [#allocation8], 4
      %s31 = int_to_ptr.vmem [resolvable:$true] %s30
      %36 = dma.hbm_to_vmem [thread:$0]  %s0, 57344, %s31, [#allocation9], 512, 512, 32
    $region9: #{_forward.2} parent=1 // pred_fallthru
      _
    // Predicated region
    $region10: #{_forward.2} parent=1 // pred_check
      _
    $region11: #{_forward.2} parent=1 // pred_check_branch
      %38 = sbr.rel (0) target = $region13
    $region12: #{_forward.2} parent=1 // pred_region
      %s40 = ssub.s32 128, 128
      %41 = vsyncadd [#allocation11], %s40
      %s43 = sshll.u32 [#allocation10], 4
      %s44 = int_to_ptr.vmem [resolvable:$true] %s43
      %46 = dma.hbm_to_vmem [thread:$0]  %s1, 128, %s44, [#allocation11]
    $region13: #{_forward.2} parent=1 // pred_fallthru
      _
    // Predicated region
    $region14: #{_forward.2} parent=1 // pred_check
      _
    $region15: #{_forward.2} parent=1 // pred_check_branch
      %48 = sbr.rel (0) target = $region17
    $region16: #{_forward.2} parent=1 // pred_region
      %s50 = ssub.s32 32768, 32768
      %51 = vsyncadd [#allocation11], %s50
      %s52 = sshll.u32 [#allocation12], 4
      %s53 = int_to_ptr.vmem [resolvable:$true] %s52
      %58 = dma.hbm_to_vmem [thread:$0]  %s2, 32768, %s53, [#allocation11], 256, 256, 16
    $region17: #{_forward.2} parent=1 // pred_fallthru
      _
    // Predicated region
    $region18: #{_forward.2} parent=1 // pred_check
      _
    $region19: #{_forward.2} parent=1 // pred_check_branch
      %60 = sbr.rel (0) target = $region21
    $region20: #{_forward.2} parent=1 // pred_region
      %s62 = ssub.s32 64, 64
      %63 = vsyncadd [#allocation14], %s62
      %s65 = sshll.u32 [#allocation13], 4
      %s66 = int_to_ptr.vmem [resolvable:$true] %s65
      %68 = dma.hbm_to_vmem [thread:$0]  %s3, 64, %s66, [#allocation14]
    $region21: #{_forward.2} parent=1 // pred_fallthru
      _
    // Predicated region
    $region22: #{_forward.2} parent=1 // pred_check
      _
    $region23: #{_forward.2} parent=1 // pred_check_branch
      %70 = sbr.rel (0) target = $region25
    $region24: #{_forward.2} parent=1 // pred_region
      %s72 = ssub.s32 64, 64
      %73 = vsyncadd [#allocation14], %s72
      %s75 = sshll.u32 [#allocation15], 4
      %s76 = int_to_ptr.vmem [resolvable:$true] %s75
      %78 = dma.hbm_to_vmem [thread:$0]  %s4, 64, %s76, [#allocation14]
    $region25: #{_forward.2} parent=1 // pred_fallthru
      _
    // Predicated region
    $region26: #{_forward.2} parent=1 // pred_check
      _
    $region27: #{_forward.2} parent=1 // pred_check_branch
      %80 = sbr.rel (0) target = $region29
    $region28: #{_forward.2} parent=1 // pred_region
      _
    $region29: #{_forward.2} parent=1 // pred_fallthru
      _
    // Predicated region
    $region30: #{_forward.2} parent=1 // pred_check
      _
    $region31: #{_forward.2} parent=1 // pred_check_branch
      %82 = sbr.rel (0) target = $region33
    $region32: #{_forward.2} parent=1 // pred_region
      %83 = dma.done [#allocation9], 57344
    $region33: #{_forward.2} parent=1 // pred_fallthru
      _
    // Predicated region
    $region34: #{_forward.2} parent=1 // pred_check
      _
    $region35: #{_forward.2} parent=1 // pred_check_branch
      %85 = sbr.rel (0) target = $region37
    $region36: #{_forward.2} parent=1 // pred_region
      %86 = dma.done [#allocation11], 128
    $region37: #{_forward.2} parent=1 // pred_fallthru
      _
    // Predicated region
    $region38: #{_forward.2} parent=1 // pred_check
      _
    $region39: #{_forward.2} parent=1 // pred_check_branch
      %88 = sbr.rel (0) target = $region41
    $region40: #{_forward.2} parent=1 // pred_region
      %89 = dma.done [#allocation11], 32768
    $region41: #{_forward.2} parent=1 // pred_fallthru
      _
    // Predicated region
    $region42: #{_forward.2} parent=1 // pred_check
      _
    $region43: #{_forward.2} parent=1 // pred_check_branch
      %91 = sbr.rel (0) target = $region45
    $region44: #{_forward.2} parent=1 // pred_region
      %92 = dma.done [#allocation14], 64
    $region45: #{_forward.2} parent=1 // pred_fallthru
      _
    // Predicated region
    $region46: #{_forward.2} parent=1 // pred_check
      _
    $region47: #{_forward.2} parent=1 // pred_check_branch
      %94 = sbr.rel (0) target = $region49
    $region48: #{_forward.2} parent=1 // pred_region
      %95 = dma.done [#allocation14], 64
    $region49: #{_forward.2} parent=1 // pred_fallthru
      _
    %s97 = sor.u32 255, 127
    %s98 = sand.u32 %s97, 85
    %s99 = sshrl.u32 %s98, 1
    %s100 = sor.u32 %s98, %s99
    %s101 = sand.u32 51, %s100
    %s102 = sshrl.u32 %s101, 2
    %s103 = sor.u32 %s101, %s102
    %s104 = sand.u32 15, %s103
    %v105 = vld [vmem:[%s6] sm:%s104]
    %v106 = vunpack.c.l.bf16 %v105
    %v107 = vunpack.c.h.bf16 %v105
    %v108 = vlaneseq
    %v109 = vand.u32 %v108, 127
    %vm111 = vcmp.lt.s32.totalorder %v109, 784
    %v112 = vsel %vm111, %v106, %v14
    %v113 = vpack.c.bf16 0.0, %v112
    %115 = vst [vmem:[#allocation16] sm:$0xf] %v113
    %s116 = scalar_lea.vmem %s6, 4
    %s118 = sor.u32 255, 127
    %s119 = sand.u32 %s118, 85
    %s120 = sshrl.u32 %s119, 1
    %s121 = sor.u32 %s119, %s120
    %s122 = sand.u32 51, %s121
    %s123 = sshrl.u32 %s122, 2
    %s124 = sor.u32 %s122, %s123
    %s125 = sand.u32 15, %s124
    %v126 = vld [vmem:[%s116] sm:%s125]
    %v127 = vunpack.c.l.bf16 %v126
    %v128 = vunpack.c.h.bf16 %v126
    %v129 = vlaneseq
    %v130 = vand.u32 %v129, 127
    %v131 = vadd.s32 %v130, 128
    %vm132 = vcmp.lt.s32.totalorder %v131, 784
    %v133 = vsel %vm132, %v127, %v14
    %s134 = scalar_lea.vmem [#allocation16], 4
    %v135 = vpack.c.bf16 0.0, %v133
    %137 = vst [vmem:[%s134] sm:$0xf] %v135
    %s138 = scalar_lea.vmem %s6, 8
    %s140 = sor.u32 255, 127
    %s141 = sand.u32 %s140, 85
    %s142 = sshrl.u32 %s141, 1
    %s143 = sor.u32 %s141, %s142
    %s144 = sand.u32 51, %s143
    %s145 = sshrl.u32 %s144, 2
    %s146 = sor.u32 %s144, %s145
    %s147 = sand.u32 15, %s146
    %v148 = vld [vmem:[%s138] sm:%s147]
    %v149 = vunpack.c.l.bf16 %v148
    %v150 = vunpack.c.h.bf16 %v148
    %v151 = vlaneseq
    %v152 = vand.u32 %v151, 127
    %v153 = vadd.s32 %v152, 256
    %vm154 = vcmp.lt.s32.totalorder %v153, 784
    %v155 = vsel %vm154, %v149, %v14
    %s156 = scalar_lea.vmem [#allocation16], 8
    %v157 = vpack.c.bf16 0.0, %v155
    %159 = vst [vmem:[%s156] sm:$0xf] %v157
    %s160 = scalar_lea.vmem %s6, 12
    %s162 = sor.u32 255, 127
    %s163 = sand.u32 %s162, 85
    %s164 = sshrl.u32 %s163, 1
    %s165 = sor.u32 %s163, %s164
    %s166 = sand.u32 51, %s165
    %s167 = sshrl.u32 %s166, 2
    %s168 = sor.u32 %s166, %s167
    %s169 = sand.u32 15, %s168
    %v170 = vld [vmem:[%s160] sm:%s169]
    %v171 = vunpack.c.l.bf16 %v170
    %v172 = vunpack.c.h.bf16 %v170
    %v173 = vlaneseq
    %v174 = vand.u32 %v173, 127
    %v175 = vadd.s32 %v174, 384
    %vm176 = vcmp.lt.s32.totalorder %v175, 784
    %v177 = vsel %vm176, %v171, %v14
    %s178 = scalar_lea.vmem [#allocation16], 12
    %v179 = vpack.c.bf16 0.0, %v177
    %181 = vst [vmem:[%s178] sm:$0xf] %v179
    %s182 = scalar_lea.vmem %s6, 16
    %s184 = sor.u32 255, 127
    %s185 = sand.u32 %s184, 85
    %s186 = sshrl.u32 %s185, 1
    %s187 = sor.u32 %s185, %s186
    %s188 = sand.u32 51, %s187
    %s189 = sshrl.u32 %s188, 2
    %s190 = sor.u32 %s188, %s189
    %s191 = sand.u32 15, %s190
    %v192 = vld [vmem:[%s182] sm:%s191]
    %v193 = vunpack.c.l.bf16 %v192
    %v194 = vunpack.c.h.bf16 %v192
    %v195 = vlaneseq
    %v196 = vand.u32 %v195, 127
    %v197 = vadd.s32 %v196, 512
    %vm198 = vcmp.lt.s32.totalorder %v197, 784
    %v199 = vsel %vm198, %v193, %v14
    %s200 = scalar_lea.vmem [#allocation16], 16
    %v201 = vpack.c.bf16 0.0, %v199
    %203 = vst [vmem:[%s200] sm:$0xf] %v201
    %s204 = scalar_lea.vmem %s6, 20
    %s206 = sor.u32 255, 127
    %s207 = sand.u32 %s206, 85
    %s208 = sshrl.u32 %s207, 1
    %s209 = sor.u32 %s207, %s208
    %s210 = sand.u32 51, %s209
    %s211 = sshrl.u32 %s210, 2
    %s212 = sor.u32 %s210, %s211
    %s213 = sand.u32 15, %s212
    %v214 = vld [vmem:[%s204] sm:%s213]
    %v215 = vunpack.c.l.bf16 %v214
    %v216 = vunpack.c.h.bf16 %v214
    %v217 = vlaneseq
    %v218 = vand.u32 %v217, 127
    %v219 = vadd.s32 %v218, 640
    %vm220 = vcmp.lt.s32.totalorder %v219, 784
    %v221 = vsel %vm220, %v215, %v14
    %s222 = scalar_lea.vmem [#allocation16], 20
    %v223 = vpack.c.bf16 0.0, %v221
    %225 = vst [vmem:[%s222] sm:$0xf] %v223
    %s226 = scalar_lea.vmem %s6, 24
    %s228 = sor.u32 255, 127
    %s229 = sand.u32 %s228, 85
    %s230 = sshrl.u32 %s229, 1
    %s231 = sor.u32 %s229, %s230
    %s232 = sand.u32 51, %s231
    %s233 = sshrl.u32 %s232, 2
    %s234 = sor.u32 %s232, %s233
    %s235 = sand.u32 15, %s234
    %v236 = vld [vmem:[%s226] sm:%s235]
    %v237 = vunpack.c.l.bf16 %v236
    %v238 = vunpack.c.h.bf16 %v236
    %v239 = vlaneseq
    %v240 = vand.u32 %v239, 127
    %v241 = vadd.s32 %v240, 768
    %vm242 = vcmp.lt.s32.totalorder %v241, 784
    %v243 = vsel %vm242, %v237, %v14
    %s244 = scalar_lea.vmem [#allocation16], 24
    %v245 = vpack.c.bf16 0.0, %v243
    %247 = vst [vmem:[%s244] sm:$0xf] %v245
    %s248 = scalar_lea.vmem [#allocation16], 28
    %v249 = vpack.c.bf16 0.0, %v14
    %251 = vst [vmem:[%s248] sm:$0xf] %v249
    %s252 = scalar_lea.vmem [#allocation16], 32
    %v253 = vpack.c.bf16 0.0, %v14
    %255 = vst [vmem:[%s252] sm:$0xf] %v253
    %s256 = scalar_lea.vmem [#allocation16], 36
    %v257 = vpack.c.bf16 0.0, %v14
    %259 = vst [vmem:[%s256] sm:$0xf] %v257
    %s260 = scalar_lea.vmem [#allocation16], 40
    %v261 = vpack.c.bf16 0.0, %v14
    %263 = vst [vmem:[%s260] sm:$0xf] %v261
    %s264 = scalar_lea.vmem [#allocation16], 44
    %v265 = vpack.c.bf16 0.0, %v14
    %267 = vst [vmem:[%s264] sm:$0xf] %v265
    %s268 = scalar_lea.vmem [#allocation16], 48
    %v269 = vpack.c.bf16 0.0, %v14
    %271 = vst [vmem:[%s268] sm:$0xf] %v269
    %s272 = scalar_lea.vmem [#allocation16], 52
    %v273 = vpack.c.bf16 0.0, %v14
    %275 = vst [vmem:[%s272] sm:$0xf] %v273
    %v277 = vld [vmem:[#allocation16] sm:$0xff]
    %v278 = vld [vmem:[#allocation16 + $0x8] sm:$0xff]
    %v279 = vld [vmem:[#allocation16 + $0x10] sm:$0xff]
    %v280 = vld [vmem:[#allocation16 + $0x18] sm:$0xf]
    %v281 = vld [vmem:[#allocation16 + $0x1c] sm:$0xff]
    %v282 = vld [vmem:[#allocation16 + $0x24] sm:$0xff]
    %v283 = vld [vmem:[#allocation16 + $0x2c] sm:$0xff]
    %v284 = vld [vmem:[#allocation16 + $0x34] sm:$0xf]
    %v285 = vld [vmem:[#allocation8] sm:$0xff]
    %v286 = vld [vmem:[#allocation8 + $0x8] sm:$0xff]
    %v287 = vld [vmem:[#allocation8 + $0x10] sm:$0xff]
    %v288 = vld [vmem:[#allocation8 + $0x18] sm:$0xff]
    %v289 = vld [vmem:[#allocation8 + $0x20] sm:$0xff]
    %v290 = vld [vmem:[#allocation8 + $0x28] sm:$0xff]
    %v291 = vld [vmem:[#allocation8 + $0x30] sm:$0xff]
    %v292 = vld [vmem:[#allocation8 + $0x38] sm:$0xff]
    %v293 = vld [vmem:[#allocation8 + $0x40] sm:$0xff]
    %v294 = vld [vmem:[#allocation8 + $0x48] sm:$0xff]
    %v295 = vld [vmem:[#allocation8 + $0x50] sm:$0xff]
    %v296 = vld [vmem:[#allocation8 + $0x58] sm:$0xff]
    %v297 = vld [vmem:[#allocation8 + $0x60] sm:$0xff]
    %v298 = vld [vmem:[#allocation8 + $0x68] sm:$0xff]
    %v299 = vld [vmem:[#allocation8 + $0x70] sm:$0xff]
    %v300 = vld [vmem:[#allocation8 + $0x78] sm:$0xff]
    %v301 = vld [vmem:[#allocation8 + $0x80] sm:$0xff]
    %v302 = vld [vmem:[#allocation8 + $0x88] sm:$0xff]
    %v303 = vld [vmem:[#allocation8 + $0x90] sm:$0xff]
    %v304 = vld [vmem:[#allocation8 + $0x98] sm:$0xff]
    %v305 = vld [vmem:[#allocation8 + $0xa0] sm:$0xff]
    %v306 = vld [vmem:[#allocation8 + $0xa8] sm:$0xff]
    %v307 = vld [vmem:[#allocation8 + $0xb0] sm:$0xff]
    %v308 = vld [vmem:[#allocation8 + $0xb8] sm:$0xff]
    %v309 = vld [vmem:[#allocation8 + $0xc0] sm:$0xff]
    %v310 = vld [vmem:[#allocation8 + $0xc8] sm:$0xff]
    %v311 = vld [vmem:[#allocation8 + $0xd0] sm:$0xff]
    %v312 = vld [vmem:[#allocation8 + $0xd8] sm:$0xff]
    %v313 = vld [vmem:[#allocation8 + $0xe0] sm:$0xff]
    %v314 = vld [vmem:[#allocation8 + $0xe8] sm:$0xff]
    %v315 = vld [vmem:[#allocation8 + $0xf0] sm:$0xff]
    %v316 = vld [vmem:[#allocation8 + $0xf8] sm:$0xff]
    %v317 = vld [vmem:[#allocation8 + $0x100] sm:$0xff]
    %v318 = vld [vmem:[#allocation8 + $0x108] sm:$0xff]
    %v319 = vld [vmem:[#allocation8 + $0x110] sm:$0xff]
    %v320 = vld [vmem:[#allocation8 + $0x118] sm:$0xff]
    %v321 = vld [vmem:[#allocation8 + $0x120] sm:$0xff]
    %v322 = vld [vmem:[#allocation8 + $0x128] sm:$0xff]
    %v323 = vld [vmem:[#allocation8 + $0x130] sm:$0xff]
    %v324 = vld [vmem:[#allocation8 + $0x138] sm:$0xff]
    %v325 = vld [vmem:[#allocation8 + $0x140] sm:$0xff]
    %v326 = vld [vmem:[#allocation8 + $0x148] sm:$0xff]
    %v327 = vld [vmem:[#allocation8 + $0x150] sm:$0xff]
    %v328 = vld [vmem:[#allocation8 + $0x158] sm:$0xff]
    %v329 = vld [vmem:[#allocation8 + $0x160] sm:$0xff]
    %v330 = vld [vmem:[#allocation8 + $0x168] sm:$0xff]
    %v331 = vld [vmem:[#allocation8 + $0x170] sm:$0xff]
    %v332 = vld [vmem:[#allocation8 + $0x178] sm:$0xff]
    %v333 = vld [vmem:[#allocation8 + $0x180] sm:$0xff]
    %v334 = vld [vmem:[#allocation8 + $0x188] sm:$0xff]
    %v335 = vld [vmem:[#allocation8 + $0x190] sm:$0xff]
    %v336 = vld [vmem:[#allocation8 + $0x198] sm:$0xff]
    %v337 = vld [vmem:[#allocation8 + $0x1a0] sm:$0xff]
    %v338 = vld [vmem:[#allocation8 + $0x1a8] sm:$0xff]
    %v339 = vld [vmem:[#allocation8 + $0x1b0] sm:$0xff]
    %v340 = vld [vmem:[#allocation8 + $0x1b8] sm:$0xff]
    %v341 = vld [vmem:[#allocation8 + $0x1c0] sm:$0xff]
    %v342 = vld [vmem:[#allocation8 + $0x1c8] sm:$0xff]
    %v343 = vld [vmem:[#allocation8 + $0x1d0] sm:$0xff]
    %v344 = vld [vmem:[#allocation8 + $0x1d8] sm:$0xff]
    %v345 = vld [vmem:[#allocation8 + $0x1e0] sm:$0xff]
    %v346 = vld [vmem:[#allocation8 + $0x1e8] sm:$0xff]
    %v347 = vld [vmem:[#allocation8 + $0x1f0] sm:$0xff]
    %v348 = vld [vmem:[#allocation8 + $0x1f8] sm:$0xff]
    %v349 = vld [vmem:[#allocation8 + $0x200] sm:$0xff]
    %v350 = vld [vmem:[#allocation8 + $0x208] sm:$0xff]
    %v351 = vld [vmem:[#allocation8 + $0x210] sm:$0xff]
    %v352 = vld [vmem:[#allocation8 + $0x218] sm:$0xff]
    %v353 = vld [vmem:[#allocation8 + $0x220] sm:$0xff]
    %v354 = vld [vmem:[#allocation8 + $0x228] sm:$0xff]
    %v355 = vld [vmem:[#allocation8 + $0x230] sm:$0xff]
    %v356 = vld [vmem:[#allocation8 + $0x238] sm:$0xff]
    %v357 = vld [vmem:[#allocation8 + $0x240] sm:$0xff]
    %v358 = vld [vmem:[#allocation8 + $0x248] sm:$0xff]
    %v359 = vld [vmem:[#allocation8 + $0x250] sm:$0xff]
    %v360 = vld [vmem:[#allocation8 + $0x258] sm:$0xff]
    %v361 = vld [vmem:[#allocation8 + $0x260] sm:$0xff]
    %v362 = vld [vmem:[#allocation8 + $0x268] sm:$0xff]
    %v363 = vld [vmem:[#allocation8 + $0x270] sm:$0xff]
    %v364 = vld [vmem:[#allocation8 + $0x278] sm:$0xff]
    %v365 = vld [vmem:[#allocation8 + $0x280] sm:$0xff]
    %v366 = vld [vmem:[#allocation8 + $0x288] sm:$0xff]
    %v367 = vld [vmem:[#allocation8 + $0x290] sm:$0xff]
    %v368 = vld [vmem:[#allocation8 + $0x298] sm:$0xff]
    %v369 = vld [vmem:[#allocation8 + $0x2a0] sm:$0xff]
    %v370 = vld [vmem:[#allocation8 + $0x2a8] sm:$0xff]
    %v371 = vld [vmem:[#allocation8 + $0x2b0] sm:$0xff]
    %v372 = vld [vmem:[#allocation8 + $0x2b8] sm:$0xff]
    %v373 = vld [vmem:[#allocation8 + $0x2c0] sm:$0xff]
    %v374 = vld [vmem:[#allocation8 + $0x2c8] sm:$0xff]
    %v375 = vld [vmem:[#allocation8 + $0x2d0] sm:$0xff]
    %v376 = vld [vmem:[#allocation8 + $0x2d8] sm:$0xff]
    %v377 = vld [vmem:[#allocation8 + $0x2e0] sm:$0xff]
    %v378 = vld [vmem:[#allocation8 + $0x2e8] sm:$0xff]
    %v379 = vld [vmem:[#allocation8 + $0x2f0] sm:$0xff]
    %v380 = vld [vmem:[#allocation8 + $0x2f8] sm:$0xff]
    %v381 = vld [vmem:[#allocation8 + $0x300] sm:$0xff]
    %v382 = vld [vmem:[#allocation8 + $0x308] sm:$0xff]
    %v383 = vld [vmem:[#allocation8 + $0x310] sm:$0xff]
    %v384 = vld [vmem:[#allocation8 + $0x318] sm:$0xff]
    %v385 = vld [vmem:[#allocation8 + $0x320] sm:$0xff]
    %v386 = vld [vmem:[#allocation8 + $0x328] sm:$0xff]
    %v387 = vld [vmem:[#allocation8 + $0x330] sm:$0xff]
    %v388 = vld [vmem:[#allocation8 + $0x338] sm:$0xff]
    %v389 = vld [vmem:[#allocation8 + $0x340] sm:$0xff]
    %v390 = vld [vmem:[#allocation8 + $0x348] sm:$0xff]
    %v391 = vld [vmem:[#allocation8 + $0x350] sm:$0xff]
    %v392 = vld [vmem:[#allocation8 + $0x358] sm:$0xff]
    %v393 = vld [vmem:[#allocation8 + $0x360] sm:$0xff]
    %v394 = vld [vmem:[#allocation8 + $0x368] sm:$0xff]
    %v395 = vld [vmem:[#allocation8 + $0x370] sm:$0xff]
    %v396 = vld [vmem:[#allocation8 + $0x378] sm:$0xff]
    %v397 = vld [vmem:[#allocation8 + $0x380] sm:$0xff]
    %v398 = vld [vmem:[#allocation8 + $0x388] sm:$0xff]
    %v399 = vld [vmem:[#allocation8 + $0x390] sm:$0xff]
    %v400 = vld [vmem:[#allocation8 + $0x398] sm:$0xff]
    %v401 = vld [vmem:[#allocation8 + $0x3a0] sm:$0xff]
    %v402 = vld [vmem:[#allocation8 + $0x3a8] sm:$0xff]
    %v403 = vld [vmem:[#allocation8 + $0x3b0] sm:$0xff]
    %v404 = vld [vmem:[#allocation8 + $0x3b8] sm:$0xff]
    %v405 = vld [vmem:[#allocation8 + $0x3c0] sm:$0xff]
    %v406 = vld [vmem:[#allocation8 + $0x3c8] sm:$0xff]
    %v407 = vld [vmem:[#allocation8 + $0x3d0] sm:$0xff]
    %v408 = vld [vmem:[#allocation8 + $0x3d8] sm:$0xff]
    %v409 = vld [vmem:[#allocation8 + $0x3e0] sm:$0xff]
    %v410 = vld [vmem:[#allocation8 + $0x3e8] sm:$0xff]
    %v411 = vld [vmem:[#allocation8 + $0x3f0] sm:$0xff]
    %v412 = vld [vmem:[#allocation8 + $0x3f8] sm:$0xff]
    %v413 = vld [vmem:[#allocation8 + $0x400] sm:$0xff]
    %v414 = vld [vmem:[#allocation8 + $0x408] sm:$0xff]
    %v415 = vld [vmem:[#allocation8 + $0x410] sm:$0xff]
    %v416 = vld [vmem:[#allocation8 + $0x418] sm:$0xff]
    %v417 = vld [vmem:[#allocation8 + $0x420] sm:$0xff]
    %v418 = vld [vmem:[#allocation8 + $0x428] sm:$0xff]
    %v419 = vld [vmem:[#allocation8 + $0x430] sm:$0xff]
    %v420 = vld [vmem:[#allocation8 + $0x438] sm:$0xff]
    %v421 = vld [vmem:[#allocation8 + $0x440] sm:$0xff]
    %v422 = vld [vmem:[#allocation8 + $0x448] sm:$0xff]
    %v423 = vld [vmem:[#allocation8 + $0x450] sm:$0xff]
    %v424 = vld [vmem:[#allocation8 + $0x458] sm:$0xff]
    %v425 = vld [vmem:[#allocation8 + $0x460] sm:$0xff]
    %v426 = vld [vmem:[#allocation8 + $0x468] sm:$0xff]
    %v427 = vld [vmem:[#allocation8 + $0x470] sm:$0xff]
    %v428 = vld [vmem:[#allocation8 + $0x478] sm:$0xff]
    %v429 = vld [vmem:[#allocation8 + $0x480] sm:$0xff]
    %v430 = vld [vmem:[#allocation8 + $0x488] sm:$0xff]
    %v431 = vld [vmem:[#allocation8 + $0x490] sm:$0xff]
    %v432 = vld [vmem:[#allocation8 + $0x498] sm:$0xff]
    %v433 = vld [vmem:[#allocation8 + $0x4a0] sm:$0xff]
    %v434 = vld [vmem:[#allocation8 + $0x4a8] sm:$0xff]
    %v435 = vld [vmem:[#allocation8 + $0x4b0] sm:$0xff]
    %v436 = vld [vmem:[#allocation8 + $0x4b8] sm:$0xff]
    %v437 = vld [vmem:[#allocation8 + $0x4c0] sm:$0xff]
    %v438 = vld [vmem:[#allocation8 + $0x4c8] sm:$0xff]
    %v439 = vld [vmem:[#allocation8 + $0x4d0] sm:$0xff]
    %v440 = vld [vmem:[#allocation8 + $0x4d8] sm:$0xff]
    %v441 = vld [vmem:[#allocation8 + $0x4e0] sm:$0xff]
    %v442 = vld [vmem:[#allocation8 + $0x4e8] sm:$0xff]
    %v443 = vld [vmem:[#allocation8 + $0x4f0] sm:$0xff]
    %v444 = vld [vmem:[#allocation8 + $0x4f8] sm:$0xff]
    %v445 = vld [vmem:[#allocation8 + $0x500] sm:$0xff]
    %v446 = vld [vmem:[#allocation8 + $0x508] sm:$0xff]
    %v447 = vld [vmem:[#allocation8 + $0x510] sm:$0xff]
    %v448 = vld [vmem:[#allocation8 + $0x518] sm:$0xff]
    %v449 = vld [vmem:[#allocation8 + $0x520] sm:$0xff]
    %v450 = vld [vmem:[#allocation8 + $0x528] sm:$0xff]
    %v451 = vld [vmem:[#allocation8 + $0x530] sm:$0xff]
    %v452 = vld [vmem:[#allocation8 + $0x538] sm:$0xff]
    %v453 = vld [vmem:[#allocation8 + $0x540] sm:$0xff]
    %v454 = vld [vmem:[#allocation8 + $0x548] sm:$0xff]
    %v455 = vld [vmem:[#allocation8 + $0x550] sm:$0xff]
    %v456 = vld [vmem:[#allocation8 + $0x558] sm:$0xff]
    %v457 = vld [vmem:[#allocation8 + $0x560] sm:$0xff]
    %v458 = vld [vmem:[#allocation8 + $0x568] sm:$0xff]
    %v459 = vld [vmem:[#allocation8 + $0x570] sm:$0xff]
    %v460 = vld [vmem:[#allocation8 + $0x578] sm:$0xff]
    %v461 = vld [vmem:[#allocation8 + $0x580] sm:$0xff]
    %v462 = vld [vmem:[#allocation8 + $0x588] sm:$0xff]
    %v463 = vld [vmem:[#allocation8 + $0x590] sm:$0xff]
    %v464 = vld [vmem:[#allocation8 + $0x598] sm:$0xff]
    %v465 = vld [vmem:[#allocation8 + $0x5a0] sm:$0xff]
    %v466 = vld [vmem:[#allocation8 + $0x5a8] sm:$0xff]
    %v467 = vld [vmem:[#allocation8 + $0x5b0] sm:$0xff]
    %v468 = vld [vmem:[#allocation8 + $0x5b8] sm:$0xff]
    %v469 = vld [vmem:[#allocation8 + $0x5c0] sm:$0xff]
    %v470 = vld [vmem:[#allocation8 + $0x5c8] sm:$0xff]
    %v471 = vld [vmem:[#allocation8 + $0x5d0] sm:$0xff]
    %v472 = vld [vmem:[#allocation8 + $0x5d8] sm:$0xff]
    %v473 = vld [vmem:[#allocation8 + $0x5e0] sm:$0xff]
    %v474 = vld [vmem:[#allocation8 + $0x5e8] sm:$0xff]
    %v475 = vld [vmem:[#allocation8 + $0x5f0] sm:$0xff]
    %v476 = vld [vmem:[#allocation8 + $0x5f8] sm:$0xff]
    %v477 = vld [vmem:[#allocation8 + $0x600] sm:$0xff]
    %v478 = vld [vmem:[#allocation8 + $0x608] sm:$0xff]
    %v479 = vld [vmem:[#allocation8 + $0x610] sm:$0xff]
    %v480 = vld [vmem:[#allocation8 + $0x618] sm:$0xff]
    %v481 = vld [vmem:[#allocation8 + $0x620] sm:$0xff]
    %v482 = vld [vmem:[#allocation8 + $0x628] sm:$0xff]
    %v483 = vld [vmem:[#allocation8 + $0x630] sm:$0xff]
    %v484 = vld [vmem:[#allocation8 + $0x638] sm:$0xff]
    %v485 = vld [vmem:[#allocation8 + $0x640] sm:$0xff]
    %v486 = vld [vmem:[#allocation8 + $0x648] sm:$0xff]
    %v487 = vld [vmem:[#allocation8 + $0x650] sm:$0xff]
    %v488 = vld [vmem:[#allocation8 + $0x658] sm:$0xff]
    %v489 = vld [vmem:[#allocation8 + $0x660] sm:$0xff]
    %v490 = vld [vmem:[#allocation8 + $0x668] sm:$0xff]
    %v491 = vld [vmem:[#allocation8 + $0x670] sm:$0xff]
    %v492 = vld [vmem:[#allocation8 + $0x678] sm:$0xff]
    %v493 = vld [vmem:[#allocation8 + $0x680] sm:$0xff]
    %v494 = vld [vmem:[#allocation8 + $0x688] sm:$0xff]
    %v495 = vld [vmem:[#allocation8 + $0x690] sm:$0xff]
    %v496 = vld [vmem:[#allocation8 + $0x698] sm:$0xff]
    %v497 = vld [vmem:[#allocation8 + $0x6a0] sm:$0xff]
    %v498 = vld [vmem:[#allocation8 + $0x6a8] sm:$0xff]
    %v499 = vld [vmem:[#allocation8 + $0x6b0] sm:$0xff]
    %v500 = vld [vmem:[#allocation8 + $0x6b8] sm:$0xff]
    %v501 = vld [vmem:[#allocation8 + $0x6c0] sm:$0xff]
    %v502 = vld [vmem:[#allocation8 + $0x6c8] sm:$0xff]
    %v503 = vld [vmem:[#allocation8 + $0x6d0] sm:$0xff]
    %v504 = vld [vmem:[#allocation8 + $0x6d8] sm:$0xff]
    %v505 = vld [vmem:[#allocation8 + $0x6e0] sm:$0xff]
    %v506 = vld [vmem:[#allocation8 + $0x6e8] sm:$0xff]
    %v507 = vld [vmem:[#allocation8 + $0x6f0] sm:$0xff]
    %v508 = vld [vmem:[#allocation8 + $0x6f8] sm:$0xff]
    %v509 = vld [vmem:[#allocation8 + $0x700] sm:$0xff]
    %v510 = vld [vmem:[#allocation8 + $0x708] sm:$0xff]
    %v511 = vld [vmem:[#allocation8 + $0x710] sm:$0xff]
    %v512 = vld [vmem:[#allocation8 + $0x718] sm:$0xff]
    %v513 = vld [vmem:[#allocation8 + $0x720] sm:$0xff]
    %v514 = vld [vmem:[#allocation8 + $0x728] sm:$0xff]
    %v515 = vld [vmem:[#allocation8 + $0x730] sm:$0xff]
    %v516 = vld [vmem:[#allocation8 + $0x738] sm:$0xff]
    %v517 = vld [vmem:[#allocation8 + $0x740] sm:$0xff]
    %v518 = vld [vmem:[#allocation8 + $0x748] sm:$0xff]
    %v519 = vld [vmem:[#allocation8 + $0x750] sm:$0xff]
    %v520 = vld [vmem:[#allocation8 + $0x758] sm:$0xff]
    %v521 = vld [vmem:[#allocation8 + $0x760] sm:$0xff]
    %v522 = vld [vmem:[#allocation8 + $0x768] sm:$0xff]
    %v523 = vld [vmem:[#allocation8 + $0x770] sm:$0xff]
    %v524 = vld [vmem:[#allocation8 + $0x778] sm:$0xff]
    %v525 = vld [vmem:[#allocation8 + $0x780] sm:$0xff]
    %v526 = vld [vmem:[#allocation8 + $0x788] sm:$0xff]
    %v527 = vld [vmem:[#allocation8 + $0x790] sm:$0xff]
    %v528 = vld [vmem:[#allocation8 + $0x798] sm:$0xff]
    %v529 = vld [vmem:[#allocation8 + $0x7a0] sm:$0xff]
    %v530 = vld [vmem:[#allocation8 + $0x7a8] sm:$0xff]
    %v531 = vld [vmem:[#allocation8 + $0x7b0] sm:$0xff]
    %v532 = vld [vmem:[#allocation8 + $0x7b8] sm:$0xff]
    %v533 = vld [vmem:[#allocation8 + $0x7c0] sm:$0xff]
    %v534 = vld [vmem:[#allocation8 + $0x7c8] sm:$0xff]
    %v535 = vld [vmem:[#allocation8 + $0x7d0] sm:$0xff]
    %v536 = vld [vmem:[#allocation8 + $0x7d8] sm:$0xff]
    %v537 = vld [vmem:[#allocation8 + $0x7e0] sm:$0xff]
    %v538 = vld [vmem:[#allocation8 + $0x7e8] sm:$0xff]
    %v539 = vld [vmem:[#allocation8 + $0x7f0] sm:$0xff]
    %v540 = vld [vmem:[#allocation8 + $0x7f8] sm:$0xff]
    %v541 = vld [vmem:[#allocation8 + $0x800] sm:$0xff]
    %v542 = vld [vmem:[#allocation8 + $0x808] sm:$0xff]
    %v543 = vld [vmem:[#allocation8 + $0x810] sm:$0xff]
    %v544 = vld [vmem:[#allocation8 + $0x818] sm:$0xff]
    %v545 = vld [vmem:[#allocation8 + $0x820] sm:$0xff]
    %v546 = vld [vmem:[#allocation8 + $0x828] sm:$0xff]
    %v547 = vld [vmem:[#allocation8 + $0x830] sm:$0xff]
    %v548 = vld [vmem:[#allocation8 + $0x838] sm:$0xff]
    %v549 = vld [vmem:[#allocation8 + $0x840] sm:$0xff]
    %v550 = vld [vmem:[#allocation8 + $0x848] sm:$0xff]
    %v551 = vld [vmem:[#allocation8 + $0x850] sm:$0xff]
    %v552 = vld [vmem:[#allocation8 + $0x858] sm:$0xff]
    %v553 = vld [vmem:[#allocation8 + $0x860] sm:$0xff]
    %v554 = vld [vmem:[#allocation8 + $0x868] sm:$0xff]
    %v555 = vld [vmem:[#allocation8 + $0x870] sm:$0xff]
    %v556 = vld [vmem:[#allocation8 + $0x878] sm:$0xff]
    %v557 = vld [vmem:[#allocation8 + $0x880] sm:$0xff]
    %v558 = vld [vmem:[#allocation8 + $0x888] sm:$0xff]
    %v559 = vld [vmem:[#allocation8 + $0x890] sm:$0xff]
    %v560 = vld [vmem:[#allocation8 + $0x898] sm:$0xff]
    %v561 = vld [vmem:[#allocation8 + $0x8a0] sm:$0xff]
    %v562 = vld [vmem:[#allocation8 + $0x8a8] sm:$0xff]
    %v563 = vld [vmem:[#allocation8 + $0x8b0] sm:$0xff]
    %v564 = vld [vmem:[#allocation8 + $0x8b8] sm:$0xff]
    %v565 = vld [vmem:[#allocation8 + $0x8c0] sm:$0xff]
    %v566 = vld [vmem:[#allocation8 + $0x8c8] sm:$0xff]
    %v567 = vld [vmem:[#allocation8 + $0x8d0] sm:$0xff]
    %v568 = vld [vmem:[#allocation8 + $0x8d8] sm:$0xff]
    %v569 = vld [vmem:[#allocation8 + $0x8e0] sm:$0xff]
    %v570 = vld [vmem:[#allocation8 + $0x8e8] sm:$0xff]
    %v571 = vld [vmem:[#allocation8 + $0x8f0] sm:$0xff]
    %v572 = vld [vmem:[#allocation8 + $0x8f8] sm:$0xff]
    %v573 = vld [vmem:[#allocation8 + $0x900] sm:$0xff]
    %v574 = vld [vmem:[#allocation8 + $0x908] sm:$0xff]
    %v575 = vld [vmem:[#allocation8 + $0x910] sm:$0xff]
    %v576 = vld [vmem:[#allocation8 + $0x918] sm:$0xff]
    %v577 = vld [vmem:[#allocation8 + $0x920] sm:$0xff]
    %v578 = vld [vmem:[#allocation8 + $0x928] sm:$0xff]
    %v579 = vld [vmem:[#allocation8 + $0x930] sm:$0xff]
    %v580 = vld [vmem:[#allocation8 + $0x938] sm:$0xff]
    %v581 = vld [vmem:[#allocation8 + $0x940] sm:$0xff]
    %v582 = vld [vmem:[#allocation8 + $0x948] sm:$0xff]
    %v583 = vld [vmem:[#allocation8 + $0x950] sm:$0xff]
    %v584 = vld [vmem:[#allocation8 + $0x958] sm:$0xff]
    %v585 = vld [vmem:[#allocation8 + $0x960] sm:$0xff]
    %v586 = vld [vmem:[#allocation8 + $0x968] sm:$0xff]
    %v587 = vld [vmem:[#allocation8 + $0x970] sm:$0xff]
    %v588 = vld [vmem:[#allocation8 + $0x978] sm:$0xff]
    %v589 = vld [vmem:[#allocation8 + $0x980] sm:$0xff]
    %v590 = vld [vmem:[#allocation8 + $0x988] sm:$0xff]
    %v591 = vld [vmem:[#allocation8 + $0x990] sm:$0xff]
    %v592 = vld [vmem:[#allocation8 + $0x998] sm:$0xff]
    %v593 = vld [vmem:[#allocation8 + $0x9a0] sm:$0xff]
    %v594 = vld [vmem:[#allocation8 + $0x9a8] sm:$0xff]
    %v595 = vld [vmem:[#allocation8 + $0x9b0] sm:$0xff]
    %v596 = vld [vmem:[#allocation8 + $0x9b8] sm:$0xff]
    %v597 = vld [vmem:[#allocation8 + $0x9c0] sm:$0xff]
    %v598 = vld [vmem:[#allocation8 + $0x9c8] sm:$0xff]
    %v599 = vld [vmem:[#allocation8 + $0x9d0] sm:$0xff]
    %v600 = vld [vmem:[#allocation8 + $0x9d8] sm:$0xff]
    %v601 = vld [vmem:[#allocation8 + $0x9e0] sm:$0xff]
    %v602 = vld [vmem:[#allocation8 + $0x9e8] sm:$0xff]
    %v603 = vld [vmem:[#allocation8 + $0x9f0] sm:$0xff]
    %v604 = vld [vmem:[#allocation8 + $0x9f8] sm:$0xff]
    %v605 = vld [vmem:[#allocation8 + $0xa00] sm:$0xff]
    %v606 = vld [vmem:[#allocation8 + $0xa08] sm:$0xff]
    %v607 = vld [vmem:[#allocation8 + $0xa10] sm:$0xff]
    %v608 = vld [vmem:[#allocation8 + $0xa18] sm:$0xff]
    %v609 = vld [vmem:[#allocation8 + $0xa20] sm:$0xff]
    %v610 = vld [vmem:[#allocation8 + $0xa28] sm:$0xff]
    %v611 = vld [vmem:[#allocation8 + $0xa30] sm:$0xff]
    %v612 = vld [vmem:[#allocation8 + $0xa38] sm:$0xff]
    %v613 = vld [vmem:[#allocation8 + $0xa40] sm:$0xff]
    %v614 = vld [vmem:[#allocation8 + $0xa48] sm:$0xff]
    %v615 = vld [vmem:[#allocation8 + $0xa50] sm:$0xff]
    %v616 = vld [vmem:[#allocation8 + $0xa58] sm:$0xff]
    %v617 = vld [vmem:[#allocation8 + $0xa60] sm:$0xff]
    %v618 = vld [vmem:[#allocation8 + $0xa68] sm:$0xff]
    %v619 = vld [vmem:[#allocation8 + $0xa70] sm:$0xff]
    %v620 = vld [vmem:[#allocation8 + $0xa78] sm:$0xff]
    %v621 = vld [vmem:[#allocation8 + $0xa80] sm:$0xff]
    %v622 = vld [vmem:[#allocation8 + $0xa88] sm:$0xff]
    %v623 = vld [vmem:[#allocation8 + $0xa90] sm:$0xff]
    %v624 = vld [vmem:[#allocation8 + $0xa98] sm:$0xff]
    %v625 = vld [vmem:[#allocation8 + $0xaa0] sm:$0xff]
    %v626 = vld [vmem:[#allocation8 + $0xaa8] sm:$0xff]
    %v627 = vld [vmem:[#allocation8 + $0xab0] sm:$0xff]
    %v628 = vld [vmem:[#allocation8 + $0xab8] sm:$0xff]
    %v629 = vld [vmem:[#allocation8 + $0xac0] sm:$0xff]
    %v630 = vld [vmem:[#allocation8 + $0xac8] sm:$0xff]
    %v631 = vld [vmem:[#allocation8 + $0xad0] sm:$0xff]
    %v632 = vld [vmem:[#allocation8 + $0xad8] sm:$0xff]
    %v633 = vld [vmem:[#allocation8 + $0xae0] sm:$0xff]
    %v634 = vld [vmem:[#allocation8 + $0xae8] sm:$0xff]
    %v635 = vld [vmem:[#allocation8 + $0xaf0] sm:$0xff]
    %v636 = vld [vmem:[#allocation8 + $0xaf8] sm:$0xff]
    %v637 = vld [vmem:[#allocation8 + $0xb00] sm:$0xff]
    %v638 = vld [vmem:[#allocation8 + $0xb08] sm:$0xff]
    %v639 = vld [vmem:[#allocation8 + $0xb10] sm:$0xff]
    %v640 = vld [vmem:[#allocation8 + $0xb18] sm:$0xff]
    %v641 = vld [vmem:[#allocation8 + $0xb20] sm:$0xff]
    %v642 = vld [vmem:[#allocation8 + $0xb28] sm:$0xff]
    %v643 = vld [vmem:[#allocation8 + $0xb30] sm:$0xff]
    %v644 = vld [vmem:[#allocation8 + $0xb38] sm:$0xff]
    %v645 = vld [vmem:[#allocation8 + $0xb40] sm:$0xff]
    %v646 = vld [vmem:[#allocation8 + $0xb48] sm:$0xff]
    %v647 = vld [vmem:[#allocation8 + $0xb50] sm:$0xff]
    %v648 = vld [vmem:[#allocation8 + $0xb58] sm:$0xff]
    %v649 = vld [vmem:[#allocation8 + $0xb60] sm:$0xff]
    %v650 = vld [vmem:[#allocation8 + $0xb68] sm:$0xff]
    %v651 = vld [vmem:[#allocation8 + $0xb70] sm:$0xff]
    %v652 = vld [vmem:[#allocation8 + $0xb78] sm:$0xff]
    %v653 = vld [vmem:[#allocation8 + $0xb80] sm:$0xff]
    %v654 = vld [vmem:[#allocation8 + $0xb88] sm:$0xff]
    %v655 = vld [vmem:[#allocation8 + $0xb90] sm:$0xff]
    %v656 = vld [vmem:[#allocation8 + $0xb98] sm:$0xff]
    %v657 = vld [vmem:[#allocation8 + $0xba0] sm:$0xff]
    %v658 = vld [vmem:[#allocation8 + $0xba8] sm:$0xff]
    %v659 = vld [vmem:[#allocation8 + $0xbb0] sm:$0xff]
    %v660 = vld [vmem:[#allocation8 + $0xbb8] sm:$0xff]
    %v661 = vld [vmem:[#allocation8 + $0xbc0] sm:$0xff]
    %v662 = vld [vmem:[#allocation8 + $0xbc8] sm:$0xff]
    %v663 = vld [vmem:[#allocation8 + $0xbd0] sm:$0xff]
    %v664 = vld [vmem:[#allocation8 + $0xbd8] sm:$0xff]
    %v665 = vld [vmem:[#allocation8 + $0xbe0] sm:$0xff]
    %v666 = vld [vmem:[#allocation8 + $0xbe8] sm:$0xff]
    %v667 = vld [vmem:[#allocation8 + $0xbf0] sm:$0xff]
    %v668 = vld [vmem:[#allocation8 + $0xbf8] sm:$0xff]
    %v669 = vld [vmem:[#allocation8 + $0xc00] sm:$0xff]
    %v670 = vld [vmem:[#allocation8 + $0xc08] sm:$0xff]
    %v671 = vld [vmem:[#allocation8 + $0xc10] sm:$0xff]
    %v672 = vld [vmem:[#allocation8 + $0xc18] sm:$0xff]
    %v673 = vld [vmem:[#allocation8 + $0xc20] sm:$0xff]
    %v674 = vld [vmem:[#allocation8 + $0xc28] sm:$0xff]
    %v675 = vld [vmem:[#allocation8 + $0xc30] sm:$0xff]
    %v676 = vld [vmem:[#allocation8 + $0xc38] sm:$0xff]
    %v677 = vld [vmem:[#allocation8 + $0xc40] sm:$0xff]
    %v678 = vld [vmem:[#allocation8 + $0xc48] sm:$0xff]
    %v679 = vld [vmem:[#allocation8 + $0xc50] sm:$0xff]
    %v680 = vld [vmem:[#allocation8 + $0xc58] sm:$0xff]
    %v681 = vld [vmem:[#allocation8 + $0xc60] sm:$0xff]
    %v682 = vld [vmem:[#allocation8 + $0xc68] sm:$0xff]
    %v683 = vld [vmem:[#allocation8 + $0xc70] sm:$0xff]
    %v684 = vld [vmem:[#allocation8 + $0xc78] sm:$0xff]
    %v685 = vld [vmem:[#allocation8 + $0xc80] sm:$0xff]
    %v686 = vld [vmem:[#allocation8 + $0xc88] sm:$0xff]
    %v687 = vld [vmem:[#allocation8 + $0xc90] sm:$0xff]
    %v688 = vld [vmem:[#allocation8 + $0xc98] sm:$0xff]
    %v689 = vld [vmem:[#allocation8 + $0xca0] sm:$0xff]
    %v690 = vld [vmem:[#allocation8 + $0xca8] sm:$0xff]
    %v691 = vld [vmem:[#allocation8 + $0xcb0] sm:$0xff]
    %v692 = vld [vmem:[#allocation8 + $0xcb8] sm:$0xff]
    %v693 = vld [vmem:[#allocation8 + $0xcc0] sm:$0xff]
    %v694 = vld [vmem:[#allocation8 + $0xcc8] sm:$0xff]
    %v695 = vld [vmem:[#allocation8 + $0xcd0] sm:$0xff]
    %v696 = vld [vmem:[#allocation8 + $0xcd8] sm:$0xff]
    %v697 = vld [vmem:[#allocation8 + $0xce0] sm:$0xff]
    %v698 = vld [vmem:[#allocation8 + $0xce8] sm:$0xff]
    %v699 = vld [vmem:[#allocation8 + $0xcf0] sm:$0xff]
    %v700 = vld [vmem:[#allocation8 + $0xcf8] sm:$0xff]
    %v701 = vld [vmem:[#allocation8 + $0xd00] sm:$0xff]
    %v702 = vld [vmem:[#allocation8 + $0xd08] sm:$0xff]
    %v703 = vld [vmem:[#allocation8 + $0xd10] sm:$0xff]
    %v704 = vld [vmem:[#allocation8 + $0xd18] sm:$0xff]
    %v705 = vld [vmem:[#allocation8 + $0xd20] sm:$0xff]
    %v706 = vld [vmem:[#allocation8 + $0xd28] sm:$0xff]
    %v707 = vld [vmem:[#allocation8 + $0xd30] sm:$0xff]
    %v708 = vld [vmem:[#allocation8 + $0xd38] sm:$0xff]
    %v709 = vld [vmem:[#allocation8 + $0xd40] sm:$0xff]
    %v710 = vld [vmem:[#allocation8 + $0xd48] sm:$0xff]
    %v711 = vld [vmem:[#allocation8 + $0xd50] sm:$0xff]
    %v712 = vld [vmem:[#allocation8 + $0xd58] sm:$0xff]
    %v713 = vld [vmem:[#allocation8 + $0xd60] sm:$0xff]
    %v714 = vld [vmem:[#allocation8 + $0xd68] sm:$0xff]
    %v715 = vld [vmem:[#allocation8 + $0xd70] sm:$0xff]
    %v716 = vld [vmem:[#allocation8 + $0xd78] sm:$0xff]
    %v717 = vld [vmem:[#allocation8 + $0xd80] sm:$0xff]
    %v718 = vld [vmem:[#allocation8 + $0xd88] sm:$0xff]
    %v719 = vld [vmem:[#allocation8 + $0xd90] sm:$0xff]
    %v720 = vld [vmem:[#allocation8 + $0xd98] sm:$0xff]
    %v721 = vld [vmem:[#allocation8 + $0xda0] sm:$0xff]
    %v722 = vld [vmem:[#allocation8 + $0xda8] sm:$0xff]
    %v723 = vld [vmem:[#allocation8 + $0xdb0] sm:$0xff]
    %v724 = vld [vmem:[#allocation8 + $0xdb8] sm:$0xff]
    %v725 = vld [vmem:[#allocation8 + $0xdc0] sm:$0xff]
    %v726 = vld [vmem:[#allocation8 + $0xdc8] sm:$0xff]
    %v727 = vld [vmem:[#allocation8 + $0xdd0] sm:$0xff]
    %v728 = vld [vmem:[#allocation8 + $0xdd8] sm:$0xff]
    %v729 = vld [vmem:[#allocation8 + $0xde0] sm:$0xff]
    %v730 = vld [vmem:[#allocation8 + $0xde8] sm:$0xff]
    %v731 = vld [vmem:[#allocation8 + $0xdf0] sm:$0xff]
    %v732 = vld [vmem:[#allocation8 + $0xdf8] sm:$0xff]
    %v733 = vld [vmem:[#allocation10] sm:$0xff]
    %v735 = vlaneseq
    %v736 = vshrl.u32 %v735, 7
    %v737 = vsub.s32 0, %v736
    %v738 = vrot.slane %v733, %v737
    %v739 = vlaneseq
    %v740 = vshrl.u32 %v739, 7
    %v741 = vsub.s32 1, %v740
    %v742 = vrot.slane %v733, %v741
    %v743 = vlaneseq
    %v744 = vshrl.u32 %v743, 7
    %v745 = vsub.s32 2, %v744
    %v746 = vrot.slane %v733, %v745
    %v747 = vlaneseq
    %v748 = vshrl.u32 %v747, 7
    %v749 = vsub.s32 3, %v748
    %v750 = vrot.slane %v733, %v749
    %v751 = vlaneseq
    %v752 = vshrl.u32 %v751, 7
    %v753 = vsub.s32 4, %v752
    %v754 = vrot.slane %v733, %v753
    %v755 = vlaneseq
    %v756 = vshrl.u32 %v755, 7
    %v757 = vsub.s32 5, %v756
    %v758 = vrot.slane %v733, %v757
    %v759 = vlaneseq
    %v760 = vshrl.u32 %v759, 7
    %v761 = vsub.s32 6, %v760
    %v762 = vrot.slane %v733, %v761
    %v763 = vlaneseq
    %v764 = vshrl.u32 %v763, 7
    %v765 = vsub.s32 7, %v764
    %v766 = vrot.slane %v733, %v765
    %v783 = vunpack.c.l.b16 %v277
    %v784 = vunpack.c.h.b16 %v277
    %v785 = vunpack.c.l.b16 %v278
    %v786 = vunpack.c.h.b16 %v278
    %v787 = vunpack.c.l.b16 %v279
    %v788 = vunpack.c.h.b16 %v279
    %v789 = vunpack.c.l.b16 %v280
    %v790 = vunpack.c.l.b16 %v281
    %v791 = vunpack.c.h.b16 %v281
    %v792 = vunpack.c.l.b16 %v282
    %v793 = vunpack.c.h.b16 %v282
    %v794 = vunpack.c.l.b16 %v283
    %v795 = vunpack.c.h.b16 %v283
    %v796 = vunpack.c.l.b16 %v284
    %v797 = vpack.c.b16 %v790, %v783
    %v798 = vpack.c.b16 %v791, %v784
    %v799 = vpack.c.b16 %v792, %v785
    %v800 = vpack.c.b16 %v793, %v786
    %v801 = vpack.c.b16 %v794, %v787
    %v802 = vpack.c.b16 %v795, %v788
    %v803 = vpack.c.b16 %v796, %v789
    %v1259 = vunpack.c.l.b16 %v285
    %v1260 = vunpack.c.h.b16 %v285
    %v1261 = vunpack.c.l.b16 %v286
    %v1262 = vunpack.c.h.b16 %v286
    %v1263 = vunpack.c.l.b16 %v287
    %v1264 = vunpack.c.h.b16 %v287
    %v1265 = vunpack.c.l.b16 %v288
    %v1266 = vunpack.c.h.b16 %v288
    %v1267 = vunpack.c.l.b16 %v289
    %v1268 = vunpack.c.h.b16 %v289
    %v1269 = vunpack.c.l.b16 %v290
    %v1270 = vunpack.c.h.b16 %v290
    %v1271 = vunpack.c.l.b16 %v291
    %v1272 = vunpack.c.h.b16 %v291
    %v1273 = vunpack.c.l.b16 %v292
    %v1274 = vunpack.c.h.b16 %v292
    %v1275 = vunpack.c.l.b16 %v293
    %v1276 = vunpack.c.h.b16 %v293
    %v1277 = vunpack.c.l.b16 %v294
    %v1278 = vunpack.c.h.b16 %v294
    %v1279 = vunpack.c.l.b16 %v295
    %v1280 = vunpack.c.h.b16 %v295
    %v1281 = vunpack.c.l.b16 %v296
    %v1282 = vunpack.c.h.b16 %v296
    %v1283 = vunpack.c.l.b16 %v297
    %v1284 = vunpack.c.h.b16 %v297
    %v1285 = vunpack.c.l.b16 %v298
    %v1286 = vunpack.c.h.b16 %v298
    %v1287 = vunpack.c.l.b16 %v299
    %v1288 = vunpack.c.h.b16 %v299
    %v1289 = vunpack.c.l.b16 %v300
    %v1290 = vunpack.c.h.b16 %v300
    %v1291 = vunpack.c.l.b16 %v301
    %v1292 = vunpack.c.h.b16 %v301
    %v1293 = vunpack.c.l.b16 %v302
    %v1294 = vunpack.c.h.b16 %v302
    %v1295 = vunpack.c.l.b16 %v303
    %v1296 = vunpack.c.h.b16 %v303
    %v1297 = vunpack.c.l.b16 %v304
    %v1298 = vunpack.c.h.b16 %v304
    %v1299 = vunpack.c.l.b16 %v305
    %v1300 = vunpack.c.h.b16 %v305
    %v1301 = vunpack.c.l.b16 %v306
    %v1302 = vunpack.c.h.b16 %v306
    %v1303 = vunpack.c.l.b16 %v307
    %v1304 = vunpack.c.h.b16 %v307
    %v1305 = vunpack.c.l.b16 %v308
    %v1306 = vunpack.c.h.b16 %v308
    %v1307 = vunpack.c.l.b16 %v309
    %v1308 = vunpack.c.h.b16 %v309
    %v1309 = vunpack.c.l.b16 %v310
    %v1310 = vunpack.c.h.b16 %v310
    %v1311 = vunpack.c.l.b16 %v311
    %v1312 = vunpack.c.h.b16 %v311
    %v1313 = vunpack.c.l.b16 %v312
    %v1314 = vunpack.c.h.b16 %v312
    %v1315 = vunpack.c.l.b16 %v313
    %v1316 = vunpack.c.h.b16 %v313
    %v1317 = vunpack.c.l.b16 %v314
    %v1318 = vunpack.c.h.b16 %v314
    %v1319 = vunpack.c.l.b16 %v315
    %v1320 = vunpack.c.h.b16 %v315
    %v1321 = vunpack.c.l.b16 %v316
    %v1322 = vunpack.c.h.b16 %v316
    %v1323 = vunpack.c.l.b16 %v317
    %v1324 = vunpack.c.h.b16 %v317
    %v1325 = vunpack.c.l.b16 %v318
    %v1326 = vunpack.c.h.b16 %v318
    %v1327 = vunpack.c.l.b16 %v319
    %v1328 = vunpack.c.h.b16 %v319
    %v1329 = vunpack.c.l.b16 %v320
    %v1330 = vunpack.c.h.b16 %v320
    %v1331 = vunpack.c.l.b16 %v321
    %v1332 = vunpack.c.h.b16 %v321
    %v1333 = vunpack.c.l.b16 %v322
    %v1334 = vunpack.c.h.b16 %v322
    %v1335 = vunpack.c.l.b16 %v323
    %v1336 = vunpack.c.h.b16 %v323
    %v1337 = vunpack.c.l.b16 %v324
    %v1338 = vunpack.c.h.b16 %v324
    %v1339 = vunpack.c.l.b16 %v325
    %v1340 = vunpack.c.h.b16 %v325
    %v1341 = vunpack.c.l.b16 %v326
    %v1342 = vunpack.c.h.b16 %v326
    %v1343 = vunpack.c.l.b16 %v327
    %v1344 = vunpack.c.h.b16 %v327
    %v1345 = vunpack.c.l.b16 %v328
    %v1346 = vunpack.c.h.b16 %v328
    %v1347 = vunpack.c.l.b16 %v329
    %v1348 = vunpack.c.h.b16 %v329
    %v1349 = vunpack.c.l.b16 %v330
    %v1350 = vunpack.c.h.b16 %v330
    %v1351 = vunpack.c.l.b16 %v331
    %v1352 = vunpack.c.h.b16 %v331
    %v1353 = vunpack.c.l.b16 %v332
    %v1354 = vunpack.c.h.b16 %v332
    %v1355 = vunpack.c.l.b16 %v333
    %v1356 = vunpack.c.h.b16 %v333
    %v1357 = vunpack.c.l.b16 %v334
    %v1358 = vunpack.c.h.b16 %v334
    %v1359 = vunpack.c.l.b16 %v335
    %v1360 = vunpack.c.h.b16 %v335
    %v1361 = vunpack.c.l.b16 %v336
    %v1362 = vunpack.c.h.b16 %v336
    %v1363 = vunpack.c.l.b16 %v337
    %v1364 = vunpack.c.h.b16 %v337
    %v1365 = vunpack.c.l.b16 %v338
    %v1366 = vunpack.c.h.b16 %v338
    %v1367 = vunpack.c.l.b16 %v339
    %v1368 = vunpack.c.h.b16 %v339
    %v1369 = vunpack.c.l.b16 %v340
    %v1370 = vunpack.c.h.b16 %v340
    %v1371 = vunpack.c.l.b16 %v341
    %v1372 = vunpack.c.h.b16 %v341
    %v1373 = vunpack.c.l.b16 %v342
    %v1374 = vunpack.c.h.b16 %v342
    %v1375 = vunpack.c.l.b16 %v343
    %v1376 = vunpack.c.h.b16 %v343
    %v1377 = vunpack.c.l.b16 %v344
    %v1378 = vunpack.c.h.b16 %v344
    %v1379 = vunpack.c.l.b16 %v345
    %v1380 = vunpack.c.h.b16 %v345
    %v1381 = vunpack.c.l.b16 %v346
    %v1382 = vunpack.c.h.b16 %v346
    %v1383 = vunpack.c.l.b16 %v347
    %v1384 = vunpack.c.h.b16 %v347
    %v1385 = vunpack.c.l.b16 %v348
    %v1386 = vunpack.c.h.b16 %v348
    %v1387 = vunpack.c.l.b16 %v349
    %v1388 = vunpack.c.h.b16 %v349
    %v1389 = vunpack.c.l.b16 %v350
    %v1390 = vunpack.c.h.b16 %v350
    %v1391 = vunpack.c.l.b16 %v351
    %v1392 = vunpack.c.h.b16 %v351
    %v1393 = vunpack.c.l.b16 %v352
    %v1394 = vunpack.c.h.b16 %v352
    %v1395 = vunpack.c.l.b16 %v353
    %v1396 = vunpack.c.h.b16 %v353
    %v1397 = vunpack.c.l.b16 %v354
    %v1398 = vunpack.c.h.b16 %v354
    %v1399 = vunpack.c.l.b16 %v355
    %v1400 = vunpack.c.h.b16 %v355
    %v1401 = vunpack.c.l.b16 %v356
    %v1402 = vunpack.c.h.b16 %v356
    %v1403 = vunpack.c.l.b16 %v357
    %v1404 = vunpack.c.h.b16 %v357
    %v1405 = vunpack.c.l.b16 %v358
    %v1406 = vunpack.c.h.b16 %v358
    %v1407 = vunpack.c.l.b16 %v359
    %v1408 = vunpack.c.h.b16 %v359
    %v1409 = vunpack.c.l.b16 %v360
    %v1410 = vunpack.c.h.b16 %v360
    %v1411 = vunpack.c.l.b16 %v361
    %v1412 = vunpack.c.h.b16 %v361
    %v1413 = vunpack.c.l.b16 %v362
    %v1414 = vunpack.c.h.b16 %v362
    %v1415 = vunpack.c.l.b16 %v363
    %v1416 = vunpack.c.h.b16 %v363
    %v1417 = vunpack.c.l.b16 %v364
    %v1418 = vunpack.c.h.b16 %v364
    %v1419 = vunpack.c.l.b16 %v365
    %v1420 = vunpack.c.h.b16 %v365
    %v1421 = vunpack.c.l.b16 %v366
    %v1422 = vunpack.c.h.b16 %v366
    %v1423 = vunpack.c.l.b16 %v367
    %v1424 = vunpack.c.h.b16 %v367
    %v1425 = vunpack.c.l.b16 %v368
    %v1426 = vunpack.c.h.b16 %v368
    %v1427 = vunpack.c.l.b16 %v369
    %v1428 = vunpack.c.h.b16 %v369
    %v1429 = vunpack.c.l.b16 %v370
    %v1430 = vunpack.c.h.b16 %v370
    %v1431 = vunpack.c.l.b16 %v371
    %v1432 = vunpack.c.h.b16 %v371
    %v1433 = vunpack.c.l.b16 %v372
    %v1434 = vunpack.c.h.b16 %v372
    %v1435 = vunpack.c.l.b16 %v373
    %v1436 = vunpack.c.h.b16 %v373
    %v1437 = vunpack.c.l.b16 %v374
    %v1438 = vunpack.c.h.b16 %v374
    %v1439 = vunpack.c.l.b16 %v375
    %v1440 = vunpack.c.h.b16 %v375
    %v1441 = vunpack.c.l.b16 %v376
    %v1442 = vunpack.c.h.b16 %v376
    %v1443 = vunpack.c.l.b16 %v377
    %v1444 = vunpack.c.h.b16 %v377
    %v1445 = vunpack.c.l.b16 %v378
    %v1446 = vunpack.c.h.b16 %v378
    %v1447 = vunpack.c.l.b16 %v379
    %v1448 = vunpack.c.h.b16 %v379
    %v1449 = vunpack.c.l.b16 %v380
    %v1450 = vunpack.c.h.b16 %v380
    %v1451 = vunpack.c.l.b16 %v381
    %v1452 = vunpack.c.h.b16 %v381
    %v1453 = vunpack.c.l.b16 %v382
    %v1454 = vunpack.c.h.b16 %v382
    %v1455 = vunpack.c.l.b16 %v383
    %v1456 = vunpack.c.h.b16 %v383
    %v1457 = vunpack.c.l.b16 %v384
    %v1458 = vunpack.c.h.b16 %v384
    %v1459 = vunpack.c.l.b16 %v385
    %v1460 = vunpack.c.h.b16 %v385
    %v1461 = vunpack.c.l.b16 %v386
    %v1462 = vunpack.c.h.b16 %v386
    %v1463 = vunpack.c.l.b16 %v387
    %v1464 = vunpack.c.h.b16 %v387
    %v1465 = vunpack.c.l.b16 %v388
    %v1466 = vunpack.c.h.b16 %v388
    %v1467 = vunpack.c.l.b16 %v389
    %v1468 = vunpack.c.h.b16 %v389
    %v1469 = vunpack.c.l.b16 %v390
    %v1470 = vunpack.c.h.b16 %v390
    %v1471 = vunpack.c.l.b16 %v391
    %v1472 = vunpack.c.h.b16 %v391
    %v1473 = vunpack.c.l.b16 %v392
    %v1474 = vunpack.c.h.b16 %v392
    %v1475 = vunpack.c.l.b16 %v393
    %v1476 = vunpack.c.h.b16 %v393
    %v1477 = vunpack.c.l.b16 %v394
    %v1478 = vunpack.c.h.b16 %v394
    %v1479 = vunpack.c.l.b16 %v395
    %v1480 = vunpack.c.h.b16 %v395
    %v1481 = vunpack.c.l.b16 %v396
    %v1482 = vunpack.c.h.b16 %v396
    %v1483 = vunpack.c.l.b16 %v397
    %v1484 = vunpack.c.h.b16 %v397
    %v1485 = vunpack.c.l.b16 %v398
    %v1486 = vunpack.c.h.b16 %v398
    %v1487 = vunpack.c.l.b16 %v399
    %v1488 = vunpack.c.h.b16 %v399
    %v1489 = vunpack.c.l.b16 %v400
    %v1490 = vunpack.c.h.b16 %v400
    %v1491 = vunpack.c.l.b16 %v401
    %v1492 = vunpack.c.h.b16 %v401
    %v1493 = vunpack.c.l.b16 %v402
    %v1494 = vunpack.c.h.b16 %v402
    %v1495 = vunpack.c.l.b16 %v403
    %v1496 = vunpack.c.h.b16 %v403
    %v1497 = vunpack.c.l.b16 %v404
    %v1498 = vunpack.c.h.b16 %v404
    %v1499 = vunpack.c.l.b16 %v405
    %v1500 = vunpack.c.h.b16 %v405
    %v1501 = vunpack.c.l.b16 %v406
    %v1502 = vunpack.c.h.b16 %v406
    %v1503 = vunpack.c.l.b16 %v407
    %v1504 = vunpack.c.h.b16 %v407
    %v1505 = vunpack.c.l.b16 %v408
    %v1506 = vunpack.c.h.b16 %v408
    %v1507 = vunpack.c.l.b16 %v409
    %v1508 = vunpack.c.h.b16 %v409
    %v1509 = vunpack.c.l.b16 %v410
    %v1510 = vunpack.c.h.b16 %v410
    %v1511 = vunpack.c.l.b16 %v411
    %v1512 = vunpack.c.h.b16 %v411
    %v1513 = vunpack.c.l.b16 %v412
    %v1514 = vunpack.c.h.b16 %v412
    %v1515 = vunpack.c.l.b16 %v413
    %v1516 = vunpack.c.h.b16 %v413
    %v1517 = vunpack.c.l.b16 %v414
    %v1518 = vunpack.c.h.b16 %v414
    %v1519 = vunpack.c.l.b16 %v415
    %v1520 = vunpack.c.h.b16 %v415
    %v1521 = vunpack.c.l.b16 %v416
    %v1522 = vunpack.c.h.b16 %v416
    %v1523 = vunpack.c.l.b16 %v417
    %v1524 = vunpack.c.h.b16 %v417
    %v1525 = vunpack.c.l.b16 %v418
    %v1526 = vunpack.c.h.b16 %v418
    %v1527 = vunpack.c.l.b16 %v419
    %v1528 = vunpack.c.h.b16 %v419
    %v1529 = vunpack.c.l.b16 %v420
    %v1530 = vunpack.c.h.b16 %v420
    %v1531 = vunpack.c.l.b16 %v421
    %v1532 = vunpack.c.h.b16 %v421
    %v1533 = vunpack.c.l.b16 %v422
    %v1534 = vunpack.c.h.b16 %v422
    %v1535 = vunpack.c.l.b16 %v423
    %v1536 = vunpack.c.h.b16 %v423
    %v1537 = vunpack.c.l.b16 %v424
    %v1538 = vunpack.c.h.b16 %v424
    %v1539 = vunpack.c.l.b16 %v425
    %v1540 = vunpack.c.h.b16 %v425
    %v1541 = vunpack.c.l.b16 %v426
    %v1542 = vunpack.c.h.b16 %v426
    %v1543 = vunpack.c.l.b16 %v427
    %v1544 = vunpack.c.h.b16 %v427
    %v1545 = vunpack.c.l.b16 %v428
    %v1546 = vunpack.c.h.b16 %v428
    %v1547 = vunpack.c.l.b16 %v429
    %v1548 = vunpack.c.h.b16 %v429
    %v1549 = vunpack.c.l.b16 %v430
    %v1550 = vunpack.c.h.b16 %v430
    %v1551 = vunpack.c.l.b16 %v431
    %v1552 = vunpack.c.h.b16 %v431
    %v1553 = vunpack.c.l.b16 %v432
    %v1554 = vunpack.c.h.b16 %v432
    %v1555 = vunpack.c.l.b16 %v433
    %v1556 = vunpack.c.h.b16 %v433
    %v1557 = vunpack.c.l.b16 %v434
    %v1558 = vunpack.c.h.b16 %v434
    %v1559 = vunpack.c.l.b16 %v435
    %v1560 = vunpack.c.h.b16 %v435
    %v1561 = vunpack.c.l.b16 %v436
    %v1562 = vunpack.c.h.b16 %v436
    %v1563 = vunpack.c.l.b16 %v437
    %v1564 = vunpack.c.h.b16 %v437
    %v1565 = vunpack.c.l.b16 %v438
    %v1566 = vunpack.c.h.b16 %v438
    %v1567 = vunpack.c.l.b16 %v439
    %v1568 = vunpack.c.h.b16 %v439
    %v1569 = vunpack.c.l.b16 %v440
    %v1570 = vunpack.c.h.b16 %v440
    %v1571 = vunpack.c.l.b16 %v441
    %v1572 = vunpack.c.h.b16 %v441
    %v1573 = vunpack.c.l.b16 %v442
    %v1574 = vunpack.c.h.b16 %v442
    %v1575 = vunpack.c.l.b16 %v443
    %v1576 = vunpack.c.h.b16 %v443
    %v1577 = vunpack.c.l.b16 %v444
    %v1578 = vunpack.c.h.b16 %v444
    %v1579 = vunpack.c.l.b16 %v445
    %v1580 = vunpack.c.h.b16 %v445
    %v1581 = vunpack.c.l.b16 %v446
    %v1582 = vunpack.c.h.b16 %v446
    %v1583 = vunpack.c.l.b16 %v447
    %v1584 = vunpack.c.h.b16 %v447
    %v1585 = vunpack.c.l.b16 %v448
    %v1586 = vunpack.c.h.b16 %v448
    %v1587 = vunpack.c.l.b16 %v449
    %v1588 = vunpack.c.h.b16 %v449
    %v1589 = vunpack.c.l.b16 %v450
    %v1590 = vunpack.c.h.b16 %v450
    %v1591 = vunpack.c.l.b16 %v451
    %v1592 = vunpack.c.h.b16 %v451
    %v1593 = vunpack.c.l.b16 %v452
    %v1594 = vunpack.c.h.b16 %v452
    %v1595 = vunpack.c.l.b16 %v453
    %v1596 = vunpack.c.h.b16 %v453
    %v1597 = vunpack.c.l.b16 %v454
    %v1598 = vunpack.c.h.b16 %v454
    %v1599 = vunpack.c.l.b16 %v455
    %v1600 = vunpack.c.h.b16 %v455
    %v1601 = vunpack.c.l.b16 %v456
    %v1602 = vunpack.c.h.b16 %v456
    %v1603 = vunpack.c.l.b16 %v457
    %v1604 = vunpack.c.h.b16 %v457
    %v1605 = vunpack.c.l.b16 %v458
    %v1606 = vunpack.c.h.b16 %v458
    %v1607 = vunpack.c.l.b16 %v459
    %v1608 = vunpack.c.h.b16 %v459
    %v1609 = vunpack.c.l.b16 %v460
    %v1610 = vunpack.c.h.b16 %v460
    %v1611 = vunpack.c.l.b16 %v461
    %v1612 = vunpack.c.h.b16 %v461
    %v1613 = vunpack.c.l.b16 %v462
    %v1614 = vunpack.c.h.b16 %v462
    %v1615 = vunpack.c.l.b16 %v463
    %v1616 = vunpack.c.h.b16 %v463
    %v1617 = vunpack.c.l.b16 %v464
    %v1618 = vunpack.c.h.b16 %v464
    %v1619 = vunpack.c.l.b16 %v465
    %v1620 = vunpack.c.h.b16 %v465
    %v1621 = vunpack.c.l.b16 %v466
    %v1622 = vunpack.c.h.b16 %v466
    %v1623 = vunpack.c.l.b16 %v467
    %v1624 = vunpack.c.h.b16 %v467
    %v1625 = vunpack.c.l.b16 %v468
    %v1626 = vunpack.c.h.b16 %v468
    %v1627 = vunpack.c.l.b16 %v469
    %v1628 = vunpack.c.h.b16 %v469
    %v1629 = vunpack.c.l.b16 %v470
    %v1630 = vunpack.c.h.b16 %v470
    %v1631 = vunpack.c.l.b16 %v471
    %v1632 = vunpack.c.h.b16 %v471
    %v1633 = vunpack.c.l.b16 %v472
    %v1634 = vunpack.c.h.b16 %v472
    %v1635 = vunpack.c.l.b16 %v473
    %v1636 = vunpack.c.h.b16 %v473
    %v1637 = vunpack.c.l.b16 %v474
    %v1638 = vunpack.c.h.b16 %v474
    %v1639 = vunpack.c.l.b16 %v475
    %v1640 = vunpack.c.h.b16 %v475
    %v1641 = vunpack.c.l.b16 %v476
    %v1642 = vunpack.c.h.b16 %v476
    %v1643 = vunpack.c.l.b16 %v477
    %v1644 = vunpack.c.h.b16 %v477
    %v1645 = vunpack.c.l.b16 %v478
    %v1646 = vunpack.c.h.b16 %v478
    %v1647 = vunpack.c.l.b16 %v479
    %v1648 = vunpack.c.h.b16 %v479
    %v1649 = vunpack.c.l.b16 %v480
    %v1650 = vunpack.c.h.b16 %v480
    %v1651 = vunpack.c.l.b16 %v481
    %v1652 = vunpack.c.h.b16 %v481
    %v1653 = vunpack.c.l.b16 %v482
    %v1654 = vunpack.c.h.b16 %v482
    %v1655 = vunpack.c.l.b16 %v483
    %v1656 = vunpack.c.h.b16 %v483
    %v1657 = vunpack.c.l.b16 %v484
    %v1658 = vunpack.c.h.b16 %v484
    %v1659 = vunpack.c.l.b16 %v485
    %v1660 = vunpack.c.h.b16 %v485
    %v1661 = vunpack.c.l.b16 %v486
    %v1662 = vunpack.c.h.b16 %v486
    %v1663 = vunpack.c.l.b16 %v487
    %v1664 = vunpack.c.h.b16 %v487
    %v1665 = vunpack.c.l.b16 %v488
    %v1666 = vunpack.c.h.b16 %v488
    %v1667 = vunpack.c.l.b16 %v489
    %v1668 = vunpack.c.h.b16 %v489
    %v1669 = vunpack.c.l.b16 %v490
    %v1670 = vunpack.c.h.b16 %v490
    %v1671 = vunpack.c.l.b16 %v491
    %v1672 = vunpack.c.h.b16 %v491
    %v1673 = vunpack.c.l.b16 %v492
    %v1674 = vunpack.c.h.b16 %v492
    %v1675 = vunpack.c.l.b16 %v493
    %v1676 = vunpack.c.h.b16 %v493
    %v1677 = vunpack.c.l.b16 %v494
    %v1678 = vunpack.c.h.b16 %v494
    %v1679 = vunpack.c.l.b16 %v495
    %v1680 = vunpack.c.h.b16 %v495
    %v1681 = vunpack.c.l.b16 %v496
    %v1682 = vunpack.c.h.b16 %v496
    %v1683 = vunpack.c.l.b16 %v497
    %v1684 = vunpack.c.h.b16 %v497
    %v1685 = vunpack.c.l.b16 %v498
    %v1686 = vunpack.c.h.b16 %v498
    %v1687 = vunpack.c.l.b16 %v499
    %v1688 = vunpack.c.h.b16 %v499
    %v1689 = vunpack.c.l.b16 %v500
    %v1690 = vunpack.c.h.b16 %v500
    %v1691 = vunpack.c.l.b16 %v501
    %v1692 = vunpack.c.h.b16 %v501
    %v1693 = vunpack.c.l.b16 %v502
    %v1694 = vunpack.c.h.b16 %v502
    %v1695 = vunpack.c.l.b16 %v503
    %v1696 = vunpack.c.h.b16 %v503
    %v1697 = vunpack.c.l.b16 %v504
    %v1698 = vunpack.c.h.b16 %v504
    %v1699 = vunpack.c.l.b16 %v505
    %v1700 = vunpack.c.h.b16 %v505
    %v1701 = vunpack.c.l.b16 %v506
    %v1702 = vunpack.c.h.b16 %v506
    %v1703 = vunpack.c.l.b16 %v507
    %v1704 = vunpack.c.h.b16 %v507
    %v1705 = vunpack.c.l.b16 %v508
    %v1706 = vunpack.c.h.b16 %v508
    %v1707 = vunpack.c.l.b16 %v509
    %v1708 = vunpack.c.h.b16 %v509
    %v1709 = vunpack.c.l.b16 %v510
    %v1710 = vunpack.c.h.b16 %v510
    %v1711 = vunpack.c.l.b16 %v511
    %v1712 = vunpack.c.h.b16 %v511
    %v1713 = vunpack.c.l.b16 %v512
    %v1714 = vunpack.c.h.b16 %v512
    %v1715 = vunpack.c.l.b16 %v513
    %v1716 = vunpack.c.h.b16 %v513
    %v1717 = vunpack.c.l.b16 %v514
    %v1718 = vunpack.c.h.b16 %v514
    %v1719 = vunpack.c.l.b16 %v515
    %v1720 = vunpack.c.h.b16 %v515
    %v1721 = vunpack.c.l.b16 %v516
    %v1722 = vunpack.c.h.b16 %v516
    %v1723 = vunpack.c.l.b16 %v517
    %v1724 = vunpack.c.h.b16 %v517
    %v1725 = vunpack.c.l.b16 %v518
    %v1726 = vunpack.c.h.b16 %v518
    %v1727 = vunpack.c.l.b16 %v519
    %v1728 = vunpack.c.h.b16 %v519
    %v1729 = vunpack.c.l.b16 %v520
    %v1730 = vunpack.c.h.b16 %v520
    %v1731 = vunpack.c.l.b16 %v521
    %v1732 = vunpack.c.h.b16 %v521
    %v1733 = vunpack.c.l.b16 %v522
    %v1734 = vunpack.c.h.b16 %v522
    %v1735 = vunpack.c.l.b16 %v523
    %v1736 = vunpack.c.h.b16 %v523
    %v1737 = vunpack.c.l.b16 %v524
    %v1738 = vunpack.c.h.b16 %v524
    %v1739 = vunpack.c.l.b16 %v525
    %v1740 = vunpack.c.h.b16 %v525
    %v1741 = vunpack.c.l.b16 %v526
    %v1742 = vunpack.c.h.b16 %v526
    %v1743 = vunpack.c.l.b16 %v527
    %v1744 = vunpack.c.h.b16 %v527
    %v1745 = vunpack.c.l.b16 %v528
    %v1746 = vunpack.c.h.b16 %v528
    %v1747 = vunpack.c.l.b16 %v529
    %v1748 = vunpack.c.h.b16 %v529
    %v1749 = vunpack.c.l.b16 %v530
    %v1750 = vunpack.c.h.b16 %v530
    %v1751 = vunpack.c.l.b16 %v531
    %v1752 = vunpack.c.h.b16 %v531
    %v1753 = vunpack.c.l.b16 %v532
    %v1754 = vunpack.c.h.b16 %v532
    %v1755 = vunpack.c.l.b16 %v533
    %v1756 = vunpack.c.h.b16 %v533
    %v1757 = vunpack.c.l.b16 %v534
    %v1758 = vunpack.c.h.b16 %v534
    %v1759 = vunpack.c.l.b16 %v535
    %v1760 = vunpack.c.h.b16 %v535
    %v1761 = vunpack.c.l.b16 %v536
    %v1762 = vunpack.c.h.b16 %v536
    %v1763 = vunpack.c.l.b16 %v537
    %v1764 = vunpack.c.h.b16 %v537
    %v1765 = vunpack.c.l.b16 %v538
    %v1766 = vunpack.c.h.b16 %v538
    %v1767 = vunpack.c.l.b16 %v539
    %v1768 = vunpack.c.h.b16 %v539
    %v1769 = vunpack.c.l.b16 %v540
    %v1770 = vunpack.c.h.b16 %v540
    %v1771 = vunpack.c.l.b16 %v541
    %v1772 = vunpack.c.h.b16 %v541
    %v1773 = vunpack.c.l.b16 %v542
    %v1774 = vunpack.c.h.b16 %v542
    %v1775 = vunpack.c.l.b16 %v543
    %v1776 = vunpack.c.h.b16 %v543
    %v1777 = vunpack.c.l.b16 %v544
    %v1778 = vunpack.c.h.b16 %v544
    %v1779 = vunpack.c.l.b16 %v545
    %v1780 = vunpack.c.h.b16 %v545
    %v1781 = vunpack.c.l.b16 %v546
    %v1782 = vunpack.c.h.b16 %v546
    %v1783 = vunpack.c.l.b16 %v547
    %v1784 = vunpack.c.h.b16 %v547
    %v1785 = vunpack.c.l.b16 %v548
    %v1786 = vunpack.c.h.b16 %v548
    %v1787 = vunpack.c.l.b16 %v549
    %v1788 = vunpack.c.h.b16 %v549
    %v1789 = vunpack.c.l.b16 %v550
    %v1790 = vunpack.c.h.b16 %v550
    %v1791 = vunpack.c.l.b16 %v551
    %v1792 = vunpack.c.h.b16 %v551
    %v1793 = vunpack.c.l.b16 %v552
    %v1794 = vunpack.c.h.b16 %v552
    %v1795 = vunpack.c.l.b16 %v553
    %v1796 = vunpack.c.h.b16 %v553
    %v1797 = vunpack.c.l.b16 %v554
    %v1798 = vunpack.c.h.b16 %v554
    %v1799 = vunpack.c.l.b16 %v555
    %v1800 = vunpack.c.h.b16 %v555
    %v1801 = vunpack.c.l.b16 %v556
    %v1802 = vunpack.c.h.b16 %v556
    %v1803 = vunpack.c.l.b16 %v557
    %v1804 = vunpack.c.h.b16 %v557
    %v1805 = vunpack.c.l.b16 %v558
    %v1806 = vunpack.c.h.b16 %v558
    %v1807 = vunpack.c.l.b16 %v559
    %v1808 = vunpack.c.h.b16 %v559
    %v1809 = vunpack.c.l.b16 %v560
    %v1810 = vunpack.c.h.b16 %v560
    %v1811 = vunpack.c.l.b16 %v561
    %v1812 = vunpack.c.h.b16 %v561
    %v1813 = vunpack.c.l.b16 %v562
    %v1814 = vunpack.c.h.b16 %v562
    %v1815 = vunpack.c.l.b16 %v563
    %v1816 = vunpack.c.h.b16 %v563
    %v1817 = vunpack.c.l.b16 %v564
    %v1818 = vunpack.c.h.b16 %v564
    %v1819 = vunpack.c.l.b16 %v565
    %v1820 = vunpack.c.h.b16 %v565
    %v1821 = vunpack.c.l.b16 %v566
    %v1822 = vunpack.c.h.b16 %v566
    %v1823 = vunpack.c.l.b16 %v567
    %v1824 = vunpack.c.h.b16 %v567
    %v1825 = vunpack.c.l.b16 %v568
    %v1826 = vunpack.c.h.b16 %v568
    %v1827 = vunpack.c.l.b16 %v569
    %v1828 = vunpack.c.h.b16 %v569
    %v1829 = vunpack.c.l.b16 %v570
    %v1830 = vunpack.c.h.b16 %v570
    %v1831 = vunpack.c.l.b16 %v571
    %v1832 = vunpack.c.h.b16 %v571
    %v1833 = vunpack.c.l.b16 %v572
    %v1834 = vunpack.c.h.b16 %v572
    %v1835 = vunpack.c.l.b16 %v573
    %v1836 = vunpack.c.h.b16 %v573
    %v1837 = vunpack.c.l.b16 %v574
    %v1838 = vunpack.c.h.b16 %v574
    %v1839 = vunpack.c.l.b16 %v575
    %v1840 = vunpack.c.h.b16 %v575
    %v1841 = vunpack.c.l.b16 %v576
    %v1842 = vunpack.c.h.b16 %v576
    %v1843 = vunpack.c.l.b16 %v577
    %v1844 = vunpack.c.h.b16 %v577
    %v1845 = vunpack.c.l.b16 %v578
    %v1846 = vunpack.c.h.b16 %v578
    %v1847 = vunpack.c.l.b16 %v579
    %v1848 = vunpack.c.h.b16 %v579
    %v1849 = vunpack.c.l.b16 %v580
    %v1850 = vunpack.c.h.b16 %v580
    %v1851 = vunpack.c.l.b16 %v581
    %v1852 = vunpack.c.h.b16 %v581
    %v1853 = vunpack.c.l.b16 %v582
    %v1854 = vunpack.c.h.b16 %v582
    %v1855 = vunpack.c.l.b16 %v583
    %v1856 = vunpack.c.h.b16 %v583
    %v1857 = vunpack.c.l.b16 %v584
    %v1858 = vunpack.c.h.b16 %v584
    %v1859 = vunpack.c.l.b16 %v585
    %v1860 = vunpack.c.h.b16 %v585
    %v1861 = vunpack.c.l.b16 %v586
    %v1862 = vunpack.c.h.b16 %v586
    %v1863 = vunpack.c.l.b16 %v587
    %v1864 = vunpack.c.h.b16 %v587
    %v1865 = vunpack.c.l.b16 %v588
    %v1866 = vunpack.c.h.b16 %v588
    %v1867 = vunpack.c.l.b16 %v589
    %v1868 = vunpack.c.h.b16 %v589
    %v1869 = vunpack.c.l.b16 %v590
    %v1870 = vunpack.c.h.b16 %v590
    %v1871 = vunpack.c.l.b16 %v591
    %v1872 = vunpack.c.h.b16 %v591
    %v1873 = vunpack.c.l.b16 %v592
    %v1874 = vunpack.c.h.b16 %v592
    %v1875 = vunpack.c.l.b16 %v593
    %v1876 = vunpack.c.h.b16 %v593
    %v1877 = vunpack.c.l.b16 %v594
    %v1878 = vunpack.c.h.b16 %v594
    %v1879 = vunpack.c.l.b16 %v595
    %v1880 = vunpack.c.h.b16 %v595
    %v1881 = vunpack.c.l.b16 %v596
    %v1882 = vunpack.c.h.b16 %v596
    %v1883 = vunpack.c.l.b16 %v597
    %v1884 = vunpack.c.h.b16 %v597
    %v1885 = vunpack.c.l.b16 %v598
    %v1886 = vunpack.c.h.b16 %v598
    %v1887 = vunpack.c.l.b16 %v599
    %v1888 = vunpack.c.h.b16 %v599
    %v1889 = vunpack.c.l.b16 %v600
    %v1890 = vunpack.c.h.b16 %v600
    %v1891 = vunpack.c.l.b16 %v601
    %v1892 = vunpack.c.h.b16 %v601
    %v1893 = vunpack.c.l.b16 %v602
    %v1894 = vunpack.c.h.b16 %v602
    %v1895 = vunpack.c.l.b16 %v603
    %v1896 = vunpack.c.h.b16 %v603
    %v1897 = vunpack.c.l.b16 %v604
    %v1898 = vunpack.c.h.b16 %v604
    %v1899 = vunpack.c.l.b16 %v605
    %v1900 = vunpack.c.h.b16 %v605
    %v1901 = vunpack.c.l.b16 %v606
    %v1902 = vunpack.c.h.b16 %v606
    %v1903 = vunpack.c.l.b16 %v607
    %v1904 = vunpack.c.h.b16 %v607
    %v1905 = vunpack.c.l.b16 %v608
    %v1906 = vunpack.c.h.b16 %v608
    %v1907 = vunpack.c.l.b16 %v609
    %v1908 = vunpack.c.h.b16 %v609
    %v1909 = vunpack.c.l.b16 %v610
    %v1910 = vunpack.c.h.b16 %v610
    %v1911 = vunpack.c.l.b16 %v611
    %v1912 = vunpack.c.h.b16 %v611
    %v1913 = vunpack.c.l.b16 %v612
    %v1914 = vunpack.c.h.b16 %v612
    %v1915 = vunpack.c.l.b16 %v613
    %v1916 = vunpack.c.h.b16 %v613
    %v1917 = vunpack.c.l.b16 %v614
    %v1918 = vunpack.c.h.b16 %v614
    %v1919 = vunpack.c.l.b16 %v615
    %v1920 = vunpack.c.h.b16 %v615
    %v1921 = vunpack.c.l.b16 %v616
    %v1922 = vunpack.c.h.b16 %v616
    %v1923 = vunpack.c.l.b16 %v617
    %v1924 = vunpack.c.h.b16 %v617
    %v1925 = vunpack.c.l.b16 %v618
    %v1926 = vunpack.c.h.b16 %v618
    %v1927 = vunpack.c.l.b16 %v619
    %v1928 = vunpack.c.h.b16 %v619
    %v1929 = vunpack.c.l.b16 %v620
    %v1930 = vunpack.c.h.b16 %v620
    %v1931 = vunpack.c.l.b16 %v621
    %v1932 = vunpack.c.h.b16 %v621
    %v1933 = vunpack.c.l.b16 %v622
    %v1934 = vunpack.c.h.b16 %v622
    %v1935 = vunpack.c.l.b16 %v623
    %v1936 = vunpack.c.h.b16 %v623
    %v1937 = vunpack.c.l.b16 %v624
    %v1938 = vunpack.c.h.b16 %v624
    %v1939 = vunpack.c.l.b16 %v625
    %v1940 = vunpack.c.h.b16 %v625
    %v1941 = vunpack.c.l.b16 %v626
    %v1942 = vunpack.c.h.b16 %v626
    %v1943 = vunpack.c.l.b16 %v627
    %v1944 = vunpack.c.h.b16 %v627
    %v1945 = vunpack.c.l.b16 %v628
    %v1946 = vunpack.c.h.b16 %v628
    %v1947 = vunpack.c.l.b16 %v629
    %v1948 = vunpack.c.h.b16 %v629
    %v1949 = vunpack.c.l.b16 %v630
    %v1950 = vunpack.c.h.b16 %v630
    %v1951 = vunpack.c.l.b16 %v631
    %v1952 = vunpack.c.h.b16 %v631
    %v1953 = vunpack.c.l.b16 %v632
    %v1954 = vunpack.c.h.b16 %v632
    %v1955 = vunpack.c.l.b16 %v633
    %v1956 = vunpack.c.h.b16 %v633
    %v1957 = vunpack.c.l.b16 %v634
    %v1958 = vunpack.c.h.b16 %v634
    %v1959 = vunpack.c.l.b16 %v635
    %v1960 = vunpack.c.h.b16 %v635
    %v1961 = vunpack.c.l.b16 %v636
    %v1962 = vunpack.c.h.b16 %v636
    %v1963 = vunpack.c.l.b16 %v637
    %v1964 = vunpack.c.h.b16 %v637
    %v1965 = vunpack.c.l.b16 %v638
    %v1966 = vunpack.c.h.b16 %v638
    %v1967 = vunpack.c.l.b16 %v639
    %v1968 = vunpack.c.h.b16 %v639
    %v1969 = vunpack.c.l.b16 %v640
    %v1970 = vunpack.c.h.b16 %v640
    %v1971 = vunpack.c.l.b16 %v641
    %v1972 = vunpack.c.h.b16 %v641
    %v1973 = vunpack.c.l.b16 %v642
    %v1974 = vunpack.c.h.b16 %v642
    %v1975 = vunpack.c.l.b16 %v643
    %v1976 = vunpack.c.h.b16 %v643
    %v1977 = vunpack.c.l.b16 %v644
    %v1978 = vunpack.c.h.b16 %v644
    %v1979 = vunpack.c.l.b16 %v645
    %v1980 = vunpack.c.h.b16 %v645
    %v1981 = vunpack.c.l.b16 %v646
    %v1982 = vunpack.c.h.b16 %v646
    %v1983 = vunpack.c.l.b16 %v647
    %v1984 = vunpack.c.h.b16 %v647
    %v1985 = vunpack.c.l.b16 %v648
    %v1986 = vunpack.c.h.b16 %v648
    %v1987 = vunpack.c.l.b16 %v649
    %v1988 = vunpack.c.h.b16 %v649
    %v1989 = vunpack.c.l.b16 %v650
    %v1990 = vunpack.c.h.b16 %v650
    %v1991 = vunpack.c.l.b16 %v651
    %v1992 = vunpack.c.h.b16 %v651
    %v1993 = vunpack.c.l.b16 %v652
    %v1994 = vunpack.c.h.b16 %v652
    %v1995 = vunpack.c.l.b16 %v653
    %v1996 = vunpack.c.h.b16 %v653
    %v1997 = vunpack.c.l.b16 %v654
    %v1998 = vunpack.c.h.b16 %v654
    %v1999 = vunpack.c.l.b16 %v655
    %v2000 = vunpack.c.h.b16 %v655
    %v2001 = vunpack.c.l.b16 %v656
    %v2002 = vunpack.c.h.b16 %v656
    %v2003 = vunpack.c.l.b16 %v657
    %v2004 = vunpack.c.h.b16 %v657
    %v2005 = vunpack.c.l.b16 %v658
    %v2006 = vunpack.c.h.b16 %v658
    %v2007 = vunpack.c.l.b16 %v659
    %v2008 = vunpack.c.h.b16 %v659
    %v2009 = vunpack.c.l.b16 %v660
    %v2010 = vunpack.c.h.b16 %v660
    %v2011 = vunpack.c.l.b16 %v661
    %v2012 = vunpack.c.h.b16 %v661
    %v2013 = vunpack.c.l.b16 %v662
    %v2014 = vunpack.c.h.b16 %v662
    %v2015 = vunpack.c.l.b16 %v663
    %v2016 = vunpack.c.h.b16 %v663
    %v2017 = vunpack.c.l.b16 %v664
    %v2018 = vunpack.c.h.b16 %v664
    %v2019 = vunpack.c.l.b16 %v665
    %v2020 = vunpack.c.h.b16 %v665
    %v2021 = vunpack.c.l.b16 %v666
    %v2022 = vunpack.c.h.b16 %v666
    %v2023 = vunpack.c.l.b16 %v667
    %v2024 = vunpack.c.h.b16 %v667
    %v2025 = vunpack.c.l.b16 %v668
    %v2026 = vunpack.c.h.b16 %v668
    %v2027 = vunpack.c.l.b16 %v669
    %v2028 = vunpack.c.h.b16 %v669
    %v2029 = vunpack.c.l.b16 %v670
    %v2030 = vunpack.c.h.b16 %v670
    %v2031 = vunpack.c.l.b16 %v671
    %v2032 = vunpack.c.h.b16 %v671
    %v2033 = vunpack.c.l.b16 %v672
    %v2034 = vunpack.c.h.b16 %v672
    %v2035 = vunpack.c.l.b16 %v673
    %v2036 = vunpack.c.h.b16 %v673
    %v2037 = vunpack.c.l.b16 %v674
    %v2038 = vunpack.c.h.b16 %v674
    %v2039 = vunpack.c.l.b16 %v675
    %v2040 = vunpack.c.h.b16 %v675
    %v2041 = vunpack.c.l.b16 %v676
    %v2042 = vunpack.c.h.b16 %v676
    %v2043 = vunpack.c.l.b16 %v677
    %v2044 = vunpack.c.h.b16 %v677
    %v2045 = vunpack.c.l.b16 %v678
    %v2046 = vunpack.c.h.b16 %v678
    %v2047 = vunpack.c.l.b16 %v679
    %v2048 = vunpack.c.h.b16 %v679
    %v2049 = vunpack.c.l.b16 %v680
    %v2050 = vunpack.c.h.b16 %v680
    %v2051 = vunpack.c.l.b16 %v681
    %v2052 = vunpack.c.h.b16 %v681
    %v2053 = vunpack.c.l.b16 %v682
    %v2054 = vunpack.c.h.b16 %v682
    %v2055 = vunpack.c.l.b16 %v683
    %v2056 = vunpack.c.h.b16 %v683
    %v2057 = vunpack.c.l.b16 %v684
    %v2058 = vunpack.c.h.b16 %v684
    %v2059 = vunpack.c.l.b16 %v685
    %v2060 = vunpack.c.h.b16 %v685
    %v2061 = vunpack.c.l.b16 %v686
    %v2062 = vunpack.c.h.b16 %v686
    %v2063 = vunpack.c.l.b16 %v687
    %v2064 = vunpack.c.h.b16 %v687
    %v2065 = vunpack.c.l.b16 %v688
    %v2066 = vunpack.c.h.b16 %v688
    %v2067 = vunpack.c.l.b16 %v689
    %v2068 = vunpack.c.h.b16 %v689
    %v2069 = vunpack.c.l.b16 %v690
    %v2070 = vunpack.c.h.b16 %v690
    %v2071 = vunpack.c.l.b16 %v691
    %v2072 = vunpack.c.h.b16 %v691
    %v2073 = vunpack.c.l.b16 %v692
    %v2074 = vunpack.c.h.b16 %v692
    %v2075 = vunpack.c.l.b16 %v693
    %v2076 = vunpack.c.h.b16 %v693
    %v2077 = vunpack.c.l.b16 %v694
    %v2078 = vunpack.c.h.b16 %v694
    %v2079 = vunpack.c.l.b16 %v695
    %v2080 = vunpack.c.h.b16 %v695
    %v2081 = vunpack.c.l.b16 %v696
    %v2082 = vunpack.c.h.b16 %v696
    %v2083 = vunpack.c.l.b16 %v697
    %v2084 = vunpack.c.h.b16 %v697
    %v2085 = vunpack.c.l.b16 %v698
    %v2086 = vunpack.c.h.b16 %v698
    %v2087 = vunpack.c.l.b16 %v699
    %v2088 = vunpack.c.h.b16 %v699
    %v2089 = vunpack.c.l.b16 %v700
    %v2090 = vunpack.c.h.b16 %v700
    %v2091 = vunpack.c.l.b16 %v701
    %v2092 = vunpack.c.h.b16 %v701
    %v2093 = vunpack.c.l.b16 %v702
    %v2094 = vunpack.c.h.b16 %v702
    %v2095 = vunpack.c.l.b16 %v703
    %v2096 = vunpack.c.h.b16 %v703
    %v2097 = vunpack.c.l.b16 %v704
    %v2098 = vunpack.c.h.b16 %v704
    %v2099 = vunpack.c.l.b16 %v705
    %v2100 = vunpack.c.h.b16 %v705
    %v2101 = vunpack.c.l.b16 %v706
    %v2102 = vunpack.c.h.b16 %v706
    %v2103 = vunpack.c.l.b16 %v707
    %v2104 = vunpack.c.h.b16 %v707
    %v2105 = vunpack.c.l.b16 %v708
    %v2106 = vunpack.c.h.b16 %v708
    %v2107 = vunpack.c.l.b16 %v709
    %v2108 = vunpack.c.h.b16 %v709
    %v2109 = vunpack.c.l.b16 %v710
    %v2110 = vunpack.c.h.b16 %v710
    %v2111 = vunpack.c.l.b16 %v711
    %v2112 = vunpack.c.h.b16 %v711
    %v2113 = vunpack.c.l.b16 %v712
    %v2114 = vunpack.c.h.b16 %v712
    %v2115 = vunpack.c.l.b16 %v713
    %v2116 = vunpack.c.h.b16 %v713
    %v2117 = vunpack.c.l.b16 %v714
    %v2118 = vunpack.c.h.b16 %v714
    %v2119 = vunpack.c.l.b16 %v715
    %v2120 = vunpack.c.h.b16 %v715
    %v2121 = vunpack.c.l.b16 %v716
    %v2122 = vunpack.c.h.b16 %v716
    %v2123 = vunpack.c.l.b16 %v717
    %v2124 = vunpack.c.h.b16 %v717
    %v2125 = vunpack.c.l.b16 %v718
    %v2126 = vunpack.c.h.b16 %v718
    %v2127 = vunpack.c.l.b16 %v719
    %v2128 = vunpack.c.h.b16 %v719
    %v2129 = vunpack.c.l.b16 %v720
    %v2130 = vunpack.c.h.b16 %v720
    %v2131 = vunpack.c.l.b16 %v721
    %v2132 = vunpack.c.h.b16 %v721
    %v2133 = vunpack.c.l.b16 %v722
    %v2134 = vunpack.c.h.b16 %v722
    %v2135 = vunpack.c.l.b16 %v723
    %v2136 = vunpack.c.h.b16 %v723
    %v2137 = vunpack.c.l.b16 %v724
    %v2138 = vunpack.c.h.b16 %v724
    %v2139 = vunpack.c.l.b16 %v725
    %v2140 = vunpack.c.h.b16 %v725
    %v2141 = vunpack.c.l.b16 %v726
    %v2142 = vunpack.c.h.b16 %v726
    %v2143 = vunpack.c.l.b16 %v727
    %v2144 = vunpack.c.h.b16 %v727
    %v2145 = vunpack.c.l.b16 %v728
    %v2146 = vunpack.c.h.b16 %v728
    %v2147 = vunpack.c.l.b16 %v729
    %v2148 = vunpack.c.h.b16 %v729
    %v2149 = vunpack.c.l.b16 %v730
    %v2150 = vunpack.c.h.b16 %v730
    %v2151 = vunpack.c.l.b16 %v731
    %v2152 = vunpack.c.h.b16 %v731
    %v2153 = vunpack.c.l.b16 %v732
    %v2154 = vunpack.c.h.b16 %v732
    %v2155 = vpack.c.b16 %v1267, %v1259
    %v2156 = vpack.c.b16 %v1268, %v1260
    %v2157 = vpack.c.b16 %v1269, %v1261
    %v2158 = vpack.c.b16 %v1270, %v1262
    %v2159 = vpack.c.b16 %v1271, %v1263
    %v2160 = vpack.c.b16 %v1272, %v1264
    %v2161 = vpack.c.b16 %v1273, %v1265
    %v2162 = vpack.c.b16 %v1274, %v1266
    %v2163 = vpack.c.b16 %v1283, %v1275
    %v2164 = vpack.c.b16 %v1284, %v1276
    %v2165 = vpack.c.b16 %v1285, %v1277
    %v2166 = vpack.c.b16 %v1286, %v1278
    %v2167 = vpack.c.b16 %v1287, %v1279
    %v2168 = vpack.c.b16 %v1288, %v1280
    %v2169 = vpack.c.b16 %v1289, %v1281
    %v2170 = vpack.c.b16 %v1290, %v1282
    %v2171 = vpack.c.b16 %v1299, %v1291
    %v2172 = vpack.c.b16 %v1300, %v1292
    %v2173 = vpack.c.b16 %v1301, %v1293
    %v2174 = vpack.c.b16 %v1302, %v1294
    %v2175 = vpack.c.b16 %v1303, %v1295
    %v2176 = vpack.c.b16 %v1304, %v1296
    %v2177 = vpack.c.b16 %v1305, %v1297
    %v2178 = vpack.c.b16 %v1306, %v1298
    %v2179 = vpack.c.b16 %v1315, %v1307
    %v2180 = vpack.c.b16 %v1316, %v1308
    %v2181 = vpack.c.b16 %v1317, %v1309
    %v2182 = vpack.c.b16 %v1318, %v1310
    %v2183 = vpack.c.b16 %v1319, %v1311
    %v2184 = vpack.c.b16 %v1320, %v1312
    %v2185 = vpack.c.b16 %v1321, %v1313
    %v2186 = vpack.c.b16 %v1322, %v1314
    %v2187 = vpack.c.b16 %v1331, %v1323
    %v2188 = vpack.c.b16 %v1332, %v1324
    %v2189 = vpack.c.b16 %v1333, %v1325
    %v2190 = vpack.c.b16 %v1334, %v1326
    %v2191 = vpack.c.b16 %v1335, %v1327
    %v2192 = vpack.c.b16 %v1336, %v1328
    %v2193 = vpack.c.b16 %v1337, %v1329
    %v2194 = vpack.c.b16 %v1338, %v1330
    %v2195 = vpack.c.b16 %v1347, %v1339
    %v2196 = vpack.c.b16 %v1348, %v1340
    %v2197 = vpack.c.b16 %v1349, %v1341
    %v2198 = vpack.c.b16 %v1350, %v1342
    %v2199 = vpack.c.b16 %v1351, %v1343
    %v2200 = vpack.c.b16 %v1352, %v1344
    %v2201 = vpack.c.b16 %v1353, %v1345
    %v2202 = vpack.c.b16 %v1354, %v1346
    %v2203 = vpack.c.b16 %v1363, %v1355
    %v2204 = vpack.c.b16 %v1364, %v1356
    %v2205 = vpack.c.b16 %v1365, %v1357
    %v2206 = vpack.c.b16 %v1366, %v1358
    %v2207 = vpack.c.b16 %v1367, %v1359
    %v2208 = vpack.c.b16 %v1368, %v1360
    %v2209 = vpack.c.b16 %v1369, %v1361
    %v2210 = vpack.c.b16 %v1370, %v1362
    %v2211 = vpack.c.b16 %v1379, %v1371
    %v2212 = vpack.c.b16 %v1380, %v1372
    %v2213 = vpack.c.b16 %v1381, %v1373
    %v2214 = vpack.c.b16 %v1382, %v1374
    %v2215 = vpack.c.b16 %v1383, %v1375
    %v2216 = vpack.c.b16 %v1384, %v1376
    %v2217 = vpack.c.b16 %v1385, %v1377
    %v2218 = vpack.c.b16 %v1386, %v1378
    %v2219 = vpack.c.b16 %v1395, %v1387
    %v2220 = vpack.c.b16 %v1396, %v1388
    %v2221 = vpack.c.b16 %v1397, %v1389
    %v2222 = vpack.c.b16 %v1398, %v1390
    %v2223 = vpack.c.b16 %v1399, %v1391
    %v2224 = vpack.c.b16 %v1400, %v1392
    %v2225 = vpack.c.b16 %v1401, %v1393
    %v2226 = vpack.c.b16 %v1402, %v1394
    %v2227 = vpack.c.b16 %v1411, %v1403
    %v2228 = vpack.c.b16 %v1412, %v1404
    %v2229 = vpack.c.b16 %v1413, %v1405
    %v2230 = vpack.c.b16 %v1414, %v1406
    %v2231 = vpack.c.b16 %v1415, %v1407
    %v2232 = vpack.c.b16 %v1416, %v1408
    %v2233 = vpack.c.b16 %v1417, %v1409
    %v2234 = vpack.c.b16 %v1418, %v1410
    %v2235 = vpack.c.b16 %v1427, %v1419
    %v2236 = vpack.c.b16 %v1428, %v1420
    %v2237 = vpack.c.b16 %v1429, %v1421
    %v2238 = vpack.c.b16 %v1430, %v1422
    %v2239 = vpack.c.b16 %v1431, %v1423
    %v2240 = vpack.c.b16 %v1432, %v1424
    %v2241 = vpack.c.b16 %v1433, %v1425
    %v2242 = vpack.c.b16 %v1434, %v1426
    %v2243 = vpack.c.b16 %v1443, %v1435
    %v2244 = vpack.c.b16 %v1444, %v1436
    %v2245 = vpack.c.b16 %v1445, %v1437
    %v2246 = vpack.c.b16 %v1446, %v1438
    %v2247 = vpack.c.b16 %v1447, %v1439
    %v2248 = vpack.c.b16 %v1448, %v1440
    %v2249 = vpack.c.b16 %v1449, %v1441
    %v2250 = vpack.c.b16 %v1450, %v1442
    %v2251 = vpack.c.b16 %v1459, %v1451
    %v2252 = vpack.c.b16 %v1460, %v1452
    %v2253 = vpack.c.b16 %v1461, %v1453
    %v2254 = vpack.c.b16 %v1462, %v1454
    %v2255 = vpack.c.b16 %v1463, %v1455
    %v2256 = vpack.c.b16 %v1464, %v1456
    %v2257 = vpack.c.b16 %v1465, %v1457
    %v2258 = vpack.c.b16 %v1466, %v1458
    %v2259 = vpack.c.b16 %v1475, %v1467
    %v2260 = vpack.c.b16 %v1476, %v1468
    %v2261 = vpack.c.b16 %v1477, %v1469
    %v2262 = vpack.c.b16 %v1478, %v1470
    %v2263 = vpack.c.b16 %v1479, %v1471
    %v2264 = vpack.c.b16 %v1480, %v1472
    %v2265 = vpack.c.b16 %v1481, %v1473
    %v2266 = vpack.c.b16 %v1482, %v1474
    %v2267 = vpack.c.b16 %v1491, %v1483
    %v2268 = vpack.c.b16 %v1492, %v1484
    %v2269 = vpack.c.b16 %v1493, %v1485
    %v2270 = vpack.c.b16 %v1494, %v1486
    %v2271 = vpack.c.b16 %v1495, %v1487
    %v2272 = vpack.c.b16 %v1496, %v1488
    %v2273 = vpack.c.b16 %v1497, %v1489
    %v2274 = vpack.c.b16 %v1498, %v1490
    %v2275 = vpack.c.b16 %v1507, %v1499
    %v2276 = vpack.c.b16 %v1508, %v1500
    %v2277 = vpack.c.b16 %v1509, %v1501
    %v2278 = vpack.c.b16 %v1510, %v1502
    %v2279 = vpack.c.b16 %v1511, %v1503
    %v2280 = vpack.c.b16 %v1512, %v1504
    %v2281 = vpack.c.b16 %v1513, %v1505
    %v2282 = vpack.c.b16 %v1514, %v1506
    %v2283 = vpack.c.b16 %v1523, %v1515
    %v2284 = vpack.c.b16 %v1524, %v1516
    %v2285 = vpack.c.b16 %v1525, %v1517
    %v2286 = vpack.c.b16 %v1526, %v1518
    %v2287 = vpack.c.b16 %v1527, %v1519
    %v2288 = vpack.c.b16 %v1528, %v1520
    %v2289 = vpack.c.b16 %v1529, %v1521
    %v2290 = vpack.c.b16 %v1530, %v1522
    %v2291 = vpack.c.b16 %v1539, %v1531
    %v2292 = vpack.c.b16 %v1540, %v1532
    %v2293 = vpack.c.b16 %v1541, %v1533
    %v2294 = vpack.c.b16 %v1542, %v1534
    %v2295 = vpack.c.b16 %v1543, %v1535
    %v2296 = vpack.c.b16 %v1544, %v1536
    %v2297 = vpack.c.b16 %v1545, %v1537
    %v2298 = vpack.c.b16 %v1546, %v1538
    %v2299 = vpack.c.b16 %v1555, %v1547
    %v2300 = vpack.c.b16 %v1556, %v1548
    %v2301 = vpack.c.b16 %v1557, %v1549
    %v2302 = vpack.c.b16 %v1558, %v1550
    %v2303 = vpack.c.b16 %v1559, %v1551
    %v2304 = vpack.c.b16 %v1560, %v1552
    %v2305 = vpack.c.b16 %v1561, %v1553
    %v2306 = vpack.c.b16 %v1562, %v1554
    %v2307 = vpack.c.b16 %v1571, %v1563
    %v2308 = vpack.c.b16 %v1572, %v1564
    %v2309 = vpack.c.b16 %v1573, %v1565
    %v2310 = vpack.c.b16 %v1574, %v1566
    %v2311 = vpack.c.b16 %v1575, %v1567
    %v2312 = vpack.c.b16 %v1576, %v1568
    %v2313 = vpack.c.b16 %v1577, %v1569
    %v2314 = vpack.c.b16 %v1578, %v1570
    %v2315 = vpack.c.b16 %v1587, %v1579
    %v2316 = vpack.c.b16 %v1588, %v1580
    %v2317 = vpack.c.b16 %v1589, %v1581
    %v2318 = vpack.c.b16 %v1590, %v1582
    %v2319 = vpack.c.b16 %v1591, %v1583
    %v2320 = vpack.c.b16 %v1592, %v1584
    %v2321 = vpack.c.b16 %v1593, %v1585
    %v2322 = vpack.c.b16 %v1594, %v1586
    %v2323 = vpack.c.b16 %v1603, %v1595
    %v2324 = vpack.c.b16 %v1604, %v1596
    %v2325 = vpack.c.b16 %v1605, %v1597
    %v2326 = vpack.c.b16 %v1606, %v1598
    %v2327 = vpack.c.b16 %v1607, %v1599
    %v2328 = vpack.c.b16 %v1608, %v1600
    %v2329 = vpack.c.b16 %v1609, %v1601
    %v2330 = vpack.c.b16 %v1610, %v1602
    %v2331 = vpack.c.b16 %v1619, %v1611
    %v2332 = vpack.c.b16 %v1620, %v1612
    %v2333 = vpack.c.b16 %v1621, %v1613
    %v2334 = vpack.c.b16 %v1622, %v1614
    %v2335 = vpack.c.b16 %v1623, %v1615
    %v2336 = vpack.c.b16 %v1624, %v1616
    %v2337 = vpack.c.b16 %v1625, %v1617
    %v2338 = vpack.c.b16 %v1626, %v1618
    %v2339 = vpack.c.b16 %v1635, %v1627
    %v2340 = vpack.c.b16 %v1636, %v1628
    %v2341 = vpack.c.b16 %v1637, %v1629
    %v2342 = vpack.c.b16 %v1638, %v1630
    %v2343 = vpack.c.b16 %v1639, %v1631
    %v2344 = vpack.c.b16 %v1640, %v1632
    %v2345 = vpack.c.b16 %v1641, %v1633
    %v2346 = vpack.c.b16 %v1642, %v1634
    %v2347 = vpack.c.b16 %v1651, %v1643
    %v2348 = vpack.c.b16 %v1652, %v1644
    %v2349 = vpack.c.b16 %v1653, %v1645
    %v2350 = vpack.c.b16 %v1654, %v1646
    %v2351 = vpack.c.b16 %v1655, %v1647
    %v2352 = vpack.c.b16 %v1656, %v1648
    %v2353 = vpack.c.b16 %v1657, %v1649
    %v2354 = vpack.c.b16 %v1658, %v1650
    %v2355 = vpack.c.b16 %v1667, %v1659
    %v2356 = vpack.c.b16 %v1668, %v1660
    %v2357 = vpack.c.b16 %v1669, %v1661
    %v2358 = vpack.c.b16 %v1670, %v1662
    %v2359 = vpack.c.b16 %v1671, %v1663
    %v2360 = vpack.c.b16 %v1672, %v1664
    %v2361 = vpack.c.b16 %v1673, %v1665
    %v2362 = vpack.c.b16 %v1674, %v1666
    %v2363 = vpack.c.b16 %v1683, %v1675
    %v2364 = vpack.c.b16 %v1684, %v1676
    %v2365 = vpack.c.b16 %v1685, %v1677
    %v2366 = vpack.c.b16 %v1686, %v1678
    %v2367 = vpack.c.b16 %v1687, %v1679
    %v2368 = vpack.c.b16 %v1688, %v1680
    %v2369 = vpack.c.b16 %v1689, %v1681
    %v2370 = vpack.c.b16 %v1690, %v1682
    %v2371 = vpack.c.b16 %v1699, %v1691
    %v2372 = vpack.c.b16 %v1700, %v1692
    %v2373 = vpack.c.b16 %v1701, %v1693
    %v2374 = vpack.c.b16 %v1702, %v1694
    %v2375 = vpack.c.b16 %v1703, %v1695
    %v2376 = vpack.c.b16 %v1704, %v1696
    %v2377 = vpack.c.b16 %v1705, %v1697
    %v2378 = vpack.c.b16 %v1706, %v1698
    %v2379 = vpack.c.b16 %v1715, %v1707
    %v2380 = vpack.c.b16 %v1716, %v1708
    %v2381 = vpack.c.b16 %v1717, %v1709
    %v2382 = vpack.c.b16 %v1718, %v1710
    %v2383 = vpack.c.b16 %v1719, %v1711
    %v2384 = vpack.c.b16 %v1720, %v1712
    %v2385 = vpack.c.b16 %v1721, %v1713
    %v2386 = vpack.c.b16 %v1722, %v1714
    %v2387 = vpack.c.b16 %v1731, %v1723
    %v2388 = vpack.c.b16 %v1732, %v1724
    %v2389 = vpack.c.b16 %v1733, %v1725
    %v2390 = vpack.c.b16 %v1734, %v1726
    %v2391 = vpack.c.b16 %v1735, %v1727
    %v2392 = vpack.c.b16 %v1736, %v1728
    %v2393 = vpack.c.b16 %v1737, %v1729
    %v2394 = vpack.c.b16 %v1738, %v1730
    %v2395 = vpack.c.b16 %v1747, %v1739
    %v2396 = vpack.c.b16 %v1748, %v1740
    %v2397 = vpack.c.b16 %v1749, %v1741
    %v2398 = vpack.c.b16 %v1750, %v1742
    %v2399 = vpack.c.b16 %v1751, %v1743
    %v2400 = vpack.c.b16 %v1752, %v1744
    %v2401 = vpack.c.b16 %v1753, %v1745
    %v2402 = vpack.c.b16 %v1754, %v1746
    %v2403 = vpack.c.b16 %v1763, %v1755
    %v2404 = vpack.c.b16 %v1764, %v1756
    %v2405 = vpack.c.b16 %v1765, %v1757
    %v2406 = vpack.c.b16 %v1766, %v1758
    %v2407 = vpack.c.b16 %v1767, %v1759
    %v2408 = vpack.c.b16 %v1768, %v1760
    %v2409 = vpack.c.b16 %v1769, %v1761
    %v2410 = vpack.c.b16 %v1770, %v1762
    %v2411 = vpack.c.b16 %v1779, %v1771
    %v2412 = vpack.c.b16 %v1780, %v1772
    %v2413 = vpack.c.b16 %v1781, %v1773
    %v2414 = vpack.c.b16 %v1782, %v1774
    %v2415 = vpack.c.b16 %v1783, %v1775
    %v2416 = vpack.c.b16 %v1784, %v1776
    %v2417 = vpack.c.b16 %v1785, %v1777
    %v2418 = vpack.c.b16 %v1786, %v1778
    %v2419 = vpack.c.b16 %v1795, %v1787
    %v2420 = vpack.c.b16 %v1796, %v1788
    %v2421 = vpack.c.b16 %v1797, %v1789
    %v2422 = vpack.c.b16 %v1798, %v1790
    %v2423 = vpack.c.b16 %v1799, %v1791
    %v2424 = vpack.c.b16 %v1800, %v1792
    %v2425 = vpack.c.b16 %v1801, %v1793
    %v2426 = vpack.c.b16 %v1802, %v1794
    %v2427 = vpack.c.b16 %v1811, %v1803
    %v2428 = vpack.c.b16 %v1812, %v1804
    %v2429 = vpack.c.b16 %v1813, %v1805
    %v2430 = vpack.c.b16 %v1814, %v1806
    %v2431 = vpack.c.b16 %v1815, %v1807
    %v2432 = vpack.c.b16 %v1816, %v1808
    %v2433 = vpack.c.b16 %v1817, %v1809
    %v2434 = vpack.c.b16 %v1818, %v1810
    %v2435 = vpack.c.b16 %v1827, %v1819
    %v2436 = vpack.c.b16 %v1828, %v1820
    %v2437 = vpack.c.b16 %v1829, %v1821
    %v2438 = vpack.c.b16 %v1830, %v1822
    %v2439 = vpack.c.b16 %v1831, %v1823
    %v2440 = vpack.c.b16 %v1832, %v1824
    %v2441 = vpack.c.b16 %v1833, %v1825
    %v2442 = vpack.c.b16 %v1834, %v1826
    %v2443 = vpack.c.b16 %v1843, %v1835
    %v2444 = vpack.c.b16 %v1844, %v1836
    %v2445 = vpack.c.b16 %v1845, %v1837
    %v2446 = vpack.c.b16 %v1846, %v1838
    %v2447 = vpack.c.b16 %v1847, %v1839
    %v2448 = vpack.c.b16 %v1848, %v1840
    %v2449 = vpack.c.b16 %v1849, %v1841
    %v2450 = vpack.c.b16 %v1850, %v1842
    %v2451 = vpack.c.b16 %v1859, %v1851
    %v2452 = vpack.c.b16 %v1860, %v1852
    %v2453 = vpack.c.b16 %v1861, %v1853
    %v2454 = vpack.c.b16 %v1862, %v1854
    %v2455 = vpack.c.b16 %v1863, %v1855
    %v2456 = vpack.c.b16 %v1864, %v1856
    %v2457 = vpack.c.b16 %v1865, %v1857
    %v2458 = vpack.c.b16 %v1866, %v1858
    %v2459 = vpack.c.b16 %v1875, %v1867
    %v2460 = vpack.c.b16 %v1876, %v1868
    %v2461 = vpack.c.b16 %v1877, %v1869
    %v2462 = vpack.c.b16 %v1878, %v1870
    %v2463 = vpack.c.b16 %v1879, %v1871
    %v2464 = vpack.c.b16 %v1880, %v1872
    %v2465 = vpack.c.b16 %v1881, %v1873
    %v2466 = vpack.c.b16 %v1882, %v1874
    %v2467 = vpack.c.b16 %v1891, %v1883
    %v2468 = vpack.c.b16 %v1892, %v1884
    %v2469 = vpack.c.b16 %v1893, %v1885
    %v2470 = vpack.c.b16 %v1894, %v1886
    %v2471 = vpack.c.b16 %v1895, %v1887
    %v2472 = vpack.c.b16 %v1896, %v1888
    %v2473 = vpack.c.b16 %v1897, %v1889
    %v2474 = vpack.c.b16 %v1898, %v1890
    %v2475 = vpack.c.b16 %v1907, %v1899
    %v2476 = vpack.c.b16 %v1908, %v1900
    %v2477 = vpack.c.b16 %v1909, %v1901
    %v2478 = vpack.c.b16 %v1910, %v1902
    %v2479 = vpack.c.b16 %v1911, %v1903
    %v2480 = vpack.c.b16 %v1912, %v1904
    %v2481 = vpack.c.b16 %v1913, %v1905
    %v2482 = vpack.c.b16 %v1914, %v1906
    %v2483 = vpack.c.b16 %v1923, %v1915
    %v2484 = vpack.c.b16 %v1924, %v1916
    %v2485 = vpack.c.b16 %v1925, %v1917
    %v2486 = vpack.c.b16 %v1926, %v1918
    %v2487 = vpack.c.b16 %v1927, %v1919
    %v2488 = vpack.c.b16 %v1928, %v1920
    %v2489 = vpack.c.b16 %v1929, %v1921
    %v2490 = vpack.c.b16 %v1930, %v1922
    %v2491 = vpack.c.b16 %v1939, %v1931
    %v2492 = vpack.c.b16 %v1940, %v1932
    %v2493 = vpack.c.b16 %v1941, %v1933
    %v2494 = vpack.c.b16 %v1942, %v1934
    %v2495 = vpack.c.b16 %v1943, %v1935
    %v2496 = vpack.c.b16 %v1944, %v1936
    %v2497 = vpack.c.b16 %v1945, %v1937
    %v2498 = vpack.c.b16 %v1946, %v1938
    %v2499 = vpack.c.b16 %v1955, %v1947
    %v2500 = vpack.c.b16 %v1956, %v1948
    %v2501 = vpack.c.b16 %v1957, %v1949
    %v2502 = vpack.c.b16 %v1958, %v1950
    %v2503 = vpack.c.b16 %v1959, %v1951
    %v2504 = vpack.c.b16 %v1960, %v1952
    %v2505 = vpack.c.b16 %v1961, %v1953
    %v2506 = vpack.c.b16 %v1962, %v1954
    %v2507 = vpack.c.b16 %v1971, %v1963
    %v2508 = vpack.c.b16 %v1972, %v1964
    %v2509 = vpack.c.b16 %v1973, %v1965
    %v2510 = vpack.c.b16 %v1974, %v1966
    %v2511 = vpack.c.b16 %v1975, %v1967
    %v2512 = vpack.c.b16 %v1976, %v1968
    %v2513 = vpack.c.b16 %v1977, %v1969
    %v2514 = vpack.c.b16 %v1978, %v1970
    %v2515 = vpack.c.b16 %v1987, %v1979
    %v2516 = vpack.c.b16 %v1988, %v1980
    %v2517 = vpack.c.b16 %v1989, %v1981
    %v2518 = vpack.c.b16 %v1990, %v1982
    %v2519 = vpack.c.b16 %v1991, %v1983
    %v2520 = vpack.c.b16 %v1992, %v1984
    %v2521 = vpack.c.b16 %v1993, %v1985
    %v2522 = vpack.c.b16 %v1994, %v1986
    %v2523 = vpack.c.b16 %v2003, %v1995
    %v2524 = vpack.c.b16 %v2004, %v1996
    %v2525 = vpack.c.b16 %v2005, %v1997
    %v2526 = vpack.c.b16 %v2006, %v1998
    %v2527 = vpack.c.b16 %v2007, %v1999
    %v2528 = vpack.c.b16 %v2008, %v2000
    %v2529 = vpack.c.b16 %v2009, %v2001
    %v2530 = vpack.c.b16 %v2010, %v2002
    %v2531 = vpack.c.b16 %v2019, %v2011
    %v2532 = vpack.c.b16 %v2020, %v2012
    %v2533 = vpack.c.b16 %v2021, %v2013
    %v2534 = vpack.c.b16 %v2022, %v2014
    %v2535 = vpack.c.b16 %v2023, %v2015
    %v2536 = vpack.c.b16 %v2024, %v2016
    %v2537 = vpack.c.b16 %v2025, %v2017
    %v2538 = vpack.c.b16 %v2026, %v2018
    %v2539 = vpack.c.b16 %v2035, %v2027
    %v2540 = vpack.c.b16 %v2036, %v2028
    %v2541 = vpack.c.b16 %v2037, %v2029
    %v2542 = vpack.c.b16 %v2038, %v2030
    %v2543 = vpack.c.b16 %v2039, %v2031
    %v2544 = vpack.c.b16 %v2040, %v2032
    %v2545 = vpack.c.b16 %v2041, %v2033
    %v2546 = vpack.c.b16 %v2042, %v2034
    %v2547 = vpack.c.b16 %v2051, %v2043
    %v2548 = vpack.c.b16 %v2052, %v2044
    %v2549 = vpack.c.b16 %v2053, %v2045
    %v2550 = vpack.c.b16 %v2054, %v2046
    %v2551 = vpack.c.b16 %v2055, %v2047
    %v2552 = vpack.c.b16 %v2056, %v2048
    %v2553 = vpack.c.b16 %v2057, %v2049
    %v2554 = vpack.c.b16 %v2058, %v2050
    %v2555 = vpack.c.b16 %v2067, %v2059
    %v2556 = vpack.c.b16 %v2068, %v2060
    %v2557 = vpack.c.b16 %v2069, %v2061
    %v2558 = vpack.c.b16 %v2070, %v2062
    %v2559 = vpack.c.b16 %v2071, %v2063
    %v2560 = vpack.c.b16 %v2072, %v2064
    %v2561 = vpack.c.b16 %v2073, %v2065
    %v2562 = vpack.c.b16 %v2074, %v2066
    %v2563 = vpack.c.b16 %v2083, %v2075
    %v2564 = vpack.c.b16 %v2084, %v2076
    %v2565 = vpack.c.b16 %v2085, %v2077
    %v2566 = vpack.c.b16 %v2086, %v2078
    %v2567 = vpack.c.b16 %v2087, %v2079
    %v2568 = vpack.c.b16 %v2088, %v2080
    %v2569 = vpack.c.b16 %v2089, %v2081
    %v2570 = vpack.c.b16 %v2090, %v2082
    %v2571 = vpack.c.b16 %v2099, %v2091
    %v2572 = vpack.c.b16 %v2100, %v2092
    %v2573 = vpack.c.b16 %v2101, %v2093
    %v2574 = vpack.c.b16 %v2102, %v2094
    %v2575 = vpack.c.b16 %v2103, %v2095
    %v2576 = vpack.c.b16 %v2104, %v2096
    %v2577 = vpack.c.b16 %v2105, %v2097
    %v2578 = vpack.c.b16 %v2106, %v2098
    %v2579 = vpack.c.b16 %v2115, %v2107
    %v2580 = vpack.c.b16 %v2116, %v2108
    %v2581 = vpack.c.b16 %v2117, %v2109
    %v2582 = vpack.c.b16 %v2118, %v2110
    %v2583 = vpack.c.b16 %v2119, %v2111
    %v2584 = vpack.c.b16 %v2120, %v2112
    %v2585 = vpack.c.b16 %v2121, %v2113
    %v2586 = vpack.c.b16 %v2122, %v2114
    %v2587 = vpack.c.b16 %v2131, %v2123
    %v2588 = vpack.c.b16 %v2132, %v2124
    %v2589 = vpack.c.b16 %v2133, %v2125
    %v2590 = vpack.c.b16 %v2134, %v2126
    %v2591 = vpack.c.b16 %v2135, %v2127
    %v2592 = vpack.c.b16 %v2136, %v2128
    %v2593 = vpack.c.b16 %v2137, %v2129
    %v2594 = vpack.c.b16 %v2138, %v2130
    %v2595 = vpack.c.b16 %v2147, %v2139
    %v2596 = vpack.c.b16 %v2148, %v2140
    %v2597 = vpack.c.b16 %v2149, %v2141
    %v2598 = vpack.c.b16 %v2150, %v2142
    %v2599 = vpack.c.b16 %v2151, %v2143
    %v2600 = vpack.c.b16 %v2152, %v2144
    %v2601 = vpack.c.b16 %v2153, %v2145
    %v2602 = vpack.c.b16 %v2154, %v2146
    %3051 = vmatprep.subr.bf16.mxu0 %v2156
    %3052 = vmatpush1.bf16.msra.mxu0 %v2155
    %3053 = vmatprep.subr.bf16.mxu0 %v2164
    %3054 = vmatpush1.bf16.msra.mxu0 %v2163
    %3055 = vmatprep.subr.bf16.mxu0 %v2172
    %3056 = vmatpush1.bf16.msra.mxu0 %v2171
    %3057 = vmatprep.subr.bf16.mxu0 %v2180
    %3058 = vmatpush1.bf16.msra.mxu0 %v2179
    %3059 = vmatprep.subr.bf16.mxu0 %v2188
    %3060 = vmatpush1.bf16.msra.mxu0 %v2187
    %3061 = vmatprep.subr.bf16.mxu0 %v2196
    %3062 = vmatpush1.bf16.msra.mxu0 %v2195
    %3063 = vmatprep.subr.bf16.mxu0 %v2204
    %3064 = vmatpush1.bf16.msra.mxu0 %v2203
    %3065 = vmatprep.subr.bf16.mxu0 %v2212
    %3066 = vmatpush1.bf16.msra.mxu0 %v2211
    %3067 = vmatprep.subr.bf16.mxu0 %v2220
    %3068 = vmatpush1.bf16.msra.mxu0 %v2219
    %3069 = vmatprep.subr.bf16.mxu0 %v2228
    %3070 = vmatpush1.bf16.msra.mxu0 %v2227
    %3071 = vmatprep.subr.bf16.mxu0 %v2236
    %3072 = vmatpush1.bf16.msra.mxu0 %v2235
    %3073 = vmatprep.subr.bf16.mxu0 %v2244
    %3074 = vmatpush1.bf16.msra.mxu0 %v2243
    %3075 = vmatprep.subr.bf16.mxu0 %v2252
    %3076 = vmatpush1.bf16.msra.mxu0 %v2251
    %3077 = vmatprep.subr.bf16.mxu0 %v2260
    %3078 = vmatpush1.bf16.msra.mxu0 %v2259
    %3079 = vmatprep.subr.bf16.mxu0 %v2268
    %3080 = vmatpush1.bf16.msra.mxu0 %v2267
    %3081 = vmatprep.subr.bf16.mxu0 %v2276
    %3082 = vmatpush1.bf16.msra.mxu0 %v2275
    %3083 = vmatprep.mubr.bf16.mxu0 %v798
    %3084 = vmatmul.mubr.bf16.gmra.mrb[0].mxu0 %v797
    %v3085 = vpop.f32.mrb[0].mxu0
    %v3086 = vadd.f32 %v738, %v3085
    %v3087 = vpop.f32.mrb[0].mxu0
    %v3088 = vadd.f32 %v742, %v3087
    %v3089 = vpop.f32.mrb[0].mxu0
    %v3090 = vadd.f32 %v738, %v3089
    %v3091 = vpop.f32.mrb[0].mxu0
    %v3092 = vadd.f32 %v742, %v3091
    %3093 = vdwg.mxu0
    %3094 = vmatprep.subr.bf16.mxu0 %v2284
    %3095 = vmatpush1.bf16.msra.mxu0 %v2283
    %3096 = vmatprep.subr.bf16.mxu0 %v2292
    %3097 = vmatpush1.bf16.msra.mxu0 %v2291
    %3098 = vmatprep.subr.bf16.mxu0 %v2300
    %3099 = vmatpush1.bf16.msra.mxu0 %v2299
    %3100 = vmatprep.subr.bf16.mxu0 %v2308
    %3101 = vmatpush1.bf16.msra.mxu0 %v2307
    %3102 = vmatprep.subr.bf16.mxu0 %v2316
    %3103 = vmatpush1.bf16.msra.mxu0 %v2315
    %3104 = vmatprep.subr.bf16.mxu0 %v2324
    %3105 = vmatpush1.bf16.msra.mxu0 %v2323
    %3106 = vmatprep.subr.bf16.mxu0 %v2332
    %3107 = vmatpush1.bf16.msra.mxu0 %v2331
    %3108 = vmatprep.subr.bf16.mxu0 %v2340
    %3109 = vmatpush1.bf16.msra.mxu0 %v2339
    %3110 = vmatprep.subr.bf16.mxu0 %v2348
    %3111 = vmatpush1.bf16.msra.mxu0 %v2347
    %3112 = vmatprep.subr.bf16.mxu0 %v2356
    %3113 = vmatpush1.bf16.msra.mxu0 %v2355
    %3114 = vmatprep.subr.bf16.mxu0 %v2364
    %3115 = vmatpush1.bf16.msra.mxu0 %v2363
    %3116 = vmatprep.subr.bf16.mxu0 %v2372
    %3117 = vmatpush1.bf16.msra.mxu0 %v2371
    %3118 = vmatprep.subr.bf16.mxu0 %v2380
    %3119 = vmatpush1.bf16.msra.mxu0 %v2379
    %3120 = vmatprep.subr.bf16.mxu0 %v2388
    %3121 = vmatpush1.bf16.msra.mxu0 %v2387
    %3122 = vmatprep.subr.bf16.mxu0 %v2396
    %3123 = vmatpush1.bf16.msra.mxu0 %v2395
    %3124 = vmatprep.subr.bf16.mxu0 %v2404
    %3125 = vmatpush1.bf16.msra.mxu0 %v2403
    %3126 = vmatprep.mubr.bf16.mxu0 %v800
    %3127 = vmatmul.mubr.bf16.gmra.mrb[0].mxu0 %v799
    %v3128 = vpop.f32.mrb[0].mxu0
    %v3129 = vadd.f32 %v3086, %v3128
    %v3130 = vpop.f32.mrb[0].mxu0
    %v3131 = vadd.f32 %v3088, %v3130
    %v3132 = vpop.f32.mrb[0].mxu0
    %v3133 = vadd.f32 %v3090, %v3132
    %v3134 = vpop.f32.mrb[0].mxu0
    %v3135 = vadd.f32 %v3092, %v3134
    %3136 = vdwg.mxu0
    %3137 = vmatprep.subr.bf16.mxu0 %v2412
    %3138 = vmatpush1.bf16.msra.mxu0 %v2411
    %3139 = vmatprep.subr.bf16.mxu0 %v2420
    %3140 = vmatpush1.bf16.msra.mxu0 %v2419
    %3141 = vmatprep.subr.bf16.mxu0 %v2428
    %3142 = vmatpush1.bf16.msra.mxu0 %v2427
    %3143 = vmatprep.subr.bf16.mxu0 %v2436
    %3144 = vmatpush1.bf16.msra.mxu0 %v2435
    %3145 = vmatprep.subr.bf16.mxu0 %v2444
    %3146 = vmatpush1.bf16.msra.mxu0 %v2443
    %3147 = vmatprep.subr.bf16.mxu0 %v2452
    %3148 = vmatpush1.bf16.msra.mxu0 %v2451
    %3149 = vmatprep.subr.bf16.mxu0 %v2460
    %3150 = vmatpush1.bf16.msra.mxu0 %v2459
    %3151 = vmatprep.subr.bf16.mxu0 %v2468
    %3152 = vmatpush1.bf16.msra.mxu0 %v2467
    %3153 = vmatprep.subr.bf16.mxu0 %v2476
    %3154 = vmatpush1.bf16.msra.mxu0 %v2475
    %3155 = vmatprep.subr.bf16.mxu0 %v2484
    %3156 = vmatpush1.bf16.msra.mxu0 %v2483
    %3157 = vmatprep.subr.bf16.mxu0 %v2492
    %3158 = vmatpush1.bf16.msra.mxu0 %v2491
    %3159 = vmatprep.subr.bf16.mxu0 %v2500
    %3160 = vmatpush1.bf16.msra.mxu0 %v2499
    %3161 = vmatprep.subr.bf16.mxu0 %v2508
    %3162 = vmatpush1.bf16.msra.mxu0 %v2507
    %3163 = vmatprep.subr.bf16.mxu0 %v2516
    %3164 = vmatpush1.bf16.msra.mxu0 %v2515
    %3165 = vmatprep.subr.bf16.mxu0 %v2524
    %3166 = vmatpush1.bf16.msra.mxu0 %v2523
    %3167 = vmatprep.subr.bf16.mxu0 %v2532
    %3168 = vmatpush1.bf16.msra.mxu0 %v2531
    %3169 = vmatprep.mubr.bf16.mxu0 %v802
    %3170 = vmatmul.mubr.bf16.gmra.mrb[0].mxu0 %v801
    %v3171 = vpop.f32.mrb[0].mxu0
    %v3172 = vadd.f32 %v3129, %v3171
    %v3173 = vpop.f32.mrb[0].mxu0
    %v3174 = vadd.f32 %v3131, %v3173
    %v3175 = vpop.f32.mrb[0].mxu0
    %v3176 = vadd.f32 %v3133, %v3175
    %v3177 = vpop.f32.mrb[0].mxu0
    %v3178 = vadd.f32 %v3135, %v3177
    %3179 = vdwg.mxu0
    %3180 = vmatprep.subr.bf16.mxu0 %v2540
    %3181 = vmatpush1.bf16.msra.mxu0 %v2539
    %3182 = vmatprep.subr.bf16.mxu0 %v2548
    %3183 = vmatpush1.bf16.msra.mxu0 %v2547
    %3184 = vmatprep.subr.bf16.mxu0 %v2556
    %3185 = vmatpush1.bf16.msra.mxu0 %v2555
    %3186 = vmatprep.subr.bf16.mxu0 %v2564
    %3187 = vmatpush1.bf16.msra.mxu0 %v2563
    %3188 = vmatprep.subr.bf16.mxu0 %v2572
    %3189 = vmatpush1.bf16.msra.mxu0 %v2571
    %3190 = vmatprep.subr.bf16.mxu0 %v2580
    %3191 = vmatpush1.bf16.msra.mxu0 %v2579
    %3192 = vmatprep.subr.bf16.mxu0 %v2588
    %3193 = vmatpush1.bf16.msra.mxu0 %v2587
    %3194 = vmatprep.subr.bf16.mxu0 %v2596
    %3195 = vmatpush1.bf16.msra.mxu0 %v2595
    %3196 = vmatprep.subr.bf16.mxu0 0
    %3197 = vmatpush1.bf16.msra.mxu0 0
    %3198 = vmatprep.subr.bf16.mxu0 0
    %3199 = vmatpush1.bf16.msra.mxu0 0
    %3200 = vmatprep.subr.bf16.mxu0 0
    %3201 = vmatpush1.bf16.msra.mxu0 0
    %3202 = vmatprep.subr.bf16.mxu0 0
    %3203 = vmatpush1.bf16.msra.mxu0 0
    %3204 = vmatprep.subr.bf16.mxu0 0
    %3205 = vmatpush1.bf16.msra.mxu0 0
    %3206 = vmatprep.subr.bf16.mxu0 0
    %3207 = vmatpush1.bf16.msra.mxu0 0
    %3208 = vmatprep.subr.bf16.mxu0 0
    %3209 = vmatpush1.bf16.msra.mxu0 0
    %3210 = vmatprep.subr.bf16.mxu0 0
    %3211 = vmatpush1.bf16.msra.mxu0 0
    %3212 = vmatprep.mubr.bf16.mxu0 0
    %3213 = vmatmul.mubr.bf16.gmra.mrb[0].mxu0 %v803
    %v3214 = vpop.f32.mrb[0].mxu0
    %v3215 = vadd.f32 %v3172, %v3214
    %v3216 = vpop.f32.mrb[0].mxu0
    %v3217 = vadd.f32 %v3174, %v3216
    %v3218 = vpop.f32.mrb[0].mxu0
    %v3219 = vadd.f32 %v3176, %v3218
    %v3220 = vpop.f32.mrb[0].mxu0
    %v3221 = vadd.f32 %v3178, %v3220
    %3222 = vdwg.mxu0
    %3223 = vmatprep.subr.bf16.mxu0 %v2158
    %3224 = vmatpush1.bf16.msra.mxu0 %v2157
    %3225 = vmatprep.subr.bf16.mxu0 %v2166
    %3226 = vmatpush1.bf16.msra.mxu0 %v2165
    %3227 = vmatprep.subr.bf16.mxu0 %v2174
    %3228 = vmatpush1.bf16.msra.mxu0 %v2173
    %3229 = vmatprep.subr.bf16.mxu0 %v2182
    %3230 = vmatpush1.bf16.msra.mxu0 %v2181
    %3231 = vmatprep.subr.bf16.mxu0 %v2190
    %3232 = vmatpush1.bf16.msra.mxu0 %v2189
    %3233 = vmatprep.subr.bf16.mxu0 %v2198
    %3234 = vmatpush1.bf16.msra.mxu0 %v2197
    %3235 = vmatprep.subr.bf16.mxu0 %v2206
    %3236 = vmatpush1.bf16.msra.mxu0 %v2205
    %3237 = vmatprep.subr.bf16.mxu0 %v2214
    %3238 = vmatpush1.bf16.msra.mxu0 %v2213
    %3239 = vmatprep.subr.bf16.mxu0 %v2222
    %3240 = vmatpush1.bf16.msra.mxu0 %v2221
    %3241 = vmatprep.subr.bf16.mxu0 %v2230
    %3242 = vmatpush1.bf16.msra.mxu0 %v2229
    %3243 = vmatprep.subr.bf16.mxu0 %v2238
    %3244 = vmatpush1.bf16.msra.mxu0 %v2237
    %3245 = vmatprep.subr.bf16.mxu0 %v2246
    %3246 = vmatpush1.bf16.msra.mxu0 %v2245
    %3247 = vmatprep.subr.bf16.mxu0 %v2254
    %3248 = vmatpush1.bf16.msra.mxu0 %v2253
    %3249 = vmatprep.subr.bf16.mxu0 %v2262
    %3250 = vmatpush1.bf16.msra.mxu0 %v2261
    %3251 = vmatprep.subr.bf16.mxu0 %v2270
    %3252 = vmatpush1.bf16.msra.mxu0 %v2269
    %3253 = vmatprep.subr.bf16.mxu0 %v2278
    %3254 = vmatpush1.bf16.msra.mxu0 %v2277
    %3255 = vmatprep.mubr.bf16.mxu0 %v798
    %3256 = vmatmul.mubr.bf16.gmra.mrb[0].mxu0 %v797
    %v3257 = vpop.f32.mrb[0].mxu0
    %v3258 = vadd.f32 %v746, %v3257
    %v3259 = vpop.f32.mrb[0].mxu0
    %v3260 = vadd.f32 %v750, %v3259
    %v3261 = vpop.f32.mrb[0].mxu0
    %v3262 = vadd.f32 %v746, %v3261
    %v3263 = vpop.f32.mrb[0].mxu0
    %v3264 = vadd.f32 %v750, %v3263
    %3265 = vdwg.mxu0
    %3266 = vmatprep.subr.bf16.mxu0 %v2286
    %3267 = vmatpush1.bf16.msra.mxu0 %v2285
    %3268 = vmatprep.subr.bf16.mxu0 %v2294
    %3269 = vmatpush1.bf16.msra.mxu0 %v2293
    %3270 = vmatprep.subr.bf16.mxu0 %v2302
    %3271 = vmatpush1.bf16.msra.mxu0 %v2301
    %3272 = vmatprep.subr.bf16.mxu0 %v2310
    %3273 = vmatpush1.bf16.msra.mxu0 %v2309
    %3274 = vmatprep.subr.bf16.mxu0 %v2318
    %3275 = vmatpush1.bf16.msra.mxu0 %v2317
    %3276 = vmatprep.subr.bf16.mxu0 %v2326
    %3277 = vmatpush1.bf16.msra.mxu0 %v2325
    %3278 = vmatprep.subr.bf16.mxu0 %v2334
    %3279 = vmatpush1.bf16.msra.mxu0 %v2333
    %3280 = vmatprep.subr.bf16.mxu0 %v2342
    %3281 = vmatpush1.bf16.msra.mxu0 %v2341
    %3282 = vmatprep.subr.bf16.mxu0 %v2350
    %3283 = vmatpush1.bf16.msra.mxu0 %v2349
    %3284 = vmatprep.subr.bf16.mxu0 %v2358
    %3285 = vmatpush1.bf16.msra.mxu0 %v2357
    %3286 = vmatprep.subr.bf16.mxu0 %v2366
    %3287 = vmatpush1.bf16.msra.mxu0 %v2365
    %3288 = vmatprep.subr.bf16.mxu0 %v2374
    %3289 = vmatpush1.bf16.msra.mxu0 %v2373
    %3290 = vmatprep.subr.bf16.mxu0 %v2382
    %3291 = vmatpush1.bf16.msra.mxu0 %v2381
    %3292 = vmatprep.subr.bf16.mxu0 %v2390
    %3293 = vmatpush1.bf16.msra.mxu0 %v2389
    %3294 = vmatprep.subr.bf16.mxu0 %v2398
    %3295 = vmatpush1.bf16.msra.mxu0 %v2397
    %3296 = vmatprep.subr.bf16.mxu0 %v2406
    %3297 = vmatpush1.bf16.msra.mxu0 %v2405
    %3298 = vmatprep.mubr.bf16.mxu0 %v800
    %3299 = vmatmul.mubr.bf16.gmra.mrb[0].mxu0 %v799
    %v3300 = vpop.f32.mrb[0].mxu0
    %v3301 = vadd.f32 %v3258, %v3300
    %v3302 = vpop.f32.mrb[0].mxu0
    %v3303 = vadd.f32 %v3260, %v3302
    %v3304 = vpop.f32.mrb[0].mxu0
    %v3305 = vadd.f32 %v3262, %v3304
    %v3306 = vpop.f32.mrb[0].mxu0
    %v3307 = vadd.f32 %v3264, %v3306
    %3308 = vdwg.mxu0
    %3309 = vmatprep.subr.bf16.mxu0 %v2414
    %3310 = vmatpush1.bf16.msra.mxu0 %v2413
    %3311 = vmatprep.subr.bf16.mxu0 %v2422
    %3312 = vmatpush1.bf16.msra.mxu0 %v2421
    %3313 = vmatprep.subr.bf16.mxu0 %v2430
    %3314 = vmatpush1.bf16.msra.mxu0 %v2429
    %3315 = vmatprep.subr.bf16.mxu0 %v2438
    %3316 = vmatpush1.bf16.msra.mxu0 %v2437
    %3317 = vmatprep.subr.bf16.mxu0 %v2446
    %3318 = vmatpush1.bf16.msra.mxu0 %v2445
    %3319 = vmatprep.subr.bf16.mxu0 %v2454
    %3320 = vmatpush1.bf16.msra.mxu0 %v2453
    %3321 = vmatprep.subr.bf16.mxu0 %v2462
    %3322 = vmatpush1.bf16.msra.mxu0 %v2461
    %3323 = vmatprep.subr.bf16.mxu0 %v2470
    %3324 = vmatpush1.bf16.msra.mxu0 %v2469
    %3325 = vmatprep.subr.bf16.mxu0 %v2478
    %3326 = vmatpush1.bf16.msra.mxu0 %v2477
    %3327 = vmatprep.subr.bf16.mxu0 %v2486
    %3328 = vmatpush1.bf16.msra.mxu0 %v2485
    %3329 = vmatprep.subr.bf16.mxu0 %v2494
    %3330 = vmatpush1.bf16.msra.mxu0 %v2493
    %3331 = vmatprep.subr.bf16.mxu0 %v2502
    %3332 = vmatpush1.bf16.msra.mxu0 %v2501
    %3333 = vmatprep.subr.bf16.mxu0 %v2510
    %3334 = vmatpush1.bf16.msra.mxu0 %v2509
    %3335 = vmatprep.subr.bf16.mxu0 %v2518
    %3336 = vmatpush1.bf16.msra.mxu0 %v2517
    %3337 = vmatprep.subr.bf16.mxu0 %v2526
    %3338 = vmatpush1.bf16.msra.mxu0 %v2525
    %3339 = vmatprep.subr.bf16.mxu0 %v2534
    %3340 = vmatpush1.bf16.msra.mxu0 %v2533
    %3341 = vmatprep.mubr.bf16.mxu0 %v802
    %3342 = vmatmul.mubr.bf16.gmra.mrb[0].mxu0 %v801
    %v3343 = vpop.f32.mrb[0].mxu0
    %v3344 = vadd.f32 %v3301, %v3343
    %v3345 = vpop.f32.mrb[0].mxu0
    %v3346 = vadd.f32 %v3303, %v3345
    %v3347 = vpop.f32.mrb[0].mxu0
    %v3348 = vadd.f32 %v3305, %v3347
    %v3349 = vpop.f32.mrb[0].mxu0
    %v3350 = vadd.f32 %v3307, %v3349
    %3351 = vdwg.mxu0
    %3352 = vmatprep.subr.bf16.mxu0 %v2542
    %3353 = vmatpush1.bf16.msra.mxu0 %v2541
    %3354 = vmatprep.subr.bf16.mxu0 %v2550
    %3355 = vmatpush1.bf16.msra.mxu0 %v2549
    %3356 = vmatprep.subr.bf16.mxu0 %v2558
    %3357 = vmatpush1.bf16.msra.mxu0 %v2557
    %3358 = vmatprep.subr.bf16.mxu0 %v2566
    %3359 = vmatpush1.bf16.msra.mxu0 %v2565
    %3360 = vmatprep.subr.bf16.mxu0 %v2574
    %3361 = vmatpush1.bf16.msra.mxu0 %v2573
    %3362 = vmatprep.subr.bf16.mxu0 %v2582
    %3363 = vmatpush1.bf16.msra.mxu0 %v2581
    %3364 = vmatprep.subr.bf16.mxu0 %v2590
    %3365 = vmatpush1.bf16.msra.mxu0 %v2589
    %3366 = vmatprep.subr.bf16.mxu0 %v2598
    %3367 = vmatpush1.bf16.msra.mxu0 %v2597
    %3368 = vmatprep.subr.bf16.mxu0 0
    %3369 = vmatpush1.bf16.msra.mxu0 0
    %3370 = vmatprep.subr.bf16.mxu0 0
    %3371 = vmatpush1.bf16.msra.mxu0 0
    %3372 = vmatprep.subr.bf16.mxu0 0
    %3373 = vmatpush1.bf16.msra.mxu0 0
    %3374 = vmatprep.subr.bf16.mxu0 0
    %3375 = vmatpush1.bf16.msra.mxu0 0
    %3376 = vmatprep.subr.bf16.mxu0 0
    %3377 = vmatpush1.bf16.msra.mxu0 0
    %3378 = vmatprep.subr.bf16.mxu0 0
    %3379 = vmatpush1.bf16.msra.mxu0 0
    %3380 = vmatprep.subr.bf16.mxu0 0
    %3381 = vmatpush1.bf16.msra.mxu0 0
    %3382 = vmatprep.subr.bf16.mxu0 0
    %3383 = vmatpush1.bf16.msra.mxu0 0
    %3384 = vmatprep.mubr.bf16.mxu0 0
    %3385 = vmatmul.mubr.bf16.gmra.mrb[0].mxu0 %v803
    %v3386 = vpop.f32.mrb[0].mxu0
    %v3387 = vadd.f32 %v3344, %v3386
    %v3388 = vpop.f32.mrb[0].mxu0
    %v3389 = vadd.f32 %v3346, %v3388
    %v3390 = vpop.f32.mrb[0].mxu0
    %v3391 = vadd.f32 %v3348, %v3390
    %v3392 = vpop.f32.mrb[0].mxu0
    %v3393 = vadd.f32 %v3350, %v3392
    %3394 = vdwg.mxu0
    %3395 = vmatprep.subr.bf16.mxu0 %v2160
    %3396 = vmatpush1.bf16.msra.mxu0 %v2159
    %3397 = vmatprep.subr.bf16.mxu0 %v2168
    %3398 = vmatpush1.bf16.msra.mxu0 %v2167
    %3399 = vmatprep.subr.bf16.mxu0 %v2176
    %3400 = vmatpush1.bf16.msra.mxu0 %v2175
    %3401 = vmatprep.subr.bf16.mxu0 %v2184
    %3402 = vmatpush1.bf16.msra.mxu0 %v2183
    %3403 = vmatprep.subr.bf16.mxu0 %v2192
    %3404 = vmatpush1.bf16.msra.mxu0 %v2191
    %3405 = vmatprep.subr.bf16.mxu0 %v2200
    %3406 = vmatpush1.bf16.msra.mxu0 %v2199
    %3407 = vmatprep.subr.bf16.mxu0 %v2208
    %3408 = vmatpush1.bf16.msra.mxu0 %v2207
    %3409 = vmatprep.subr.bf16.mxu0 %v2216
    %3410 = vmatpush1.bf16.msra.mxu0 %v2215
    %3411 = vmatprep.subr.bf16.mxu0 %v2224
    %3412 = vmatpush1.bf16.msra.mxu0 %v2223
    %3413 = vmatprep.subr.bf16.mxu0 %v2232
    %3414 = vmatpush1.bf16.msra.mxu0 %v2231
    %3415 = vmatprep.subr.bf16.mxu0 %v2240
    %3416 = vmatpush1.bf16.msra.mxu0 %v2239
    %3417 = vmatprep.subr.bf16.mxu0 %v2248
    %3418 = vmatpush1.bf16.msra.mxu0 %v2247
    %3419 = vmatprep.subr.bf16.mxu0 %v2256
    %3420 = vmatpush1.bf16.msra.mxu0 %v2255
    %3421 = vmatprep.subr.bf16.mxu0 %v2264
    %3422 = vmatpush1.bf16.msra.mxu0 %v2263
    %3423 = vmatprep.subr.bf16.mxu0 %v2272
    %3424 = vmatpush1.bf16.msra.mxu0 %v2271
    %3425 = vmatprep.subr.bf16.mxu0 %v2280
    %3426 = vmatpush1.bf16.msra.mxu0 %v2279
    %3427 = vmatprep.mubr.bf16.mxu0 %v798
    %3428 = vmatmul.mubr.bf16.gmra.mrb[0].mxu0 %v797
    %v3429 = vpop.f32.mrb[0].mxu0
    %v3430 = vadd.f32 %v754, %v3429
    %v3431 = vpop.f32.mrb[0].mxu0
    %v3432 = vadd.f32 %v758, %v3431
    %v3433 = vpop.f32.mrb[0].mxu0
    %v3434 = vadd.f32 %v754, %v3433
    %v3435 = vpop.f32.mrb[0].mxu0
    %v3436 = vadd.f32 %v758, %v3435
    %3437 = vdwg.mxu0
    %3438 = vmatprep.subr.bf16.mxu0 %v2288
    %3439 = vmatpush1.bf16.msra.mxu0 %v2287
    %3440 = vmatprep.subr.bf16.mxu0 %v2296
    %3441 = vmatpush1.bf16.msra.mxu0 %v2295
    %3442 = vmatprep.subr.bf16.mxu0 %v2304
    %3443 = vmatpush1.bf16.msra.mxu0 %v2303
    %3444 = vmatprep.subr.bf16.mxu0 %v2312
    %3445 = vmatpush1.bf16.msra.mxu0 %v2311
    %3446 = vmatprep.subr.bf16.mxu0 %v2320
    %3447 = vmatpush1.bf16.msra.mxu0 %v2319
    %3448 = vmatprep.subr.bf16.mxu0 %v2328
    %3449 = vmatpush1.bf16.msra.mxu0 %v2327
    %3450 = vmatprep.subr.bf16.mxu0 %v2336
    %3451 = vmatpush1.bf16.msra.mxu0 %v2335
    %3452 = vmatprep.subr.bf16.mxu0 %v2344
    %3453 = vmatpush1.bf16.msra.mxu0 %v2343
    %3454 = vmatprep.subr.bf16.mxu0 %v2352
    %3455 = vmatpush1.bf16.msra.mxu0 %v2351
    %3456 = vmatprep.subr.bf16.mxu0 %v2360
    %3457 = vmatpush1.bf16.msra.mxu0 %v2359
    %3458 = vmatprep.subr.bf16.mxu0 %v2368
    %3459 = vmatpush1.bf16.msra.mxu0 %v2367
    %3460 = vmatprep.subr.bf16.mxu0 %v2376
    %3461 = vmatpush1.bf16.msra.mxu0 %v2375
    %3462 = vmatprep.subr.bf16.mxu0 %v2384
    %3463 = vmatpush1.bf16.msra.mxu0 %v2383
    %3464 = vmatprep.subr.bf16.mxu0 %v2392
    %3465 = vmatpush1.bf16.msra.mxu0 %v2391
    %3466 = vmatprep.subr.bf16.mxu0 %v2400
    %3467 = vmatpush1.bf16.msra.mxu0 %v2399
    %3468 = vmatprep.subr.bf16.mxu0 %v2408
    %3469 = vmatpush1.bf16.msra.mxu0 %v2407
    %3470 = vmatprep.mubr.bf16.mxu0 %v800
    %3471 = vmatmul.mubr.bf16.gmra.mrb[0].mxu0 %v799
    %v3472 = vpop.f32.mrb[0].mxu0
    %v3473 = vadd.f32 %v3430, %v3472
    %v3474 = vpop.f32.mrb[0].mxu0
    %v3475 = vadd.f32 %v3432, %v3474
    %v3476 = vpop.f32.mrb[0].mxu0
    %v3477 = vadd.f32 %v3434, %v3476
    %v3478 = vpop.f32.mrb[0].mxu0
    %v3479 = vadd.f32 %v3436, %v3478
    %3480 = vdwg.mxu0
    %3481 = vmatprep.subr.bf16.mxu0 %v2416
    %3482 = vmatpush1.bf16.msra.mxu0 %v2415
    %3483 = vmatprep.subr.bf16.mxu0 %v2424
    %3484 = vmatpush1.bf16.msra.mxu0 %v2423
    %3485 = vmatprep.subr.bf16.mxu0 %v2432
    %3486 = vmatpush1.bf16.msra.mxu0 %v2431
    %3487 = vmatprep.subr.bf16.mxu0 %v2440
    %3488 = vmatpush1.bf16.msra.mxu0 %v2439
    %3489 = vmatprep.subr.bf16.mxu0 %v2448
    %3490 = vmatpush1.bf16.msra.mxu0 %v2447
    %3491 = vmatprep.subr.bf16.mxu0 %v2456
    %3492 = vmatpush1.bf16.msra.mxu0 %v2455
    %3493 = vmatprep.subr.bf16.mxu0 %v2464
    %3494 = vmatpush1.bf16.msra.mxu0 %v2463
    %3495 = vmatprep.subr.bf16.mxu0 %v2472
    %3496 = vmatpush1.bf16.msra.mxu0 %v2471
    %3497 = vmatprep.subr.bf16.mxu0 %v2480
    %3498 = vmatpush1.bf16.msra.mxu0 %v2479
    %3499 = vmatprep.subr.bf16.mxu0 %v2488
    %3500 = vmatpush1.bf16.msra.mxu0 %v2487
    %3501 = vmatprep.subr.bf16.mxu0 %v2496
    %3502 = vmatpush1.bf16.msra.mxu0 %v2495
    %3503 = vmatprep.subr.bf16.mxu0 %v2504
    %3504 = vmatpush1.bf16.msra.mxu0 %v2503
    %3505 = vmatprep.subr.bf16.mxu0 %v2512
    %3506 = vmatpush1.bf16.msra.mxu0 %v2511
    %3507 = vmatprep.subr.bf16.mxu0 %v2520
    %3508 = vmatpush1.bf16.msra.mxu0 %v2519
    %3509 = vmatprep.subr.bf16.mxu0 %v2528
    %3510 = vmatpush1.bf16.msra.mxu0 %v2527
    %3511 = vmatprep.subr.bf16.mxu0 %v2536
    %3512 = vmatpush1.bf16.msra.mxu0 %v2535
    %3513 = vmatprep.mubr.bf16.mxu0 %v802
    %3514 = vmatmul.mubr.bf16.gmra.mrb[0].mxu0 %v801
    %v3515 = vpop.f32.mrb[0].mxu0
    %v3516 = vadd.f32 %v3473, %v3515
    %v3517 = vpop.f32.mrb[0].mxu0
    %v3518 = vadd.f32 %v3475, %v3517
    %v3519 = vpop.f32.mrb[0].mxu0
    %v3520 = vadd.f32 %v3477, %v3519
    %v3521 = vpop.f32.mrb[0].mxu0
    %v3522 = vadd.f32 %v3479, %v3521
    %3523 = vdwg.mxu0
    %3524 = vmatprep.subr.bf16.mxu0 %v2544
    %3525 = vmatpush1.bf16.msra.mxu0 %v2543
    %3526 = vmatprep.subr.bf16.mxu0 %v2552
    %3527 = vmatpush1.bf16.msra.mxu0 %v2551
    %3528 = vmatprep.subr.bf16.mxu0 %v2560
    %3529 = vmatpush1.bf16.msra.mxu0 %v2559
    %3530 = vmatprep.subr.bf16.mxu0 %v2568
    %3531 = vmatpush1.bf16.msra.mxu0 %v2567
    %3532 = vmatprep.subr.bf16.mxu0 %v2576
    %3533 = vmatpush1.bf16.msra.mxu0 %v2575
    %3534 = vmatprep.subr.bf16.mxu0 %v2584
    %3535 = vmatpush1.bf16.msra.mxu0 %v2583
    %3536 = vmatprep.subr.bf16.mxu0 %v2592
    %3537 = vmatpush1.bf16.msra.mxu0 %v2591
    %3538 = vmatprep.subr.bf16.mxu0 %v2600
    %3539 = vmatpush1.bf16.msra.mxu0 %v2599
    %3540 = vmatprep.subr.bf16.mxu0 0
    %3541 = vmatpush1.bf16.msra.mxu0 0
    %3542 = vmatprep.subr.bf16.mxu0 0
    %3543 = vmatpush1.bf16.msra.mxu0 0
    %3544 = vmatprep.subr.bf16.mxu0 0
    %3545 = vmatpush1.bf16.msra.mxu0 0
    %3546 = vmatprep.subr.bf16.mxu0 0
    %3547 = vmatpush1.bf16.msra.mxu0 0
    %3548 = vmatprep.subr.bf16.mxu0 0
    %3549 = vmatpush1.bf16.msra.mxu0 0
    %3550 = vmatprep.subr.bf16.mxu0 0
    %3551 = vmatpush1.bf16.msra.mxu0 0
    %3552 = vmatprep.subr.bf16.mxu0 0
    %3553 = vmatpush1.bf16.msra.mxu0 0
    %3554 = vmatprep.subr.bf16.mxu0 0
    %3555 = vmatpush1.bf16.msra.mxu0 0
    %3556 = vmatprep.mubr.bf16.mxu0 0
    %3557 = vmatmul.mubr.bf16.gmra.mrb[0].mxu0 %v803
    %v3558 = vpop.f32.mrb[0].mxu0
    %v3559 = vadd.f32 %v3516, %v3558
    %v3560 = vpop.f32.mrb[0].mxu0
    %v3561 = vadd.f32 %v3518, %v3560
    %v3562 = vpop.f32.mrb[0].mxu0
    %v3563 = vadd.f32 %v3520, %v3562
    %v3564 = vpop.f32.mrb[0].mxu0
    %v3565 = vadd.f32 %v3522, %v3564
    %3566 = vdwg.mxu0
    %3567 = vmatprep.subr.bf16.mxu0 %v2162
    %3568 = vmatpush1.bf16.msra.mxu0 %v2161
    %3569 = vmatprep.subr.bf16.mxu0 %v2170
    %3570 = vmatpush1.bf16.msra.mxu0 %v2169
    %3571 = vmatprep.subr.bf16.mxu0 %v2178
    %3572 = vmatpush1.bf16.msra.mxu0 %v2177
    %3573 = vmatprep.subr.bf16.mxu0 %v2186
    %3574 = vmatpush1.bf16.msra.mxu0 %v2185
    %3575 = vmatprep.subr.bf16.mxu0 %v2194
    %3576 = vmatpush1.bf16.msra.mxu0 %v2193
    %3577 = vmatprep.subr.bf16.mxu0 %v2202
    %3578 = vmatpush1.bf16.msra.mxu0 %v2201
    %3579 = vmatprep.subr.bf16.mxu0 %v2210
    %3580 = vmatpush1.bf16.msra.mxu0 %v2209
    %3581 = vmatprep.subr.bf16.mxu0 %v2218
    %3582 = vmatpush1.bf16.msra.mxu0 %v2217
    %3583 = vmatprep.subr.bf16.mxu0 %v2226
    %3584 = vmatpush1.bf16.msra.mxu0 %v2225
    %3585 = vmatprep.subr.bf16.mxu0 %v2234
    %3586 = vmatpush1.bf16.msra.mxu0 %v2233
    %3587 = vmatprep.subr.bf16.mxu0 %v2242
    %3588 = vmatpush1.bf16.msra.mxu0 %v2241
    %3589 = vmatprep.subr.bf16.mxu0 %v2250
    %3590 = vmatpush1.bf16.msra.mxu0 %v2249
    %3591 = vmatprep.subr.bf16.mxu0 %v2258
    %3592 = vmatpush1.bf16.msra.mxu0 %v2257
    %3593 = vmatprep.subr.bf16.mxu0 %v2266
    %3594 = vmatpush1.bf16.msra.mxu0 %v2265
    %3595 = vmatprep.subr.bf16.mxu0 %v2274
    %3596 = vmatpush1.bf16.msra.mxu0 %v2273
    %3597 = vmatprep.subr.bf16.mxu0 %v2282
    %3598 = vmatpush1.bf16.msra.mxu0 %v2281
    %3599 = vmatprep.mubr.bf16.mxu0 %v798
    %3600 = vmatmul.mubr.bf16.gmra.mrb[0].mxu0 %v797
    %v3601 = vpop.f32.mrb[0].mxu0
    %v3602 = vadd.f32 %v762, %v3601
    %v3603 = vpop.f32.mrb[0].mxu0
    %v3604 = vadd.f32 %v766, %v3603
    %v3605 = vpop.f32.mrb[0].mxu0
    %v3606 = vadd.f32 %v762, %v3605
    %v3607 = vpop.f32.mrb[0].mxu0
    %v3608 = vadd.f32 %v766, %v3607
    %3609 = vdwg.mxu0
    %3610 = vmatprep.subr.bf16.mxu0 %v2290
    %3611 = vmatpush1.bf16.msra.mxu0 %v2289
    %3612 = vmatprep.subr.bf16.mxu0 %v2298
    %3613 = vmatpush1.bf16.msra.mxu0 %v2297
    %3614 = vmatprep.subr.bf16.mxu0 %v2306
    %3615 = vmatpush1.bf16.msra.mxu0 %v2305
    %3616 = vmatprep.subr.bf16.mxu0 %v2314
    %3617 = vmatpush1.bf16.msra.mxu0 %v2313
    %3618 = vmatprep.subr.bf16.mxu0 %v2322
    %3619 = vmatpush1.bf16.msra.mxu0 %v2321
    %3620 = vmatprep.subr.bf16.mxu0 %v2330
    %3621 = vmatpush1.bf16.msra.mxu0 %v2329
    %3622 = vmatprep.subr.bf16.mxu0 %v2338
    %3623 = vmatpush1.bf16.msra.mxu0 %v2337
    %3624 = vmatprep.subr.bf16.mxu0 %v2346
    %3625 = vmatpush1.bf16.msra.mxu0 %v2345
    %3626 = vmatprep.subr.bf16.mxu0 %v2354
    %3627 = vmatpush1.bf16.msra.mxu0 %v2353
    %3628 = vmatprep.subr.bf16.mxu0 %v2362
    %3629 = vmatpush1.bf16.msra.mxu0 %v2361
    %3630 = vmatprep.subr.bf16.mxu0 %v2370
    %3631 = vmatpush1.bf16.msra.mxu0 %v2369
    %3632 = vmatprep.subr.bf16.mxu0 %v2378
    %3633 = vmatpush1.bf16.msra.mxu0 %v2377
    %3634 = vmatprep.subr.bf16.mxu0 %v2386
    %3635 = vmatpush1.bf16.msra.mxu0 %v2385
    %3636 = vmatprep.subr.bf16.mxu0 %v2394
    %3637 = vmatpush1.bf16.msra.mxu0 %v2393
    %3638 = vmatprep.subr.bf16.mxu0 %v2402
    %3639 = vmatpush1.bf16.msra.mxu0 %v2401
    %3640 = vmatprep.subr.bf16.mxu0 %v2410
    %3641 = vmatpush1.bf16.msra.mxu0 %v2409
    %3642 = vmatprep.mubr.bf16.mxu0 %v800
    %3643 = vmatmul.mubr.bf16.gmra.mrb[0].mxu0 %v799
    %v3644 = vpop.f32.mrb[0].mxu0
    %v3645 = vadd.f32 %v3602, %v3644
    %v3646 = vpop.f32.mrb[0].mxu0
    %v3647 = vadd.f32 %v3604, %v3646
    %v3648 = vpop.f32.mrb[0].mxu0
    %v3649 = vadd.f32 %v3606, %v3648
    %v3650 = vpop.f32.mrb[0].mxu0
    %v3651 = vadd.f32 %v3608, %v3650
    %3652 = vdwg.mxu0
    %3653 = vmatprep.subr.bf16.mxu0 %v2418
    %3654 = vmatpush1.bf16.msra.mxu0 %v2417
    %3655 = vmatprep.subr.bf16.mxu0 %v2426
    %3656 = vmatpush1.bf16.msra.mxu0 %v2425
    %3657 = vmatprep.subr.bf16.mxu0 %v2434
    %3658 = vmatpush1.bf16.msra.mxu0 %v2433
    %3659 = vmatprep.subr.bf16.mxu0 %v2442
    %3660 = vmatpush1.bf16.msra.mxu0 %v2441
    %3661 = vmatprep.subr.bf16.mxu0 %v2450
    %3662 = vmatpush1.bf16.msra.mxu0 %v2449
    %3663 = vmatprep.subr.bf16.mxu0 %v2458
    %3664 = vmatpush1.bf16.msra.mxu0 %v2457
    %3665 = vmatprep.subr.bf16.mxu0 %v2466
    %3666 = vmatpush1.bf16.msra.mxu0 %v2465
    %3667 = vmatprep.subr.bf16.mxu0 %v2474
    %3668 = vmatpush1.bf16.msra.mxu0 %v2473
    %3669 = vmatprep.subr.bf16.mxu0 %v2482
    %3670 = vmatpush1.bf16.msra.mxu0 %v2481
    %3671 = vmatprep.subr.bf16.mxu0 %v2490
    %3672 = vmatpush1.bf16.msra.mxu0 %v2489
    %3673 = vmatprep.subr.bf16.mxu0 %v2498
    %3674 = vmatpush1.bf16.msra.mxu0 %v2497
    %3675 = vmatprep.subr.bf16.mxu0 %v2506
    %3676 = vmatpush1.bf16.msra.mxu0 %v2505
    %3677 = vmatprep.subr.bf16.mxu0 %v2514
    %3678 = vmatpush1.bf16.msra.mxu0 %v2513
    %3679 = vmatprep.subr.bf16.mxu0 %v2522
    %3680 = vmatpush1.bf16.msra.mxu0 %v2521
    %3681 = vmatprep.subr.bf16.mxu0 %v2530
    %3682 = vmatpush1.bf16.msra.mxu0 %v2529
    %3683 = vmatprep.subr.bf16.mxu0 %v2538
    %3684 = vmatpush1.bf16.msra.mxu0 %v2537
    %3685 = vmatprep.mubr.bf16.mxu0 %v802
    %3686 = vmatmul.mubr.bf16.gmra.mrb[0].mxu0 %v801
    %v3687 = vpop.f32.mrb[0].mxu0
    %v3688 = vadd.f32 %v3645, %v3687
    %v3689 = vpop.f32.mrb[0].mxu0
    %v3690 = vadd.f32 %v3647, %v3689
    %v3691 = vpop.f32.mrb[0].mxu0
    %v3692 = vadd.f32 %v3649, %v3691
    %v3693 = vpop.f32.mrb[0].mxu0
    %v3694 = vadd.f32 %v3651, %v3693
    %3695 = vdwg.mxu0
    %3696 = vmatprep.subr.bf16.mxu0 %v2546
    %3697 = vmatpush1.bf16.msra.mxu0 %v2545
    %3698 = vmatprep.subr.bf16.mxu0 %v2554
    %3699 = vmatpush1.bf16.msra.mxu0 %v2553
    %3700 = vmatprep.subr.bf16.mxu0 %v2562
    %3701 = vmatpush1.bf16.msra.mxu0 %v2561
    %3702 = vmatprep.subr.bf16.mxu0 %v2570
    %3703 = vmatpush1.bf16.msra.mxu0 %v2569
    %3704 = vmatprep.subr.bf16.mxu0 %v2578
    %3705 = vmatpush1.bf16.msra.mxu0 %v2577
    %3706 = vmatprep.subr.bf16.mxu0 %v2586
    %3707 = vmatpush1.bf16.msra.mxu0 %v2585
    %3708 = vmatprep.subr.bf16.mxu0 %v2594
    %3709 = vmatpush1.bf16.msra.mxu0 %v2593
    %3710 = vmatprep.subr.bf16.mxu0 %v2602
    %3711 = vmatpush1.bf16.msra.mxu0 %v2601
    %3712 = vmatprep.subr.bf16.mxu0 0
    %3713 = vmatpush1.bf16.msra.mxu0 0
    %3714 = vmatprep.subr.bf16.mxu0 0
    %3715 = vmatpush1.bf16.msra.mxu0 0
    %3716 = vmatprep.subr.bf16.mxu0 0
    %3717 = vmatpush1.bf16.msra.mxu0 0
    %3718 = vmatprep.subr.bf16.mxu0 0
    %3719 = vmatpush1.bf16.msra.mxu0 0
    %3720 = vmatprep.subr.bf16.mxu0 0
    %3721 = vmatpush1.bf16.msra.mxu0 0
    %3722 = vmatprep.subr.bf16.mxu0 0
    %3723 = vmatpush1.bf16.msra.mxu0 0
    %3724 = vmatprep.subr.bf16.mxu0 0
    %3725 = vmatpush1.bf16.msra.mxu0 0
    %3726 = vmatprep.subr.bf16.mxu0 0
    %3727 = vmatpush1.bf16.msra.mxu0 0
    %3728 = vmatprep.mubr.bf16.mxu0 0
    %3729 = vmatmul.mubr.bf16.gmra.mrb[0].mxu0 %v803
    %v3730 = vpop.f32.mrb[0].mxu0
    %v3731 = vadd.f32 %v3688, %v3730
    %v3732 = vpop.f32.mrb[0].mxu0
    %v3733 = vadd.f32 %v3690, %v3732
    %v3734 = vpop.f32.mrb[0].mxu0
    %v3735 = vadd.f32 %v3692, %v3734
    %v3736 = vpop.f32.mrb[0].mxu0
    %v3737 = vadd.f32 %v3694, %v3736
    %3738 = vdwg.mxu0
    %vm3739 = vcmp.gt.f32.partialorder %v3215, 0.0
    %vm3740 = vcmp.gt.f32.partialorder %v3217, 0.0
    %vm3741 = vcmp.gt.f32.partialorder %v3387, 0.0
    %vm3742 = vcmp.gt.f32.partialorder %v3389, 0.0
    %vm3743 = vcmp.gt.f32.partialorder %v3559, 0.0
    %vm3744 = vcmp.gt.f32.partialorder %v3561, 0.0
    %vm3745 = vcmp.gt.f32.partialorder %v3731, 0.0
    %vm3746 = vcmp.gt.f32.partialorder %v3733, 0.0
    %vm3747 = vcmp.gt.f32.partialorder %v3219, 0.0
    %vm3748 = vcmp.gt.f32.partialorder %v3221, 0.0
    %vm3749 = vcmp.gt.f32.partialorder %v3391, 0.0
    %vm3750 = vcmp.gt.f32.partialorder %v3393, 0.0
    %vm3751 = vcmp.gt.f32.partialorder %v3563, 0.0
    %vm3752 = vcmp.gt.f32.partialorder %v3565, 0.0
    %vm3753 = vcmp.gt.f32.partialorder %v3735, 0.0
    %vm3754 = vcmp.gt.f32.partialorder %v3737, 0.0
    %v3755 = vmul.f32 %v3215, 0.2
    %v3756 = vmul.f32 %v3217, 0.2
    %v3757 = vmul.f32 %v3387, 0.2
    %v3758 = vmul.f32 %v3389, 0.2
    %v3759 = vmul.f32 %v3559, 0.2
    %v3760 = vmul.f32 %v3561, 0.2
    %v3761 = vmul.f32 %v3731, 0.2
    %v3762 = vmul.f32 %v3733, 0.2
    %v3763 = vmul.f32 %v3219, 0.2
    %v3764 = vmul.f32 %v3221, 0.2
    %v3765 = vmul.f32 %v3391, 0.2
    %v3766 = vmul.f32 %v3393, 0.2
    %v3767 = vmul.f32 %v3563, 0.2
    %v3768 = vmul.f32 %v3565, 0.2
    %v3769 = vmul.f32 %v3735, 0.2
    %v3770 = vmul.f32 %v3737, 0.2
    %v3771 = vsel %vm3739, %v3215, %v3755
    %v3772 = vsel %vm3740, %v3217, %v3756
    %v3773 = vsel %vm3741, %v3387, %v3757
    %v3774 = vsel %vm3742, %v3389, %v3758
    %v3775 = vsel %vm3743, %v3559, %v3759
    %v3776 = vsel %vm3744, %v3561, %v3760
    %v3777 = vsel %vm3745, %v3731, %v3761
    %v3778 = vsel %vm3746, %v3733, %v3762
    %v3779 = vsel %vm3747, %v3219, %v3763
    %v3780 = vsel %vm3748, %v3221, %v3764
    %v3781 = vsel %vm3749, %v3391, %v3765
    %v3782 = vsel %vm3750, %v3393, %v3766
    %v3783 = vsel %vm3751, %v3563, %v3767
    %v3784 = vsel %vm3752, %v3565, %v3768
    %v3785 = vsel %vm3753, %v3735, %v3769
    %v3786 = vsel %vm3754, %v3737, %v3770
    %v3787 = vpack.c.bf16 %v3779, %v3771
    %v3788 = vpack.c.bf16 %v3780, %v3772
    %v3789 = vpack.c.bf16 %v3781, %v3773
    %v3790 = vpack.c.bf16 %v3782, %v3774
    %v3791 = vpack.c.bf16 %v3783, %v3775
    %v3792 = vpack.c.bf16 %v3784, %v3776
    %v3793 = vpack.c.bf16 %v3785, %v3777
    %v3794 = vpack.c.bf16 %v3786, %v3778
    %v3795 = vld [vmem:[#allocation12] sm:$0xff]
    %v3796 = vld [vmem:[#allocation12 + $0x8] sm:$0xff]
    %v3797 = vld [vmem:[#allocation12 + $0x10] sm:$0xff]
    %v3798 = vld [vmem:[#allocation12 + $0x18] sm:$0xff]
    %v3799 = vld [vmem:[#allocation12 + $0x20] sm:$0xff]
    %v3800 = vld [vmem:[#allocation12 + $0x28] sm:$0xff]
    %v3801 = vld [vmem:[#allocation12 + $0x30] sm:$0xff]
    %v3802 = vld [vmem:[#allocation12 + $0x38] sm:$0xff]
    %v3803 = vld [vmem:[#allocation12 + $0x40] sm:$0xff]
    %v3804 = vld [vmem:[#allocation12 + $0x48] sm:$0xff]
    %v3805 = vld [vmem:[#allocation12 + $0x50] sm:$0xff]
    %v3806 = vld [vmem:[#allocation12 + $0x58] sm:$0xff]
    %v3807 = vld [vmem:[#allocation12 + $0x60] sm:$0xff]
    %v3808 = vld [vmem:[#allocation12 + $0x68] sm:$0xff]
    %v3809 = vld [vmem:[#allocation12 + $0x70] sm:$0xff]
    %v3810 = vld [vmem:[#allocation12 + $0x78] sm:$0xff]
    %v3811 = vld [vmem:[#allocation12 + $0x80] sm:$0xff]
    %v3812 = vld [vmem:[#allocation12 + $0x88] sm:$0xff]
    %v3813 = vld [vmem:[#allocation12 + $0x90] sm:$0xff]
    %v3814 = vld [vmem:[#allocation12 + $0x98] sm:$0xff]
    %v3815 = vld [vmem:[#allocation12 + $0xa0] sm:$0xff]
    %v3816 = vld [vmem:[#allocation12 + $0xa8] sm:$0xff]
    %v3817 = vld [vmem:[#allocation12 + $0xb0] sm:$0xff]
    %v3818 = vld [vmem:[#allocation12 + $0xb8] sm:$0xff]
    %v3819 = vld [vmem:[#allocation12 + $0xc0] sm:$0xff]
    %v3820 = vld [vmem:[#allocation12 + $0xc8] sm:$0xff]
    %v3821 = vld [vmem:[#allocation12 + $0xd0] sm:$0xff]
    %v3822 = vld [vmem:[#allocation12 + $0xd8] sm:$0xff]
    %v3823 = vld [vmem:[#allocation12 + $0xe0] sm:$0xff]
    %v3824 = vld [vmem:[#allocation12 + $0xe8] sm:$0xff]
    %v3825 = vld [vmem:[#allocation12 + $0xf0] sm:$0xff]
    %v3826 = vld [vmem:[#allocation12 + $0xf8] sm:$0xff]
    %v3827 = vld [vmem:[#allocation12 + $0x100] sm:$0xff]
    %v3828 = vld [vmem:[#allocation12 + $0x108] sm:$0xff]
    %v3829 = vld [vmem:[#allocation12 + $0x110] sm:$0xff]
    %v3830 = vld [vmem:[#allocation12 + $0x118] sm:$0xff]
    %v3831 = vld [vmem:[#allocation12 + $0x120] sm:$0xff]
    %v3832 = vld [vmem:[#allocation12 + $0x128] sm:$0xff]
    %v3833 = vld [vmem:[#allocation12 + $0x130] sm:$0xff]
    %v3834 = vld [vmem:[#allocation12 + $0x138] sm:$0xff]
    %v3835 = vld [vmem:[#allocation12 + $0x140] sm:$0xff]
    %v3836 = vld [vmem:[#allocation12 + $0x148] sm:$0xff]
    %v3837 = vld [vmem:[#allocation12 + $0x150] sm:$0xff]
    %v3838 = vld [vmem:[#allocation12 + $0x158] sm:$0xff]
    %v3839 = vld [vmem:[#allocation12 + $0x160] sm:$0xff]
    %v3840 = vld [vmem:[#allocation12 + $0x168] sm:$0xff]
    %v3841 = vld [vmem:[#allocation12 + $0x170] sm:$0xff]
    %v3842 = vld [vmem:[#allocation12 + $0x178] sm:$0xff]
    %v3843 = vld [vmem:[#allocation12 + $0x180] sm:$0xff]
    %v3844 = vld [vmem:[#allocation12 + $0x188] sm:$0xff]
    %v3845 = vld [vmem:[#allocation12 + $0x190] sm:$0xff]
    %v3846 = vld [vmem:[#allocation12 + $0x198] sm:$0xff]
    %v3847 = vld [vmem:[#allocation12 + $0x1a0] sm:$0xff]
    %v3848 = vld [vmem:[#allocation12 + $0x1a8] sm:$0xff]
    %v3849 = vld [vmem:[#allocation12 + $0x1b0] sm:$0xff]
    %v3850 = vld [vmem:[#allocation12 + $0x1b8] sm:$0xff]
    %v3851 = vld [vmem:[#allocation12 + $0x1c0] sm:$0xff]
    %v3852 = vld [vmem:[#allocation12 + $0x1c8] sm:$0xff]
    %v3853 = vld [vmem:[#allocation12 + $0x1d0] sm:$0xff]
    %v3854 = vld [vmem:[#allocation12 + $0x1d8] sm:$0xff]
    %v3855 = vld [vmem:[#allocation12 + $0x1e0] sm:$0xff]
    %v3856 = vld [vmem:[#allocation12 + $0x1e8] sm:$0xff]
    %v3857 = vld [vmem:[#allocation12 + $0x1f0] sm:$0xff]
    %v3858 = vld [vmem:[#allocation12 + $0x1f8] sm:$0xff]
    %v3859 = vld [vmem:[#allocation12 + $0x200] sm:$0xff]
    %v3860 = vld [vmem:[#allocation12 + $0x208] sm:$0xff]
    %v3861 = vld [vmem:[#allocation12 + $0x210] sm:$0xff]
    %v3862 = vld [vmem:[#allocation12 + $0x218] sm:$0xff]
    %v3863 = vld [vmem:[#allocation12 + $0x220] sm:$0xff]
    %v3864 = vld [vmem:[#allocation12 + $0x228] sm:$0xff]
    %v3865 = vld [vmem:[#allocation12 + $0x230] sm:$0xff]
    %v3866 = vld [vmem:[#allocation12 + $0x238] sm:$0xff]
    %v3867 = vld [vmem:[#allocation12 + $0x240] sm:$0xff]
    %v3868 = vld [vmem:[#allocation12 + $0x248] sm:$0xff]
    %v3869 = vld [vmem:[#allocation12 + $0x250] sm:$0xff]
    %v3870 = vld [vmem:[#allocation12 + $0x258] sm:$0xff]
    %v3871 = vld [vmem:[#allocation12 + $0x260] sm:$0xff]
    %v3872 = vld [vmem:[#allocation12 + $0x268] sm:$0xff]
    %v3873 = vld [vmem:[#allocation12 + $0x270] sm:$0xff]
    %v3874 = vld [vmem:[#allocation12 + $0x278] sm:$0xff]
    %v3875 = vld [vmem:[#allocation12 + $0x280] sm:$0xff]
    %v3876 = vld [vmem:[#allocation12 + $0x288] sm:$0xff]
    %v3877 = vld [vmem:[#allocation12 + $0x290] sm:$0xff]
    %v3878 = vld [vmem:[#allocation12 + $0x298] sm:$0xff]
    %v3879 = vld [vmem:[#allocation12 + $0x2a0] sm:$0xff]
    %v3880 = vld [vmem:[#allocation12 + $0x2a8] sm:$0xff]
    %v3881 = vld [vmem:[#allocation12 + $0x2b0] sm:$0xff]
    %v3882 = vld [vmem:[#allocation12 + $0x2b8] sm:$0xff]
    %v3883 = vld [vmem:[#allocation12 + $0x2c0] sm:$0xff]
    %v3884 = vld [vmem:[#allocation12 + $0x2c8] sm:$0xff]
    %v3885 = vld [vmem:[#allocation12 + $0x2d0] sm:$0xff]
    %v3886 = vld [vmem:[#allocation12 + $0x2d8] sm:$0xff]
    %v3887 = vld [vmem:[#allocation12 + $0x2e0] sm:$0xff]
    %v3888 = vld [vmem:[#allocation12 + $0x2e8] sm:$0xff]
    %v3889 = vld [vmem:[#allocation12 + $0x2f0] sm:$0xff]
    %v3890 = vld [vmem:[#allocation12 + $0x2f8] sm:$0xff]
    %v3891 = vld [vmem:[#allocation12 + $0x300] sm:$0xff]
    %v3892 = vld [vmem:[#allocation12 + $0x308] sm:$0xff]
    %v3893 = vld [vmem:[#allocation12 + $0x310] sm:$0xff]
    %v3894 = vld [vmem:[#allocation12 + $0x318] sm:$0xff]
    %v3895 = vld [vmem:[#allocation12 + $0x320] sm:$0xff]
    %v3896 = vld [vmem:[#allocation12 + $0x328] sm:$0xff]
    %v3897 = vld [vmem:[#allocation12 + $0x330] sm:$0xff]
    %v3898 = vld [vmem:[#allocation12 + $0x338] sm:$0xff]
    %v3899 = vld [vmem:[#allocation12 + $0x340] sm:$0xff]
    %v3900 = vld [vmem:[#allocation12 + $0x348] sm:$0xff]
    %v3901 = vld [vmem:[#allocation12 + $0x350] sm:$0xff]
    %v3902 = vld [vmem:[#allocation12 + $0x358] sm:$0xff]
    %v3903 = vld [vmem:[#allocation12 + $0x360] sm:$0xff]
    %v3904 = vld [vmem:[#allocation12 + $0x368] sm:$0xff]
    %v3905 = vld [vmem:[#allocation12 + $0x370] sm:$0xff]
    %v3906 = vld [vmem:[#allocation12 + $0x378] sm:$0xff]
    %v3907 = vld [vmem:[#allocation12 + $0x380] sm:$0xff]
    %v3908 = vld [vmem:[#allocation12 + $0x388] sm:$0xff]
    %v3909 = vld [vmem:[#allocation12 + $0x390] sm:$0xff]
    %v3910 = vld [vmem:[#allocation12 + $0x398] sm:$0xff]
    %v3911 = vld [vmem:[#allocation12 + $0x3a0] sm:$0xff]
    %v3912 = vld [vmem:[#allocation12 + $0x3a8] sm:$0xff]
    %v3913 = vld [vmem:[#allocation12 + $0x3b0] sm:$0xff]
    %v3914 = vld [vmem:[#allocation12 + $0x3b8] sm:$0xff]
    %v3915 = vld [vmem:[#allocation12 + $0x3c0] sm:$0xff]
    %v3916 = vld [vmem:[#allocation12 + $0x3c8] sm:$0xff]
    %v3917 = vld [vmem:[#allocation12 + $0x3d0] sm:$0xff]
    %v3918 = vld [vmem:[#allocation12 + $0x3d8] sm:$0xff]
    %v3919 = vld [vmem:[#allocation12 + $0x3e0] sm:$0xff]
    %v3920 = vld [vmem:[#allocation12 + $0x3e8] sm:$0xff]
    %v3921 = vld [vmem:[#allocation12 + $0x3f0] sm:$0xff]
    %v3922 = vld [vmem:[#allocation12 + $0x3f8] sm:$0xff]
    %v3923 = vld [vmem:[#allocation12 + $0x400] sm:$0xff]
    %v3924 = vld [vmem:[#allocation12 + $0x408] sm:$0xff]
    %v3925 = vld [vmem:[#allocation12 + $0x410] sm:$0xff]
    %v3926 = vld [vmem:[#allocation12 + $0x418] sm:$0xff]
    %v3927 = vld [vmem:[#allocation12 + $0x420] sm:$0xff]
    %v3928 = vld [vmem:[#allocation12 + $0x428] sm:$0xff]
    %v3929 = vld [vmem:[#allocation12 + $0x430] sm:$0xff]
    %v3930 = vld [vmem:[#allocation12 + $0x438] sm:$0xff]
    %v3931 = vld [vmem:[#allocation12 + $0x440] sm:$0xff]
    %v3932 = vld [vmem:[#allocation12 + $0x448] sm:$0xff]
    %v3933 = vld [vmem:[#allocation12 + $0x450] sm:$0xff]
    %v3934 = vld [vmem:[#allocation12 + $0x458] sm:$0xff]
    %v3935 = vld [vmem:[#allocation12 + $0x460] sm:$0xff]
    %v3936 = vld [vmem:[#allocation12 + $0x468] sm:$0xff]
    %v3937 = vld [vmem:[#allocation12 + $0x470] sm:$0xff]
    %v3938 = vld [vmem:[#allocation12 + $0x478] sm:$0xff]
    %v3939 = vld [vmem:[#allocation12 + $0x480] sm:$0xff]
    %v3940 = vld [vmem:[#allocation12 + $0x488] sm:$0xff]
    %v3941 = vld [vmem:[#allocation12 + $0x490] sm:$0xff]
    %v3942 = vld [vmem:[#allocation12 + $0x498] sm:$0xff]
    %v3943 = vld [vmem:[#allocation12 + $0x4a0] sm:$0xff]
    %v3944 = vld [vmem:[#allocation12 + $0x4a8] sm:$0xff]
    %v3945 = vld [vmem:[#allocation12 + $0x4b0] sm:$0xff]
    %v3946 = vld [vmem:[#allocation12 + $0x4b8] sm:$0xff]
    %v3947 = vld [vmem:[#allocation12 + $0x4c0] sm:$0xff]
    %v3948 = vld [vmem:[#allocation12 + $0x4c8] sm:$0xff]
    %v3949 = vld [vmem:[#allocation12 + $0x4d0] sm:$0xff]
    %v3950 = vld [vmem:[#allocation12 + $0x4d8] sm:$0xff]
    %v3951 = vld [vmem:[#allocation12 + $0x4e0] sm:$0xff]
    %v3952 = vld [vmem:[#allocation12 + $0x4e8] sm:$0xff]
    %v3953 = vld [vmem:[#allocation12 + $0x4f0] sm:$0xff]
    %v3954 = vld [vmem:[#allocation12 + $0x4f8] sm:$0xff]
    %v3955 = vld [vmem:[#allocation12 + $0x500] sm:$0xff]
    %v3956 = vld [vmem:[#allocation12 + $0x508] sm:$0xff]
    %v3957 = vld [vmem:[#allocation12 + $0x510] sm:$0xff]
    %v3958 = vld [vmem:[#allocation12 + $0x518] sm:$0xff]
    %v3959 = vld [vmem:[#allocation12 + $0x520] sm:$0xff]
    %v3960 = vld [vmem:[#allocation12 + $0x528] sm:$0xff]
    %v3961 = vld [vmem:[#allocation12 + $0x530] sm:$0xff]
    %v3962 = vld [vmem:[#allocation12 + $0x538] sm:$0xff]
    %v3963 = vld [vmem:[#allocation12 + $0x540] sm:$0xff]
    %v3964 = vld [vmem:[#allocation12 + $0x548] sm:$0xff]
    %v3965 = vld [vmem:[#allocation12 + $0x550] sm:$0xff]
    %v3966 = vld [vmem:[#allocation12 + $0x558] sm:$0xff]
    %v3967 = vld [vmem:[#allocation12 + $0x560] sm:$0xff]
    %v3968 = vld [vmem:[#allocation12 + $0x568] sm:$0xff]
    %v3969 = vld [vmem:[#allocation12 + $0x570] sm:$0xff]
    %v3970 = vld [vmem:[#allocation12 + $0x578] sm:$0xff]
    %v3971 = vld [vmem:[#allocation12 + $0x580] sm:$0xff]
    %v3972 = vld [vmem:[#allocation12 + $0x588] sm:$0xff]
    %v3973 = vld [vmem:[#allocation12 + $0x590] sm:$0xff]
    %v3974 = vld [vmem:[#allocation12 + $0x598] sm:$0xff]
    %v3975 = vld [vmem:[#allocation12 + $0x5a0] sm:$0xff]
    %v3976 = vld [vmem:[#allocation12 + $0x5a8] sm:$0xff]
    %v3977 = vld [vmem:[#allocation12 + $0x5b0] sm:$0xff]
    %v3978 = vld [vmem:[#allocation12 + $0x5b8] sm:$0xff]
    %v3979 = vld [vmem:[#allocation12 + $0x5c0] sm:$0xff]
    %v3980 = vld [vmem:[#allocation12 + $0x5c8] sm:$0xff]
    %v3981 = vld [vmem:[#allocation12 + $0x5d0] sm:$0xff]
    %v3982 = vld [vmem:[#allocation12 + $0x5d8] sm:$0xff]
    %v3983 = vld [vmem:[#allocation12 + $0x5e0] sm:$0xff]
    %v3984 = vld [vmem:[#allocation12 + $0x5e8] sm:$0xff]
    %v3985 = vld [vmem:[#allocation12 + $0x5f0] sm:$0xff]
    %v3986 = vld [vmem:[#allocation12 + $0x5f8] sm:$0xff]
    %v3987 = vld [vmem:[#allocation12 + $0x600] sm:$0xff]
    %v3988 = vld [vmem:[#allocation12 + $0x608] sm:$0xff]
    %v3989 = vld [vmem:[#allocation12 + $0x610] sm:$0xff]
    %v3990 = vld [vmem:[#allocation12 + $0x618] sm:$0xff]
    %v3991 = vld [vmem:[#allocation12 + $0x620] sm:$0xff]
    %v3992 = vld [vmem:[#allocation12 + $0x628] sm:$0xff]
    %v3993 = vld [vmem:[#allocation12 + $0x630] sm:$0xff]
    %v3994 = vld [vmem:[#allocation12 + $0x638] sm:$0xff]
    %v3995 = vld [vmem:[#allocation12 + $0x640] sm:$0xff]
    %v3996 = vld [vmem:[#allocation12 + $0x648] sm:$0xff]
    %v3997 = vld [vmem:[#allocation12 + $0x650] sm:$0xff]
    %v3998 = vld [vmem:[#allocation12 + $0x658] sm:$0xff]
    %v3999 = vld [vmem:[#allocation12 + $0x660] sm:$0xff]
    %v4000 = vld [vmem:[#allocation12 + $0x668] sm:$0xff]
    %v4001 = vld [vmem:[#allocation12 + $0x670] sm:$0xff]
    %v4002 = vld [vmem:[#allocation12 + $0x678] sm:$0xff]
    %v4003 = vld [vmem:[#allocation12 + $0x680] sm:$0xff]
    %v4004 = vld [vmem:[#allocation12 + $0x688] sm:$0xff]
    %v4005 = vld [vmem:[#allocation12 + $0x690] sm:$0xff]
    %v4006 = vld [vmem:[#allocation12 + $0x698] sm:$0xff]
    %v4007 = vld [vmem:[#allocation12 + $0x6a0] sm:$0xff]
    %v4008 = vld [vmem:[#allocation12 + $0x6a8] sm:$0xff]
    %v4009 = vld [vmem:[#allocation12 + $0x6b0] sm:$0xff]
    %v4010 = vld [vmem:[#allocation12 + $0x6b8] sm:$0xff]
    %v4011 = vld [vmem:[#allocation12 + $0x6c0] sm:$0xff]
    %v4012 = vld [vmem:[#allocation12 + $0x6c8] sm:$0xff]
    %v4013 = vld [vmem:[#allocation12 + $0x6d0] sm:$0xff]
    %v4014 = vld [vmem:[#allocation12 + $0x6d8] sm:$0xff]
    %v4015 = vld [vmem:[#allocation12 + $0x6e0] sm:$0xff]
    %v4016 = vld [vmem:[#allocation12 + $0x6e8] sm:$0xff]
    %v4017 = vld [vmem:[#allocation12 + $0x6f0] sm:$0xff]
    %v4018 = vld [vmem:[#allocation12 + $0x6f8] sm:$0xff]
    %v4019 = vld [vmem:[#allocation12 + $0x700] sm:$0xff]
    %v4020 = vld [vmem:[#allocation12 + $0x708] sm:$0xff]
    %v4021 = vld [vmem:[#allocation12 + $0x710] sm:$0xff]
    %v4022 = vld [vmem:[#allocation12 + $0x718] sm:$0xff]
    %v4023 = vld [vmem:[#allocation12 + $0x720] sm:$0xff]
    %v4024 = vld [vmem:[#allocation12 + $0x728] sm:$0xff]
    %v4025 = vld [vmem:[#allocation12 + $0x730] sm:$0xff]
    %v4026 = vld [vmem:[#allocation12 + $0x738] sm:$0xff]
    %v4027 = vld [vmem:[#allocation12 + $0x740] sm:$0xff]
    %v4028 = vld [vmem:[#allocation12 + $0x748] sm:$0xff]
    %v4029 = vld [vmem:[#allocation12 + $0x750] sm:$0xff]
    %v4030 = vld [vmem:[#allocation12 + $0x758] sm:$0xff]
    %v4031 = vld [vmem:[#allocation12 + $0x760] sm:$0xff]
    %v4032 = vld [vmem:[#allocation12 + $0x768] sm:$0xff]
    %v4033 = vld [vmem:[#allocation12 + $0x770] sm:$0xff]
    %v4034 = vld [vmem:[#allocation12 + $0x778] sm:$0xff]
    %v4035 = vld [vmem:[#allocation12 + $0x780] sm:$0xff]
    %v4036 = vld [vmem:[#allocation12 + $0x788] sm:$0xff]
    %v4037 = vld [vmem:[#allocation12 + $0x790] sm:$0xff]
    %v4038 = vld [vmem:[#allocation12 + $0x798] sm:$0xff]
    %v4039 = vld [vmem:[#allocation12 + $0x7a0] sm:$0xff]
    %v4040 = vld [vmem:[#allocation12 + $0x7a8] sm:$0xff]
    %v4041 = vld [vmem:[#allocation12 + $0x7b0] sm:$0xff]
    %v4042 = vld [vmem:[#allocation12 + $0x7b8] sm:$0xff]
    %v4043 = vld [vmem:[#allocation12 + $0x7c0] sm:$0xff]
    %v4044 = vld [vmem:[#allocation12 + $0x7c8] sm:$0xff]
    %v4045 = vld [vmem:[#allocation12 + $0x7d0] sm:$0xff]
    %v4046 = vld [vmem:[#allocation12 + $0x7d8] sm:$0xff]
    %v4047 = vld [vmem:[#allocation12 + $0x7e0] sm:$0xff]
    %v4048 = vld [vmem:[#allocation12 + $0x7e8] sm:$0xff]
    %v4049 = vld [vmem:[#allocation12 + $0x7f0] sm:$0xff]
    %v4050 = vld [vmem:[#allocation12 + $0x7f8] sm:$0xff]
    %v4051 = vld [vmem:[#allocation13] sm:$0xf]
    %v4053 = vlaneseq
    %v4054 = vshrl.u32 %v4053, 7
    %v4055 = vsub.s32 0, %v4054
    %v4056 = vrot.slane %v4051, %v4055
    %v4057 = vlaneseq
    %v4058 = vshrl.u32 %v4057, 7
    %v4059 = vsub.s32 1, %v4058
    %v4060 = vrot.slane %v4051, %v4059
    %v4061 = vlaneseq
    %v4062 = vshrl.u32 %v4061, 7
    %v4063 = vsub.s32 2, %v4062
    %v4064 = vrot.slane %v4051, %v4063
    %v4065 = vlaneseq
    %v4066 = vshrl.u32 %v4065, 7
    %v4067 = vsub.s32 3, %v4066
    %v4068 = vrot.slane %v4051, %v4067
    %v4329 = vunpack.c.l.b16 %v3795
    %v4330 = vunpack.c.h.b16 %v3795
    %v4331 = vunpack.c.l.b16 %v3796
    %v4332 = vunpack.c.h.b16 %v3796
    %v4333 = vunpack.c.l.b16 %v3797
    %v4334 = vunpack.c.h.b16 %v3797
    %v4335 = vunpack.c.l.b16 %v3798
    %v4336 = vunpack.c.h.b16 %v3798
    %v4337 = vunpack.c.l.b16 %v3799
    %v4338 = vunpack.c.h.b16 %v3799
    %v4339 = vunpack.c.l.b16 %v3800
    %v4340 = vunpack.c.h.b16 %v3800
    %v4341 = vunpack.c.l.b16 %v3801
    %v4342 = vunpack.c.h.b16 %v3801
    %v4343 = vunpack.c.l.b16 %v3802
    %v4344 = vunpack.c.h.b16 %v3802
    %v4345 = vunpack.c.l.b16 %v3803
    %v4346 = vunpack.c.h.b16 %v3803
    %v4347 = vunpack.c.l.b16 %v3804
    %v4348 = vunpack.c.h.b16 %v3804
    %v4349 = vunpack.c.l.b16 %v3805
    %v4350 = vunpack.c.h.b16 %v3805
    %v4351 = vunpack.c.l.b16 %v3806
    %v4352 = vunpack.c.h.b16 %v3806
    %v4353 = vunpack.c.l.b16 %v3807
    %v4354 = vunpack.c.h.b16 %v3807
    %v4355 = vunpack.c.l.b16 %v3808
    %v4356 = vunpack.c.h.b16 %v3808
    %v4357 = vunpack.c.l.b16 %v3809
    %v4358 = vunpack.c.h.b16 %v3809
    %v4359 = vunpack.c.l.b16 %v3810
    %v4360 = vunpack.c.h.b16 %v3810
    %v4361 = vunpack.c.l.b16 %v3811
    %v4362 = vunpack.c.h.b16 %v3811
    %v4363 = vunpack.c.l.b16 %v3812
    %v4364 = vunpack.c.h.b16 %v3812
    %v4365 = vunpack.c.l.b16 %v3813
    %v4366 = vunpack.c.h.b16 %v3813
    %v4367 = vunpack.c.l.b16 %v3814
    %v4368 = vunpack.c.h.b16 %v3814
    %v4369 = vunpack.c.l.b16 %v3815
    %v4370 = vunpack.c.h.b16 %v3815
    %v4371 = vunpack.c.l.b16 %v3816
    %v4372 = vunpack.c.h.b16 %v3816
    %v4373 = vunpack.c.l.b16 %v3817
    %v4374 = vunpack.c.h.b16 %v3817
    %v4375 = vunpack.c.l.b16 %v3818
    %v4376 = vunpack.c.h.b16 %v3818
    %v4377 = vunpack.c.l.b16 %v3819
    %v4378 = vunpack.c.h.b16 %v3819
    %v4379 = vunpack.c.l.b16 %v3820
    %v4380 = vunpack.c.h.b16 %v3820
    %v4381 = vunpack.c.l.b16 %v3821
    %v4382 = vunpack.c.h.b16 %v3821
    %v4383 = vunpack.c.l.b16 %v3822
    %v4384 = vunpack.c.h.b16 %v3822
    %v4385 = vunpack.c.l.b16 %v3823
    %v4386 = vunpack.c.h.b16 %v3823
    %v4387 = vunpack.c.l.b16 %v3824
    %v4388 = vunpack.c.h.b16 %v3824
    %v4389 = vunpack.c.l.b16 %v3825
    %v4390 = vunpack.c.h.b16 %v3825
    %v4391 = vunpack.c.l.b16 %v3826
    %v4392 = vunpack.c.h.b16 %v3826
    %v4393 = vunpack.c.l.b16 %v3827
    %v4394 = vunpack.c.h.b16 %v3827
    %v4395 = vunpack.c.l.b16 %v3828
    %v4396 = vunpack.c.h.b16 %v3828
    %v4397 = vunpack.c.l.b16 %v3829
    %v4398 = vunpack.c.h.b16 %v3829
    %v4399 = vunpack.c.l.b16 %v3830
    %v4400 = vunpack.c.h.b16 %v3830
    %v4401 = vunpack.c.l.b16 %v3831
    %v4402 = vunpack.c.h.b16 %v3831
    %v4403 = vunpack.c.l.b16 %v3832
    %v4404 = vunpack.c.h.b16 %v3832
    %v4405 = vunpack.c.l.b16 %v3833
    %v4406 = vunpack.c.h.b16 %v3833
    %v4407 = vunpack.c.l.b16 %v3834
    %v4408 = vunpack.c.h.b16 %v3834
    %v4409 = vunpack.c.l.b16 %v3835
    %v4410 = vunpack.c.h.b16 %v3835
    %v4411 = vunpack.c.l.b16 %v3836
    %v4412 = vunpack.c.h.b16 %v3836
    %v4413 = vunpack.c.l.b16 %v3837
    %v4414 = vunpack.c.h.b16 %v3837
    %v4415 = vunpack.c.l.b16 %v3838
    %v4416 = vunpack.c.h.b16 %v3838
    %v4417 = vunpack.c.l.b16 %v3839
    %v4418 = vunpack.c.h.b16 %v3839
    %v4419 = vunpack.c.l.b16 %v3840
    %v4420 = vunpack.c.h.b16 %v3840
    %v4421 = vunpack.c.l.b16 %v3841
    %v4422 = vunpack.c.h.b16 %v3841
    %v4423 = vunpack.c.l.b16 %v3842
    %v4424 = vunpack.c.h.b16 %v3842
    %v4425 = vunpack.c.l.b16 %v3843
    %v4426 = vunpack.c.h.b16 %v3843
    %v4427 = vunpack.c.l.b16 %v3844
    %v4428 = vunpack.c.h.b16 %v3844
    %v4429 = vunpack.c.l.b16 %v3845
    %v4430 = vunpack.c.h.b16 %v3845
    %v4431 = vunpack.c.l.b16 %v3846
    %v4432 = vunpack.c.h.b16 %v3846
    %v4433 = vunpack.c.l.b16 %v3847
    %v4434 = vunpack.c.h.b16 %v3847
    %v4435 = vunpack.c.l.b16 %v3848
    %v4436 = vunpack.c.h.b16 %v3848
    %v4437 = vunpack.c.l.b16 %v3849
    %v4438 = vunpack.c.h.b16 %v3849
    %v4439 = vunpack.c.l.b16 %v3850
    %v4440 = vunpack.c.h.b16 %v3850
    %v4441 = vunpack.c.l.b16 %v3851
    %v4442 = vunpack.c.h.b16 %v3851
    %v4443 = vunpack.c.l.b16 %v3852
    %v4444 = vunpack.c.h.b16 %v3852
    %v4445 = vunpack.c.l.b16 %v3853
    %v4446 = vunpack.c.h.b16 %v3853
    %v4447 = vunpack.c.l.b16 %v3854
    %v4448 = vunpack.c.h.b16 %v3854
    %v4449 = vunpack.c.l.b16 %v3855
    %v4450 = vunpack.c.h.b16 %v3855
    %v4451 = vunpack.c.l.b16 %v3856
    %v4452 = vunpack.c.h.b16 %v3856
    %v4453 = vunpack.c.l.b16 %v3857
    %v4454 = vunpack.c.h.b16 %v3857
    %v4455 = vunpack.c.l.b16 %v3858
    %v4456 = vunpack.c.h.b16 %v3858
    %v4457 = vunpack.c.l.b16 %v3859
    %v4458 = vunpack.c.h.b16 %v3859
    %v4459 = vunpack.c.l.b16 %v3860
    %v4460 = vunpack.c.h.b16 %v3860
    %v4461 = vunpack.c.l.b16 %v3861
    %v4462 = vunpack.c.h.b16 %v3861
    %v4463 = vunpack.c.l.b16 %v3862
    %v4464 = vunpack.c.h.b16 %v3862
    %v4465 = vunpack.c.l.b16 %v3863
    %v4466 = vunpack.c.h.b16 %v3863
    %v4467 = vunpack.c.l.b16 %v3864
    %v4468 = vunpack.c.h.b16 %v3864
    %v4469 = vunpack.c.l.b16 %v3865
    %v4470 = vunpack.c.h.b16 %v3865
    %v4471 = vunpack.c.l.b16 %v3866
    %v4472 = vunpack.c.h.b16 %v3866
    %v4473 = vunpack.c.l.b16 %v3867
    %v4474 = vunpack.c.h.b16 %v3867
    %v4475 = vunpack.c.l.b16 %v3868
    %v4476 = vunpack.c.h.b16 %v3868
    %v4477 = vunpack.c.l.b16 %v3869
    %v4478 = vunpack.c.h.b16 %v3869
    %v4479 = vunpack.c.l.b16 %v3870
    %v4480 = vunpack.c.h.b16 %v3870
    %v4481 = vunpack.c.l.b16 %v3871
    %v4482 = vunpack.c.h.b16 %v3871
    %v4483 = vunpack.c.l.b16 %v3872
    %v4484 = vunpack.c.h.b16 %v3872
    %v4485 = vunpack.c.l.b16 %v3873
    %v4486 = vunpack.c.h.b16 %v3873
    %v4487 = vunpack.c.l.b16 %v3874
    %v4488 = vunpack.c.h.b16 %v3874
    %v4489 = vunpack.c.l.b16 %v3875
    %v4490 = vunpack.c.h.b16 %v3875
    %v4491 = vunpack.c.l.b16 %v3876
    %v4492 = vunpack.c.h.b16 %v3876
    %v4493 = vunpack.c.l.b16 %v3877
    %v4494 = vunpack.c.h.b16 %v3877
    %v4495 = vunpack.c.l.b16 %v3878
    %v4496 = vunpack.c.h.b16 %v3878
    %v4497 = vunpack.c.l.b16 %v3879
    %v4498 = vunpack.c.h.b16 %v3879
    %v4499 = vunpack.c.l.b16 %v3880
    %v4500 = vunpack.c.h.b16 %v3880
    %v4501 = vunpack.c.l.b16 %v3881
    %v4502 = vunpack.c.h.b16 %v3881
    %v4503 = vunpack.c.l.b16 %v3882
    %v4504 = vunpack.c.h.b16 %v3882
    %v4505 = vunpack.c.l.b16 %v3883
    %v4506 = vunpack.c.h.b16 %v3883
    %v4507 = vunpack.c.l.b16 %v3884
    %v4508 = vunpack.c.h.b16 %v3884
    %v4509 = vunpack.c.l.b16 %v3885
    %v4510 = vunpack.c.h.b16 %v3885
    %v4511 = vunpack.c.l.b16 %v3886
    %v4512 = vunpack.c.h.b16 %v3886
    %v4513 = vunpack.c.l.b16 %v3887
    %v4514 = vunpack.c.h.b16 %v3887
    %v4515 = vunpack.c.l.b16 %v3888
    %v4516 = vunpack.c.h.b16 %v3888
    %v4517 = vunpack.c.l.b16 %v3889
    %v4518 = vunpack.c.h.b16 %v3889
    %v4519 = vunpack.c.l.b16 %v3890
    %v4520 = vunpack.c.h.b16 %v3890
    %v4521 = vunpack.c.l.b16 %v3891
    %v4522 = vunpack.c.h.b16 %v3891
    %v4523 = vunpack.c.l.b16 %v3892
    %v4524 = vunpack.c.h.b16 %v3892
    %v4525 = vunpack.c.l.b16 %v3893
    %v4526 = vunpack.c.h.b16 %v3893
    %v4527 = vunpack.c.l.b16 %v3894
    %v4528 = vunpack.c.h.b16 %v3894
    %v4529 = vunpack.c.l.b16 %v3895
    %v4530 = vunpack.c.h.b16 %v3895
    %v4531 = vunpack.c.l.b16 %v3896
    %v4532 = vunpack.c.h.b16 %v3896
    %v4533 = vunpack.c.l.b16 %v3897
    %v4534 = vunpack.c.h.b16 %v3897
    %v4535 = vunpack.c.l.b16 %v3898
    %v4536 = vunpack.c.h.b16 %v3898
    %v4537 = vunpack.c.l.b16 %v3899
    %v4538 = vunpack.c.h.b16 %v3899
    %v4539 = vunpack.c.l.b16 %v3900
    %v4540 = vunpack.c.h.b16 %v3900
    %v4541 = vunpack.c.l.b16 %v3901
    %v4542 = vunpack.c.h.b16 %v3901
    %v4543 = vunpack.c.l.b16 %v3902
    %v4544 = vunpack.c.h.b16 %v3902
    %v4545 = vunpack.c.l.b16 %v3903
    %v4546 = vunpack.c.h.b16 %v3903
    %v4547 = vunpack.c.l.b16 %v3904
    %v4548 = vunpack.c.h.b16 %v3904
    %v4549 = vunpack.c.l.b16 %v3905
    %v4550 = vunpack.c.h.b16 %v3905
    %v4551 = vunpack.c.l.b16 %v3906
    %v4552 = vunpack.c.h.b16 %v3906
    %v4553 = vunpack.c.l.b16 %v3907
    %v4554 = vunpack.c.h.b16 %v3907
    %v4555 = vunpack.c.l.b16 %v3908
    %v4556 = vunpack.c.h.b16 %v3908
    %v4557 = vunpack.c.l.b16 %v3909
    %v4558 = vunpack.c.h.b16 %v3909
    %v4559 = vunpack.c.l.b16 %v3910
    %v4560 = vunpack.c.h.b16 %v3910
    %v4561 = vunpack.c.l.b16 %v3911
    %v4562 = vunpack.c.h.b16 %v3911
    %v4563 = vunpack.c.l.b16 %v3912
    %v4564 = vunpack.c.h.b16 %v3912
    %v4565 = vunpack.c.l.b16 %v3913
    %v4566 = vunpack.c.h.b16 %v3913
    %v4567 = vunpack.c.l.b16 %v3914
    %v4568 = vunpack.c.h.b16 %v3914
    %v4569 = vunpack.c.l.b16 %v3915
    %v4570 = vunpack.c.h.b16 %v3915
    %v4571 = vunpack.c.l.b16 %v3916
    %v4572 = vunpack.c.h.b16 %v3916
    %v4573 = vunpack.c.l.b16 %v3917
    %v4574 = vunpack.c.h.b16 %v3917
    %v4575 = vunpack.c.l.b16 %v3918
    %v4576 = vunpack.c.h.b16 %v3918
    %v4577 = vunpack.c.l.b16 %v3919
    %v4578 = vunpack.c.h.b16 %v3919
    %v4579 = vunpack.c.l.b16 %v3920
    %v4580 = vunpack.c.h.b16 %v3920
    %v4581 = vunpack.c.l.b16 %v3921
    %v4582 = vunpack.c.h.b16 %v3921
    %v4583 = vunpack.c.l.b16 %v3922
    %v4584 = vunpack.c.h.b16 %v3922
    %v4585 = vunpack.c.l.b16 %v3923
    %v4586 = vunpack.c.h.b16 %v3923
    %v4587 = vunpack.c.l.b16 %v3924
    %v4588 = vunpack.c.h.b16 %v3924
    %v4589 = vunpack.c.l.b16 %v3925
    %v4590 = vunpack.c.h.b16 %v3925
    %v4591 = vunpack.c.l.b16 %v3926
    %v4592 = vunpack.c.h.b16 %v3926
    %v4593 = vunpack.c.l.b16 %v3927
    %v4594 = vunpack.c.h.b16 %v3927
    %v4595 = vunpack.c.l.b16 %v3928
    %v4596 = vunpack.c.h.b16 %v3928
    %v4597 = vunpack.c.l.b16 %v3929
    %v4598 = vunpack.c.h.b16 %v3929
    %v4599 = vunpack.c.l.b16 %v3930
    %v4600 = vunpack.c.h.b16 %v3930
    %v4601 = vunpack.c.l.b16 %v3931
    %v4602 = vunpack.c.h.b16 %v3931
    %v4603 = vunpack.c.l.b16 %v3932
    %v4604 = vunpack.c.h.b16 %v3932
    %v4605 = vunpack.c.l.b16 %v3933
    %v4606 = vunpack.c.h.b16 %v3933
    %v4607 = vunpack.c.l.b16 %v3934
    %v4608 = vunpack.c.h.b16 %v3934
    %v4609 = vunpack.c.l.b16 %v3935
    %v4610 = vunpack.c.h.b16 %v3935
    %v4611 = vunpack.c.l.b16 %v3936
    %v4612 = vunpack.c.h.b16 %v3936
    %v4613 = vunpack.c.l.b16 %v3937
    %v4614 = vunpack.c.h.b16 %v3937
    %v4615 = vunpack.c.l.b16 %v3938
    %v4616 = vunpack.c.h.b16 %v3938
    %v4617 = vunpack.c.l.b16 %v3939
    %v4618 = vunpack.c.h.b16 %v3939
    %v4619 = vunpack.c.l.b16 %v3940
    %v4620 = vunpack.c.h.b16 %v3940
    %v4621 = vunpack.c.l.b16 %v3941
    %v4622 = vunpack.c.h.b16 %v3941
    %v4623 = vunpack.c.l.b16 %v3942
    %v4624 = vunpack.c.h.b16 %v3942
    %v4625 = vunpack.c.l.b16 %v3943
    %v4626 = vunpack.c.h.b16 %v3943
    %v4627 = vunpack.c.l.b16 %v3944
    %v4628 = vunpack.c.h.b16 %v3944
    %v4629 = vunpack.c.l.b16 %v3945
    %v4630 = vunpack.c.h.b16 %v3945
    %v4631 = vunpack.c.l.b16 %v3946
    %v4632 = vunpack.c.h.b16 %v3946
    %v4633 = vunpack.c.l.b16 %v3947
    %v4634 = vunpack.c.h.b16 %v3947
    %v4635 = vunpack.c.l.b16 %v3948
    %v4636 = vunpack.c.h.b16 %v3948
    %v4637 = vunpack.c.l.b16 %v3949
    %v4638 = vunpack.c.h.b16 %v3949
    %v4639 = vunpack.c.l.b16 %v3950
    %v4640 = vunpack.c.h.b16 %v3950
    %v4641 = vunpack.c.l.b16 %v3951
    %v4642 = vunpack.c.h.b16 %v3951
    %v4643 = vunpack.c.l.b16 %v3952
    %v4644 = vunpack.c.h.b16 %v3952
    %v4645 = vunpack.c.l.b16 %v3953
    %v4646 = vunpack.c.h.b16 %v3953
    %v4647 = vunpack.c.l.b16 %v3954
    %v4648 = vunpack.c.h.b16 %v3954
    %v4649 = vunpack.c.l.b16 %v3955
    %v4650 = vunpack.c.h.b16 %v3955
    %v4651 = vunpack.c.l.b16 %v3956
    %v4652 = vunpack.c.h.b16 %v3956
    %v4653 = vunpack.c.l.b16 %v3957
    %v4654 = vunpack.c.h.b16 %v3957
    %v4655 = vunpack.c.l.b16 %v3958
    %v4656 = vunpack.c.h.b16 %v3958
    %v4657 = vunpack.c.l.b16 %v3959
    %v4658 = vunpack.c.h.b16 %v3959
    %v4659 = vunpack.c.l.b16 %v3960
    %v4660 = vunpack.c.h.b16 %v3960
    %v4661 = vunpack.c.l.b16 %v3961
    %v4662 = vunpack.c.h.b16 %v3961
    %v4663 = vunpack.c.l.b16 %v3962
    %v4664 = vunpack.c.h.b16 %v3962
    %v4665 = vunpack.c.l.b16 %v3963
    %v4666 = vunpack.c.h.b16 %v3963
    %v4667 = vunpack.c.l.b16 %v3964
    %v4668 = vunpack.c.h.b16 %v3964
    %v4669 = vunpack.c.l.b16 %v3965
    %v4670 = vunpack.c.h.b16 %v3965
    %v4671 = vunpack.c.l.b16 %v3966
    %v4672 = vunpack.c.h.b16 %v3966
    %v4673 = vunpack.c.l.b16 %v3967
    %v4674 = vunpack.c.h.b16 %v3967
    %v4675 = vunpack.c.l.b16 %v3968
    %v4676 = vunpack.c.h.b16 %v3968
    %v4677 = vunpack.c.l.b16 %v3969
    %v4678 = vunpack.c.h.b16 %v3969
    %v4679 = vunpack.c.l.b16 %v3970
    %v4680 = vunpack.c.h.b16 %v3970
    %v4681 = vunpack.c.l.b16 %v3971
    %v4682 = vunpack.c.h.b16 %v3971
    %v4683 = vunpack.c.l.b16 %v3972
    %v4684 = vunpack.c.h.b16 %v3972
    %v4685 = vunpack.c.l.b16 %v3973
    %v4686 = vunpack.c.h.b16 %v3973
    %v4687 = vunpack.c.l.b16 %v3974
    %v4688 = vunpack.c.h.b16 %v3974
    %v4689 = vunpack.c.l.b16 %v3975
    %v4690 = vunpack.c.h.b16 %v3975
    %v4691 = vunpack.c.l.b16 %v3976
    %v4692 = vunpack.c.h.b16 %v3976
    %v4693 = vunpack.c.l.b16 %v3977
    %v4694 = vunpack.c.h.b16 %v3977
    %v4695 = vunpack.c.l.b16 %v3978
    %v4696 = vunpack.c.h.b16 %v3978
    %v4697 = vunpack.c.l.b16 %v3979
    %v4698 = vunpack.c.h.b16 %v3979
    %v4699 = vunpack.c.l.b16 %v3980
    %v4700 = vunpack.c.h.b16 %v3980
    %v4701 = vunpack.c.l.b16 %v3981
    %v4702 = vunpack.c.h.b16 %v3981
    %v4703 = vunpack.c.l.b16 %v3982
    %v4704 = vunpack.c.h.b16 %v3982
    %v4705 = vunpack.c.l.b16 %v3983
    %v4706 = vunpack.c.h.b16 %v3983
    %v4707 = vunpack.c.l.b16 %v3984
    %v4708 = vunpack.c.h.b16 %v3984
    %v4709 = vunpack.c.l.b16 %v3985
    %v4710 = vunpack.c.h.b16 %v3985
    %v4711 = vunpack.c.l.b16 %v3986
    %v4712 = vunpack.c.h.b16 %v3986
    %v4713 = vunpack.c.l.b16 %v3987
    %v4714 = vunpack.c.h.b16 %v3987
    %v4715 = vunpack.c.l.b16 %v3988
    %v4716 = vunpack.c.h.b16 %v3988
    %v4717 = vunpack.c.l.b16 %v3989
    %v4718 = vunpack.c.h.b16 %v3989
    %v4719 = vunpack.c.l.b16 %v3990
    %v4720 = vunpack.c.h.b16 %v3990
    %v4721 = vunpack.c.l.b16 %v3991
    %v4722 = vunpack.c.h.b16 %v3991
    %v4723 = vunpack.c.l.b16 %v3992
    %v4724 = vunpack.c.h.b16 %v3992
    %v4725 = vunpack.c.l.b16 %v3993
    %v4726 = vunpack.c.h.b16 %v3993
    %v4727 = vunpack.c.l.b16 %v3994
    %v4728 = vunpack.c.h.b16 %v3994
    %v4729 = vunpack.c.l.b16 %v3995
    %v4730 = vunpack.c.h.b16 %v3995
    %v4731 = vunpack.c.l.b16 %v3996
    %v4732 = vunpack.c.h.b16 %v3996
    %v4733 = vunpack.c.l.b16 %v3997
    %v4734 = vunpack.c.h.b16 %v3997
    %v4735 = vunpack.c.l.b16 %v3998
    %v4736 = vunpack.c.h.b16 %v3998
    %v4737 = vunpack.c.l.b16 %v3999
    %v4738 = vunpack.c.h.b16 %v3999
    %v4739 = vunpack.c.l.b16 %v4000
    %v4740 = vunpack.c.h.b16 %v4000
    %v4741 = vunpack.c.l.b16 %v4001
    %v4742 = vunpack.c.h.b16 %v4001
    %v4743 = vunpack.c.l.b16 %v4002
    %v4744 = vunpack.c.h.b16 %v4002
    %v4745 = vunpack.c.l.b16 %v4003
    %v4746 = vunpack.c.h.b16 %v4003
    %v4747 = vunpack.c.l.b16 %v4004
    %v4748 = vunpack.c.h.b16 %v4004
    %v4749 = vunpack.c.l.b16 %v4005
    %v4750 = vunpack.c.h.b16 %v4005
    %v4751 = vunpack.c.l.b16 %v4006
    %v4752 = vunpack.c.h.b16 %v4006
    %v4753 = vunpack.c.l.b16 %v4007
    %v4754 = vunpack.c.h.b16 %v4007
    %v4755 = vunpack.c.l.b16 %v4008
    %v4756 = vunpack.c.h.b16 %v4008
    %v4757 = vunpack.c.l.b16 %v4009
    %v4758 = vunpack.c.h.b16 %v4009
    %v4759 = vunpack.c.l.b16 %v4010
    %v4760 = vunpack.c.h.b16 %v4010
    %v4761 = vunpack.c.l.b16 %v4011
    %v4762 = vunpack.c.h.b16 %v4011
    %v4763 = vunpack.c.l.b16 %v4012
    %v4764 = vunpack.c.h.b16 %v4012
    %v4765 = vunpack.c.l.b16 %v4013
    %v4766 = vunpack.c.h.b16 %v4013
    %v4767 = vunpack.c.l.b16 %v4014
    %v4768 = vunpack.c.h.b16 %v4014
    %v4769 = vunpack.c.l.b16 %v4015
    %v4770 = vunpack.c.h.b16 %v4015
    %v4771 = vunpack.c.l.b16 %v4016
    %v4772 = vunpack.c.h.b16 %v4016
    %v4773 = vunpack.c.l.b16 %v4017
    %v4774 = vunpack.c.h.b16 %v4017
    %v4775 = vunpack.c.l.b16 %v4018
    %v4776 = vunpack.c.h.b16 %v4018
    %v4777 = vunpack.c.l.b16 %v4019
    %v4778 = vunpack.c.h.b16 %v4019
    %v4779 = vunpack.c.l.b16 %v4020
    %v4780 = vunpack.c.h.b16 %v4020
    %v4781 = vunpack.c.l.b16 %v4021
    %v4782 = vunpack.c.h.b16 %v4021
    %v4783 = vunpack.c.l.b16 %v4022
    %v4784 = vunpack.c.h.b16 %v4022
    %v4785 = vunpack.c.l.b16 %v4023
    %v4786 = vunpack.c.h.b16 %v4023
    %v4787 = vunpack.c.l.b16 %v4024
    %v4788 = vunpack.c.h.b16 %v4024
    %v4789 = vunpack.c.l.b16 %v4025
    %v4790 = vunpack.c.h.b16 %v4025
    %v4791 = vunpack.c.l.b16 %v4026
    %v4792 = vunpack.c.h.b16 %v4026
    %v4793 = vunpack.c.l.b16 %v4027
    %v4794 = vunpack.c.h.b16 %v4027
    %v4795 = vunpack.c.l.b16 %v4028
    %v4796 = vunpack.c.h.b16 %v4028
    %v4797 = vunpack.c.l.b16 %v4029
    %v4798 = vunpack.c.h.b16 %v4029
    %v4799 = vunpack.c.l.b16 %v4030
    %v4800 = vunpack.c.h.b16 %v4030
    %v4801 = vunpack.c.l.b16 %v4031
    %v4802 = vunpack.c.h.b16 %v4031
    %v4803 = vunpack.c.l.b16 %v4032
    %v4804 = vunpack.c.h.b16 %v4032
    %v4805 = vunpack.c.l.b16 %v4033
    %v4806 = vunpack.c.h.b16 %v4033
    %v4807 = vunpack.c.l.b16 %v4034
    %v4808 = vunpack.c.h.b16 %v4034
    %v4809 = vunpack.c.l.b16 %v4035
    %v4810 = vunpack.c.h.b16 %v4035
    %v4811 = vunpack.c.l.b16 %v4036
    %v4812 = vunpack.c.h.b16 %v4036
    %v4813 = vunpack.c.l.b16 %v4037
    %v4814 = vunpack.c.h.b16 %v4037
    %v4815 = vunpack.c.l.b16 %v4038
    %v4816 = vunpack.c.h.b16 %v4038
    %v4817 = vunpack.c.l.b16 %v4039
    %v4818 = vunpack.c.h.b16 %v4039
    %v4819 = vunpack.c.l.b16 %v4040
    %v4820 = vunpack.c.h.b16 %v4040
    %v4821 = vunpack.c.l.b16 %v4041
    %v4822 = vunpack.c.h.b16 %v4041
    %v4823 = vunpack.c.l.b16 %v4042
    %v4824 = vunpack.c.h.b16 %v4042
    %v4825 = vunpack.c.l.b16 %v4043
    %v4826 = vunpack.c.h.b16 %v4043
    %v4827 = vunpack.c.l.b16 %v4044
    %v4828 = vunpack.c.h.b16 %v4044
    %v4829 = vunpack.c.l.b16 %v4045
    %v4830 = vunpack.c.h.b16 %v4045
    %v4831 = vunpack.c.l.b16 %v4046
    %v4832 = vunpack.c.h.b16 %v4046
    %v4833 = vunpack.c.l.b16 %v4047
    %v4834 = vunpack.c.h.b16 %v4047
    %v4835 = vunpack.c.l.b16 %v4048
    %v4836 = vunpack.c.h.b16 %v4048
    %v4837 = vunpack.c.l.b16 %v4049
    %v4838 = vunpack.c.h.b16 %v4049
    %v4839 = vunpack.c.l.b16 %v4050
    %v4840 = vunpack.c.h.b16 %v4050
    %v4841 = vpack.c.b16 %v4333, %v4329
    %v4842 = vpack.c.b16 %v4334, %v4330
    %v4843 = vpack.c.b16 %v4335, %v4331
    %v4844 = vpack.c.b16 %v4336, %v4332
    %v4845 = vpack.c.b16 %v4341, %v4337
    %v4846 = vpack.c.b16 %v4342, %v4338
    %v4847 = vpack.c.b16 %v4343, %v4339
    %v4848 = vpack.c.b16 %v4344, %v4340
    %v4849 = vpack.c.b16 %v4349, %v4345
    %v4850 = vpack.c.b16 %v4350, %v4346
    %v4851 = vpack.c.b16 %v4351, %v4347
    %v4852 = vpack.c.b16 %v4352, %v4348
    %v4853 = vpack.c.b16 %v4357, %v4353
    %v4854 = vpack.c.b16 %v4358, %v4354
    %v4855 = vpack.c.b16 %v4359, %v4355
    %v4856 = vpack.c.b16 %v4360, %v4356
    %v4857 = vpack.c.b16 %v4365, %v4361
    %v4858 = vpack.c.b16 %v4366, %v4362
    %v4859 = vpack.c.b16 %v4367, %v4363
    %v4860 = vpack.c.b16 %v4368, %v4364
    %v4861 = vpack.c.b16 %v4373, %v4369
    %v4862 = vpack.c.b16 %v4374, %v4370
    %v4863 = vpack.c.b16 %v4375, %v4371
    %v4864 = vpack.c.b16 %v4376, %v4372
    %v4865 = vpack.c.b16 %v4381, %v4377
    %v4866 = vpack.c.b16 %v4382, %v4378
    %v4867 = vpack.c.b16 %v4383, %v4379
    %v4868 = vpack.c.b16 %v4384, %v4380
    %v4869 = vpack.c.b16 %v4389, %v4385
    %v4870 = vpack.c.b16 %v4390, %v4386
    %v4871 = vpack.c.b16 %v4391, %v4387
    %v4872 = vpack.c.b16 %v4392, %v4388
    %v4873 = vpack.c.b16 %v4397, %v4393
    %v4874 = vpack.c.b16 %v4398, %v4394
    %v4875 = vpack.c.b16 %v4399, %v4395
    %v4876 = vpack.c.b16 %v4400, %v4396
    %v4877 = vpack.c.b16 %v4405, %v4401
    %v4878 = vpack.c.b16 %v4406, %v4402
    %v4879 = vpack.c.b16 %v4407, %v4403
    %v4880 = vpack.c.b16 %v4408, %v4404
    %v4881 = vpack.c.b16 %v4413, %v4409
    %v4882 = vpack.c.b16 %v4414, %v4410
    %v4883 = vpack.c.b16 %v4415, %v4411
    %v4884 = vpack.c.b16 %v4416, %v4412
    %v4885 = vpack.c.b16 %v4421, %v4417
    %v4886 = vpack.c.b16 %v4422, %v4418
    %v4887 = vpack.c.b16 %v4423, %v4419
    %v4888 = vpack.c.b16 %v4424, %v4420
    %v4889 = vpack.c.b16 %v4429, %v4425
    %v4890 = vpack.c.b16 %v4430, %v4426
    %v4891 = vpack.c.b16 %v4431, %v4427
    %v4892 = vpack.c.b16 %v4432, %v4428
    %v4893 = vpack.c.b16 %v4437, %v4433
    %v4894 = vpack.c.b16 %v4438, %v4434
    %v4895 = vpack.c.b16 %v4439, %v4435
    %v4896 = vpack.c.b16 %v4440, %v4436
    %v4897 = vpack.c.b16 %v4445, %v4441
    %v4898 = vpack.c.b16 %v4446, %v4442
    %v4899 = vpack.c.b16 %v4447, %v4443
    %v4900 = vpack.c.b16 %v4448, %v4444
    %v4901 = vpack.c.b16 %v4453, %v4449
    %v4902 = vpack.c.b16 %v4454, %v4450
    %v4903 = vpack.c.b16 %v4455, %v4451
    %v4904 = vpack.c.b16 %v4456, %v4452
    %v4905 = vpack.c.b16 %v4461, %v4457
    %v4906 = vpack.c.b16 %v4462, %v4458
    %v4907 = vpack.c.b16 %v4463, %v4459
    %v4908 = vpack.c.b16 %v4464, %v4460
    %v4909 = vpack.c.b16 %v4469, %v4465
    %v4910 = vpack.c.b16 %v4470, %v4466
    %v4911 = vpack.c.b16 %v4471, %v4467
    %v4912 = vpack.c.b16 %v4472, %v4468
    %v4913 = vpack.c.b16 %v4477, %v4473
    %v4914 = vpack.c.b16 %v4478, %v4474
    %v4915 = vpack.c.b16 %v4479, %v4475
    %v4916 = vpack.c.b16 %v4480, %v4476
    %v4917 = vpack.c.b16 %v4485, %v4481
    %v4918 = vpack.c.b16 %v4486, %v4482
    %v4919 = vpack.c.b16 %v4487, %v4483
    %v4920 = vpack.c.b16 %v4488, %v4484
    %v4921 = vpack.c.b16 %v4493, %v4489
    %v4922 = vpack.c.b16 %v4494, %v4490
    %v4923 = vpack.c.b16 %v4495, %v4491
    %v4924 = vpack.c.b16 %v4496, %v4492
    %v4925 = vpack.c.b16 %v4501, %v4497
    %v4926 = vpack.c.b16 %v4502, %v4498
    %v4927 = vpack.c.b16 %v4503, %v4499
    %v4928 = vpack.c.b16 %v4504, %v4500
    %v4929 = vpack.c.b16 %v4509, %v4505
    %v4930 = vpack.c.b16 %v4510, %v4506
    %v4931 = vpack.c.b16 %v4511, %v4507
    %v4932 = vpack.c.b16 %v4512, %v4508
    %v4933 = vpack.c.b16 %v4517, %v4513
    %v4934 = vpack.c.b16 %v4518, %v4514
    %v4935 = vpack.c.b16 %v4519, %v4515
    %v4936 = vpack.c.b16 %v4520, %v4516
    %v4937 = vpack.c.b16 %v4525, %v4521
    %v4938 = vpack.c.b16 %v4526, %v4522
    %v4939 = vpack.c.b16 %v4527, %v4523
    %v4940 = vpack.c.b16 %v4528, %v4524
    %v4941 = vpack.c.b16 %v4533, %v4529
    %v4942 = vpack.c.b16 %v4534, %v4530
    %v4943 = vpack.c.b16 %v4535, %v4531
    %v4944 = vpack.c.b16 %v4536, %v4532
    %v4945 = vpack.c.b16 %v4541, %v4537
    %v4946 = vpack.c.b16 %v4542, %v4538
    %v4947 = vpack.c.b16 %v4543, %v4539
    %v4948 = vpack.c.b16 %v4544, %v4540
    %v4949 = vpack.c.b16 %v4549, %v4545
    %v4950 = vpack.c.b16 %v4550, %v4546
    %v4951 = vpack.c.b16 %v4551, %v4547
    %v4952 = vpack.c.b16 %v4552, %v4548
    %v4953 = vpack.c.b16 %v4557, %v4553
    %v4954 = vpack.c.b16 %v4558, %v4554
    %v4955 = vpack.c.b16 %v4559, %v4555
    %v4956 = vpack.c.b16 %v4560, %v4556
    %v4957 = vpack.c.b16 %v4565, %v4561
    %v4958 = vpack.c.b16 %v4566, %v4562
    %v4959 = vpack.c.b16 %v4567, %v4563
    %v4960 = vpack.c.b16 %v4568, %v4564
    %v4961 = vpack.c.b16 %v4573, %v4569
    %v4962 = vpack.c.b16 %v4574, %v4570
    %v4963 = vpack.c.b16 %v4575, %v4571
    %v4964 = vpack.c.b16 %v4576, %v4572
    %v4965 = vpack.c.b16 %v4581, %v4577
    %v4966 = vpack.c.b16 %v4582, %v4578
    %v4967 = vpack.c.b16 %v4583, %v4579
    %v4968 = vpack.c.b16 %v4584, %v4580
    %v4969 = vpack.c.b16 %v4589, %v4585
    %v4970 = vpack.c.b16 %v4590, %v4586
    %v4971 = vpack.c.b16 %v4591, %v4587
    %v4972 = vpack.c.b16 %v4592, %v4588
    %v4973 = vpack.c.b16 %v4597, %v4593
    %v4974 = vpack.c.b16 %v4598, %v4594
    %v4975 = vpack.c.b16 %v4599, %v4595
    %v4976 = vpack.c.b16 %v4600, %v4596
    %v4977 = vpack.c.b16 %v4605, %v4601
    %v4978 = vpack.c.b16 %v4606, %v4602
    %v4979 = vpack.c.b16 %v4607, %v4603
    %v4980 = vpack.c.b16 %v4608, %v4604
    %v4981 = vpack.c.b16 %v4613, %v4609
    %v4982 = vpack.c.b16 %v4614, %v4610
    %v4983 = vpack.c.b16 %v4615, %v4611
    %v4984 = vpack.c.b16 %v4616, %v4612
    %v4985 = vpack.c.b16 %v4621, %v4617
    %v4986 = vpack.c.b16 %v4622, %v4618
    %v4987 = vpack.c.b16 %v4623, %v4619
    %v4988 = vpack.c.b16 %v4624, %v4620
    %v4989 = vpack.c.b16 %v4629, %v4625
    %v4990 = vpack.c.b16 %v4630, %v4626
    %v4991 = vpack.c.b16 %v4631, %v4627
    %v4992 = vpack.c.b16 %v4632, %v4628
    %v4993 = vpack.c.b16 %v4637, %v4633
    %v4994 = vpack.c.b16 %v4638, %v4634
    %v4995 = vpack.c.b16 %v4639, %v4635
    %v4996 = vpack.c.b16 %v4640, %v4636
    %v4997 = vpack.c.b16 %v4645, %v4641
    %v4998 = vpack.c.b16 %v4646, %v4642
    %v4999 = vpack.c.b16 %v4647, %v4643
    %v5000 = vpack.c.b16 %v4648, %v4644
    %v5001 = vpack.c.b16 %v4653, %v4649
    %v5002 = vpack.c.b16 %v4654, %v4650
    %v5003 = vpack.c.b16 %v4655, %v4651
    %v5004 = vpack.c.b16 %v4656, %v4652
    %v5005 = vpack.c.b16 %v4661, %v4657
    %v5006 = vpack.c.b16 %v4662, %v4658
    %v5007 = vpack.c.b16 %v4663, %v4659
    %v5008 = vpack.c.b16 %v4664, %v4660
    %v5009 = vpack.c.b16 %v4669, %v4665
    %v5010 = vpack.c.b16 %v4670, %v4666
    %v5011 = vpack.c.b16 %v4671, %v4667
    %v5012 = vpack.c.b16 %v4672, %v4668
    %v5013 = vpack.c.b16 %v4677, %v4673
    %v5014 = vpack.c.b16 %v4678, %v4674
    %v5015 = vpack.c.b16 %v4679, %v4675
    %v5016 = vpack.c.b16 %v4680, %v4676
    %v5017 = vpack.c.b16 %v4685, %v4681
    %v5018 = vpack.c.b16 %v4686, %v4682
    %v5019 = vpack.c.b16 %v4687, %v4683
    %v5020 = vpack.c.b16 %v4688, %v4684
    %v5021 = vpack.c.b16 %v4693, %v4689
    %v5022 = vpack.c.b16 %v4694, %v4690
    %v5023 = vpack.c.b16 %v4695, %v4691
    %v5024 = vpack.c.b16 %v4696, %v4692
    %v5025 = vpack.c.b16 %v4701, %v4697
    %v5026 = vpack.c.b16 %v4702, %v4698
    %v5027 = vpack.c.b16 %v4703, %v4699
    %v5028 = vpack.c.b16 %v4704, %v4700
    %v5029 = vpack.c.b16 %v4709, %v4705
    %v5030 = vpack.c.b16 %v4710, %v4706
    %v5031 = vpack.c.b16 %v4711, %v4707
    %v5032 = vpack.c.b16 %v4712, %v4708
    %v5033 = vpack.c.b16 %v4717, %v4713
    %v5034 = vpack.c.b16 %v4718, %v4714
    %v5035 = vpack.c.b16 %v4719, %v4715
    %v5036 = vpack.c.b16 %v4720, %v4716
    %v5037 = vpack.c.b16 %v4725, %v4721
    %v5038 = vpack.c.b16 %v4726, %v4722
    %v5039 = vpack.c.b16 %v4727, %v4723
    %v5040 = vpack.c.b16 %v4728, %v4724
    %v5041 = vpack.c.b16 %v4733, %v4729
    %v5042 = vpack.c.b16 %v4734, %v4730
    %v5043 = vpack.c.b16 %v4735, %v4731
    %v5044 = vpack.c.b16 %v4736, %v4732
    %v5045 = vpack.c.b16 %v4741, %v4737
    %v5046 = vpack.c.b16 %v4742, %v4738
    %v5047 = vpack.c.b16 %v4743, %v4739
    %v5048 = vpack.c.b16 %v4744, %v4740
    %v5049 = vpack.c.b16 %v4749, %v4745
    %v5050 = vpack.c.b16 %v4750, %v4746
    %v5051 = vpack.c.b16 %v4751, %v4747
    %v5052 = vpack.c.b16 %v4752, %v4748
    %v5053 = vpack.c.b16 %v4757, %v4753
    %v5054 = vpack.c.b16 %v4758, %v4754
    %v5055 = vpack.c.b16 %v4759, %v4755
    %v5056 = vpack.c.b16 %v4760, %v4756
    %v5057 = vpack.c.b16 %v4765, %v4761
    %v5058 = vpack.c.b16 %v4766, %v4762
    %v5059 = vpack.c.b16 %v4767, %v4763
    %v5060 = vpack.c.b16 %v4768, %v4764
    %v5061 = vpack.c.b16 %v4773, %v4769
    %v5062 = vpack.c.b16 %v4774, %v4770
    %v5063 = vpack.c.b16 %v4775, %v4771
    %v5064 = vpack.c.b16 %v4776, %v4772
    %v5065 = vpack.c.b16 %v4781, %v4777
    %v5066 = vpack.c.b16 %v4782, %v4778
    %v5067 = vpack.c.b16 %v4783, %v4779
    %v5068 = vpack.c.b16 %v4784, %v4780
    %v5069 = vpack.c.b16 %v4789, %v4785
    %v5070 = vpack.c.b16 %v4790, %v4786
    %v5071 = vpack.c.b16 %v4791, %v4787
    %v5072 = vpack.c.b16 %v4792, %v4788
    %v5073 = vpack.c.b16 %v4797, %v4793
    %v5074 = vpack.c.b16 %v4798, %v4794
    %v5075 = vpack.c.b16 %v4799, %v4795
    %v5076 = vpack.c.b16 %v4800, %v4796
    %v5077 = vpack.c.b16 %v4805, %v4801
    %v5078 = vpack.c.b16 %v4806, %v4802
    %v5079 = vpack.c.b16 %v4807, %v4803
    %v5080 = vpack.c.b16 %v4808, %v4804
    %v5081 = vpack.c.b16 %v4813, %v4809
    %v5082 = vpack.c.b16 %v4814, %v4810
    %v5083 = vpack.c.b16 %v4815, %v4811
    %v5084 = vpack.c.b16 %v4816, %v4812
    %v5085 = vpack.c.b16 %v4821, %v4817
    %v5086 = vpack.c.b16 %v4822, %v4818
    %v5087 = vpack.c.b16 %v4823, %v4819
    %v5088 = vpack.c.b16 %v4824, %v4820
    %v5089 = vpack.c.b16 %v4829, %v4825
    %v5090 = vpack.c.b16 %v4830, %v4826
    %v5091 = vpack.c.b16 %v4831, %v4827
    %v5092 = vpack.c.b16 %v4832, %v4828
    %v5093 = vpack.c.b16 %v4837, %v4833
    %v5094 = vpack.c.b16 %v4838, %v4834
    %v5095 = vpack.c.b16 %v4839, %v4835
    %v5096 = vpack.c.b16 %v4840, %v4836
    %5353 = vmatprep.subr.bf16.mxu0 %v4842
    %5354 = vmatpush1.bf16.msra.mxu0 %v4841
    %5355 = vmatprep.subr.bf16.mxu0 %v4846
    %5356 = vmatpush1.bf16.msra.mxu0 %v4845
    %5357 = vmatprep.subr.bf16.mxu0 %v4850
    %5358 = vmatpush1.bf16.msra.mxu0 %v4849
    %5359 = vmatprep.subr.bf16.mxu0 %v4854
    %5360 = vmatpush1.bf16.msra.mxu0 %v4853
    %5361 = vmatprep.subr.bf16.mxu0 %v4858
    %5362 = vmatpush1.bf16.msra.mxu0 %v4857
    %5363 = vmatprep.subr.bf16.mxu0 %v4862
    %5364 = vmatpush1.bf16.msra.mxu0 %v4861
    %5365 = vmatprep.subr.bf16.mxu0 %v4866
    %5366 = vmatpush1.bf16.msra.mxu0 %v4865
    %5367 = vmatprep.subr.bf16.mxu0 %v4870
    %5368 = vmatpush1.bf16.msra.mxu0 %v4869
    %5369 = vmatprep.subr.bf16.mxu0 %v4874
    %5370 = vmatpush1.bf16.msra.mxu0 %v4873
    %5371 = vmatprep.subr.bf16.mxu0 %v4878
    %5372 = vmatpush1.bf16.msra.mxu0 %v4877
    %5373 = vmatprep.subr.bf16.mxu0 %v4882
    %5374 = vmatpush1.bf16.msra.mxu0 %v4881
    %5375 = vmatprep.subr.bf16.mxu0 %v4886
    %5376 = vmatpush1.bf16.msra.mxu0 %v4885
    %5377 = vmatprep.subr.bf16.mxu0 %v4890
    %5378 = vmatpush1.bf16.msra.mxu0 %v4889
    %5379 = vmatprep.subr.bf16.mxu0 %v4894
    %5380 = vmatpush1.bf16.msra.mxu0 %v4893
    %5381 = vmatprep.subr.bf16.mxu0 %v4898
    %5382 = vmatpush1.bf16.msra.mxu0 %v4897
    %5383 = vmatprep.subr.bf16.mxu0 %v4902
    %5384 = vmatpush1.bf16.msra.mxu0 %v4901
    %5385 = vmatprep.mubr.bf16.mxu0 %v3788
    %5386 = vmatmul.mubr.bf16.gmra.mrb[0].mxu0 %v3787
    %v5387 = vpop.f32.mrb[0].mxu0
    %v5388 = vadd.f32 %v4056, %v5387
    %v5389 = vpop.f32.mrb[0].mxu0
    %v5390 = vadd.f32 %v4060, %v5389
    %v5391 = vpop.f32.mrb[0].mxu0
    %v5392 = vadd.f32 %v4056, %v5391
    %v5393 = vpop.f32.mrb[0].mxu0
    %v5394 = vadd.f32 %v4060, %v5393
    %5395 = vdwg.mxu0
    %5396 = vmatprep.subr.bf16.mxu0 %v4906
    %5397 = vmatpush1.bf16.msra.mxu0 %v4905
    %5398 = vmatprep.subr.bf16.mxu0 %v4910
    %5399 = vmatpush1.bf16.msra.mxu0 %v4909
    %5400 = vmatprep.subr.bf16.mxu0 %v4914
    %5401 = vmatpush1.bf16.msra.mxu0 %v4913
    %5402 = vmatprep.subr.bf16.mxu0 %v4918
    %5403 = vmatpush1.bf16.msra.mxu0 %v4917
    %5404 = vmatprep.subr.bf16.mxu0 %v4922
    %5405 = vmatpush1.bf16.msra.mxu0 %v4921
    %5406 = vmatprep.subr.bf16.mxu0 %v4926
    %5407 = vmatpush1.bf16.msra.mxu0 %v4925
    %5408 = vmatprep.subr.bf16.mxu0 %v4930
    %5409 = vmatpush1.bf16.msra.mxu0 %v4929
    %5410 = vmatprep.subr.bf16.mxu0 %v4934
    %5411 = vmatpush1.bf16.msra.mxu0 %v4933
    %5412 = vmatprep.subr.bf16.mxu0 %v4938
    %5413 = vmatpush1.bf16.msra.mxu0 %v4937
    %5414 = vmatprep.subr.bf16.mxu0 %v4942
    %5415 = vmatpush1.bf16.msra.mxu0 %v4941
    %5416 = vmatprep.subr.bf16.mxu0 %v4946
    %5417 = vmatpush1.bf16.msra.mxu0 %v4945
    %5418 = vmatprep.subr.bf16.mxu0 %v4950
    %5419 = vmatpush1.bf16.msra.mxu0 %v4949
    %5420 = vmatprep.subr.bf16.mxu0 %v4954
    %5421 = vmatpush1.bf16.msra.mxu0 %v4953
    %5422 = vmatprep.subr.bf16.mxu0 %v4958
    %5423 = vmatpush1.bf16.msra.mxu0 %v4957
    %5424 = vmatprep.subr.bf16.mxu0 %v4962
    %5425 = vmatpush1.bf16.msra.mxu0 %v4961
    %5426 = vmatprep.subr.bf16.mxu0 %v4966
    %5427 = vmatpush1.bf16.msra.mxu0 %v4965
    %5428 = vmatprep.mubr.bf16.mxu0 %v3790
    %5429 = vmatmul.mubr.bf16.gmra.mrb[0].mxu0 %v3789
    %v5430 = vpop.f32.mrb[0].mxu0
    %v5431 = vadd.f32 %v5388, %v5430
    %v5432 = vpop.f32.mrb[0].mxu0
    %v5433 = vadd.f32 %v5390, %v5432
    %v5434 = vpop.f32.mrb[0].mxu0
    %v5435 = vadd.f32 %v5392, %v5434
    %v5436 = vpop.f32.mrb[0].mxu0
    %v5437 = vadd.f32 %v5394, %v5436
    %5438 = vdwg.mxu0
    %5439 = vmatprep.subr.bf16.mxu0 %v4970
    %5440 = vmatpush1.bf16.msra.mxu0 %v4969
    %5441 = vmatprep.subr.bf16.mxu0 %v4974
    %5442 = vmatpush1.bf16.msra.mxu0 %v4973
    %5443 = vmatprep.subr.bf16.mxu0 %v4978
    %5444 = vmatpush1.bf16.msra.mxu0 %v4977
    %5445 = vmatprep.subr.bf16.mxu0 %v4982
    %5446 = vmatpush1.bf16.msra.mxu0 %v4981
    %5447 = vmatprep.subr.bf16.mxu0 %v4986
    %5448 = vmatpush1.bf16.msra.mxu0 %v4985
    %5449 = vmatprep.subr.bf16.mxu0 %v4990
    %5450 = vmatpush1.bf16.msra.mxu0 %v4989
    %5451 = vmatprep.subr.bf16.mxu0 %v4994
    %5452 = vmatpush1.bf16.msra.mxu0 %v4993
    %5453 = vmatprep.subr.bf16.mxu0 %v4998
    %5454 = vmatpush1.bf16.msra.mxu0 %v4997
    %5455 = vmatprep.subr.bf16.mxu0 %v5002
    %5456 = vmatpush1.bf16.msra.mxu0 %v5001
    %5457 = vmatprep.subr.bf16.mxu0 %v5006
    %5458 = vmatpush1.bf16.msra.mxu0 %v5005
    %5459 = vmatprep.subr.bf16.mxu0 %v5010
    %5460 = vmatpush1.bf16.msra.mxu0 %v5009
    %5461 = vmatprep.subr.bf16.mxu0 %v5014
    %5462 = vmatpush1.bf16.msra.mxu0 %v5013
    %5463 = vmatprep.subr.bf16.mxu0 %v5018
    %5464 = vmatpush1.bf16.msra.mxu0 %v5017
    %5465 = vmatprep.subr.bf16.mxu0 %v5022
    %5466 = vmatpush1.bf16.msra.mxu0 %v5021
    %5467 = vmatprep.subr.bf16.mxu0 %v5026
    %5468 = vmatpush1.bf16.msra.mxu0 %v5025
    %5469 = vmatprep.subr.bf16.mxu0 %v5030
    %5470 = vmatpush1.bf16.msra.mxu0 %v5029
    %5471 = vmatprep.mubr.bf16.mxu0 %v3792
    %5472 = vmatmul.mubr.bf16.gmra.mrb[0].mxu0 %v3791
    %v5473 = vpop.f32.mrb[0].mxu0
    %v5474 = vadd.f32 %v5431, %v5473
    %v5475 = vpop.f32.mrb[0].mxu0
    %v5476 = vadd.f32 %v5433, %v5475
    %v5477 = vpop.f32.mrb[0].mxu0
    %v5478 = vadd.f32 %v5435, %v5477
    %v5479 = vpop.f32.mrb[0].mxu0
    %v5480 = vadd.f32 %v5437, %v5479
    %5481 = vdwg.mxu0
    %5482 = vmatprep.subr.bf16.mxu0 %v5034
    %5483 = vmatpush1.bf16.msra.mxu0 %v5033
    %5484 = vmatprep.subr.bf16.mxu0 %v5038
    %5485 = vmatpush1.bf16.msra.mxu0 %v5037
    %5486 = vmatprep.subr.bf16.mxu0 %v5042
    %5487 = vmatpush1.bf16.msra.mxu0 %v5041
    %5488 = vmatprep.subr.bf16.mxu0 %v5046
    %5489 = vmatpush1.bf16.msra.mxu0 %v5045
    %5490 = vmatprep.subr.bf16.mxu0 %v5050
    %5491 = vmatpush1.bf16.msra.mxu0 %v5049
    %5492 = vmatprep.subr.bf16.mxu0 %v5054
    %5493 = vmatpush1.bf16.msra.mxu0 %v5053
    %5494 = vmatprep.subr.bf16.mxu0 %v5058
    %5495 = vmatpush1.bf16.msra.mxu0 %v5057
    %5496 = vmatprep.subr.bf16.mxu0 %v5062
    %5497 = vmatpush1.bf16.msra.mxu0 %v5061
    %5498 = vmatprep.subr.bf16.mxu0 %v5066
    %5499 = vmatpush1.bf16.msra.mxu0 %v5065
    %5500 = vmatprep.subr.bf16.mxu0 %v5070
    %5501 = vmatpush1.bf16.msra.mxu0 %v5069
    %5502 = vmatprep.subr.bf16.mxu0 %v5074
    %5503 = vmatpush1.bf16.msra.mxu0 %v5073
    %5504 = vmatprep.subr.bf16.mxu0 %v5078
    %5505 = vmatpush1.bf16.msra.mxu0 %v5077
    %5506 = vmatprep.subr.bf16.mxu0 %v5082
    %5507 = vmatpush1.bf16.msra.mxu0 %v5081
    %5508 = vmatprep.subr.bf16.mxu0 %v5086
    %5509 = vmatpush1.bf16.msra.mxu0 %v5085
    %5510 = vmatprep.subr.bf16.mxu0 %v5090
    %5511 = vmatpush1.bf16.msra.mxu0 %v5089
    %5512 = vmatprep.subr.bf16.mxu0 %v5094
    %5513 = vmatpush1.bf16.msra.mxu0 %v5093
    %5514 = vmatprep.mubr.bf16.mxu0 %v3794
    %5515 = vmatmul.mubr.bf16.gmra.mrb[0].mxu0 %v3793
    %v5516 = vpop.f32.mrb[0].mxu0
    %v5517 = vadd.f32 %v5474, %v5516
    %v5518 = vpop.f32.mrb[0].mxu0
    %v5519 = vadd.f32 %v5476, %v5518
    %v5520 = vpop.f32.mrb[0].mxu0
    %v5521 = vadd.f32 %v5478, %v5520
    %v5522 = vpop.f32.mrb[0].mxu0
    %v5523 = vadd.f32 %v5480, %v5522
    %5524 = vdwg.mxu0
    %5525 = vmatprep.subr.bf16.mxu0 %v4844
    %5526 = vmatpush1.bf16.msra.mxu0 %v4843
    %5527 = vmatprep.subr.bf16.mxu0 %v4848
    %5528 = vmatpush1.bf16.msra.mxu0 %v4847
    %5529 = vmatprep.subr.bf16.mxu0 %v4852
    %5530 = vmatpush1.bf16.msra.mxu0 %v4851
    %5531 = vmatprep.subr.bf16.mxu0 %v4856
    %5532 = vmatpush1.bf16.msra.mxu0 %v4855
    %5533 = vmatprep.subr.bf16.mxu0 %v4860
    %5534 = vmatpush1.bf16.msra.mxu0 %v4859
    %5535 = vmatprep.subr.bf16.mxu0 %v4864
    %5536 = vmatpush1.bf16.msra.mxu0 %v4863
    %5537 = vmatprep.subr.bf16.mxu0 %v4868
    %5538 = vmatpush1.bf16.msra.mxu0 %v4867
    %5539 = vmatprep.subr.bf16.mxu0 %v4872
    %5540 = vmatpush1.bf16.msra.mxu0 %v4871
    %5541 = vmatprep.subr.bf16.mxu0 %v4876
    %5542 = vmatpush1.bf16.msra.mxu0 %v4875
    %5543 = vmatprep.subr.bf16.mxu0 %v4880
    %5544 = vmatpush1.bf16.msra.mxu0 %v4879
    %5545 = vmatprep.subr.bf16.mxu0 %v4884
    %5546 = vmatpush1.bf16.msra.mxu0 %v4883
    %5547 = vmatprep.subr.bf16.mxu0 %v4888
    %5548 = vmatpush1.bf16.msra.mxu0 %v4887
    %5549 = vmatprep.subr.bf16.mxu0 %v4892
    %5550 = vmatpush1.bf16.msra.mxu0 %v4891
    %5551 = vmatprep.subr.bf16.mxu0 %v4896
    %5552 = vmatpush1.bf16.msra.mxu0 %v4895
    %5553 = vmatprep.subr.bf16.mxu0 %v4900
    %5554 = vmatpush1.bf16.msra.mxu0 %v4899
    %5555 = vmatprep.subr.bf16.mxu0 %v4904
    %5556 = vmatpush1.bf16.msra.mxu0 %v4903
    %5557 = vmatprep.mubr.bf16.mxu0 %v3788
    %5558 = vmatmul.mubr.bf16.gmra.mrb[0].mxu0 %v3787
    %v5559 = vpop.f32.mrb[0].mxu0
    %v5560 = vadd.f32 %v4064, %v5559
    %v5561 = vpop.f32.mrb[0].mxu0
    %v5562 = vadd.f32 %v4068, %v5561
    %v5563 = vpop.f32.mrb[0].mxu0
    %v5564 = vadd.f32 %v4064, %v5563
    %v5565 = vpop.f32.mrb[0].mxu0
    %v5566 = vadd.f32 %v4068, %v5565
    %5567 = vdwg.mxu0
    %5568 = vmatprep.subr.bf16.mxu0 %v4908
    %5569 = vmatpush1.bf16.msra.mxu0 %v4907
    %5570 = vmatprep.subr.bf16.mxu0 %v4912
    %5571 = vmatpush1.bf16.msra.mxu0 %v4911
    %5572 = vmatprep.subr.bf16.mxu0 %v4916
    %5573 = vmatpush1.bf16.msra.mxu0 %v4915
    %5574 = vmatprep.subr.bf16.mxu0 %v4920
    %5575 = vmatpush1.bf16.msra.mxu0 %v4919
    %5576 = vmatprep.subr.bf16.mxu0 %v4924
    %5577 = vmatpush1.bf16.msra.mxu0 %v4923
    %5578 = vmatprep.subr.bf16.mxu0 %v4928
    %5579 = vmatpush1.bf16.msra.mxu0 %v4927
    %5580 = vmatprep.subr.bf16.mxu0 %v4932
    %5581 = vmatpush1.bf16.msra.mxu0 %v4931
    %5582 = vmatprep.subr.bf16.mxu0 %v4936
    %5583 = vmatpush1.bf16.msra.mxu0 %v4935
    %5584 = vmatprep.subr.bf16.mxu0 %v4940
    %5585 = vmatpush1.bf16.msra.mxu0 %v4939
    %5586 = vmatprep.subr.bf16.mxu0 %v4944
    %5587 = vmatpush1.bf16.msra.mxu0 %v4943
    %5588 = vmatprep.subr.bf16.mxu0 %v4948
    %5589 = vmatpush1.bf16.msra.mxu0 %v4947
    %5590 = vmatprep.subr.bf16.mxu0 %v4952
    %5591 = vmatpush1.bf16.msra.mxu0 %v4951
    %5592 = vmatprep.subr.bf16.mxu0 %v4956
    %5593 = vmatpush1.bf16.msra.mxu0 %v4955
    %5594 = vmatprep.subr.bf16.mxu0 %v4960
    %5595 = vmatpush1.bf16.msra.mxu0 %v4959
    %5596 = vmatprep.subr.bf16.mxu0 %v4964
    %5597 = vmatpush1.bf16.msra.mxu0 %v4963
    %5598 = vmatprep.subr.bf16.mxu0 %v4968
    %5599 = vmatpush1.bf16.msra.mxu0 %v4967
    %5600 = vmatprep.mubr.bf16.mxu0 %v3790
    %5601 = vmatmul.mubr.bf16.gmra.mrb[0].mxu0 %v3789
    %v5602 = vpop.f32.mrb[0].mxu0
    %v5603 = vadd.f32 %v5560, %v5602
    %v5604 = vpop.f32.mrb[0].mxu0
    %v5605 = vadd.f32 %v5562, %v5604
    %v5606 = vpop.f32.mrb[0].mxu0
    %v5607 = vadd.f32 %v5564, %v5606
    %v5608 = vpop.f32.mrb[0].mxu0
    %v5609 = vadd.f32 %v5566, %v5608
    %5610 = vdwg.mxu0
    %5611 = vmatprep.subr.bf16.mxu0 %v4972
    %5612 = vmatpush1.bf16.msra.mxu0 %v4971
    %5613 = vmatprep.subr.bf16.mxu0 %v4976
    %5614 = vmatpush1.bf16.msra.mxu0 %v4975
    %5615 = vmatprep.subr.bf16.mxu0 %v4980
    %5616 = vmatpush1.bf16.msra.mxu0 %v4979
    %5617 = vmatprep.subr.bf16.mxu0 %v4984
    %5618 = vmatpush1.bf16.msra.mxu0 %v4983
    %5619 = vmatprep.subr.bf16.mxu0 %v4988
    %5620 = vmatpush1.bf16.msra.mxu0 %v4987
    %5621 = vmatprep.subr.bf16.mxu0 %v4992
    %5622 = vmatpush1.bf16.msra.mxu0 %v4991
    %5623 = vmatprep.subr.bf16.mxu0 %v4996
    %5624 = vmatpush1.bf16.msra.mxu0 %v4995
    %5625 = vmatprep.subr.bf16.mxu0 %v5000
    %5626 = vmatpush1.bf16.msra.mxu0 %v4999
    %5627 = vmatprep.subr.bf16.mxu0 %v5004
    %5628 = vmatpush1.bf16.msra.mxu0 %v5003
    %5629 = vmatprep.subr.bf16.mxu0 %v5008
    %5630 = vmatpush1.bf16.msra.mxu0 %v5007
    %5631 = vmatprep.subr.bf16.mxu0 %v5012
    %5632 = vmatpush1.bf16.msra.mxu0 %v5011
    %5633 = vmatprep.subr.bf16.mxu0 %v5016
    %5634 = vmatpush1.bf16.msra.mxu0 %v5015
    %5635 = vmatprep.subr.bf16.mxu0 %v5020
    %5636 = vmatpush1.bf16.msra.mxu0 %v5019
    %5637 = vmatprep.subr.bf16.mxu0 %v5024
    %5638 = vmatpush1.bf16.msra.mxu0 %v5023
    %5639 = vmatprep.subr.bf16.mxu0 %v5028
    %5640 = vmatpush1.bf16.msra.mxu0 %v5027
    %5641 = vmatprep.subr.bf16.mxu0 %v5032
    %5642 = vmatpush1.bf16.msra.mxu0 %v5031
    %5643 = vmatprep.mubr.bf16.mxu0 %v3792
    %5644 = vmatmul.mubr.bf16.gmra.mrb[0].mxu0 %v3791
    %v5645 = vpop.f32.mrb[0].mxu0
    %v5646 = vadd.f32 %v5603, %v5645
    %v5647 = vpop.f32.mrb[0].mxu0
    %v5648 = vadd.f32 %v5605, %v5647
    %v5649 = vpop.f32.mrb[0].mxu0
    %v5650 = vadd.f32 %v5607, %v5649
    %v5651 = vpop.f32.mrb[0].mxu0
    %v5652 = vadd.f32 %v5609, %v5651
    %5653 = vdwg.mxu0
    %5654 = vmatprep.subr.bf16.mxu0 %v5036
    %5655 = vmatpush1.bf16.msra.mxu0 %v5035
    %5656 = vmatprep.subr.bf16.mxu0 %v5040
    %5657 = vmatpush1.bf16.msra.mxu0 %v5039
    %5658 = vmatprep.subr.bf16.mxu0 %v5044
    %5659 = vmatpush1.bf16.msra.mxu0 %v5043
    %5660 = vmatprep.subr.bf16.mxu0 %v5048
    %5661 = vmatpush1.bf16.msra.mxu0 %v5047
    %5662 = vmatprep.subr.bf16.mxu0 %v5052
    %5663 = vmatpush1.bf16.msra.mxu0 %v5051
    %5664 = vmatprep.subr.bf16.mxu0 %v5056
    %5665 = vmatpush1.bf16.msra.mxu0 %v5055
    %5666 = vmatprep.subr.bf16.mxu0 %v5060
    %5667 = vmatpush1.bf16.msra.mxu0 %v5059
    %5668 = vmatprep.subr.bf16.mxu0 %v5064
    %5669 = vmatpush1.bf16.msra.mxu0 %v5063
    %5670 = vmatprep.subr.bf16.mxu0 %v5068
    %5671 = vmatpush1.bf16.msra.mxu0 %v5067
    %5672 = vmatprep.subr.bf16.mxu0 %v5072
    %5673 = vmatpush1.bf16.msra.mxu0 %v5071
    %5674 = vmatprep.subr.bf16.mxu0 %v5076
    %5675 = vmatpush1.bf16.msra.mxu0 %v5075
    %5676 = vmatprep.subr.bf16.mxu0 %v5080
    %5677 = vmatpush1.bf16.msra.mxu0 %v5079
    %5678 = vmatprep.subr.bf16.mxu0 %v5084
    %5679 = vmatpush1.bf16.msra.mxu0 %v5083
    %5680 = vmatprep.subr.bf16.mxu0 %v5088
    %5681 = vmatpush1.bf16.msra.mxu0 %v5087
    %5682 = vmatprep.subr.bf16.mxu0 %v5092
    %5683 = vmatpush1.bf16.msra.mxu0 %v5091
    %5684 = vmatprep.subr.bf16.mxu0 %v5096
    %5685 = vmatpush1.bf16.msra.mxu0 %v5095
    %5686 = vmatprep.mubr.bf16.mxu0 %v3794
    %5687 = vmatmul.mubr.bf16.gmra.mrb[0].mxu0 %v3793
    %v5688 = vpop.f32.mrb[0].mxu0
    %v5689 = vadd.f32 %v5646, %v5688
    %v5690 = vpop.f32.mrb[0].mxu0
    %v5691 = vadd.f32 %v5648, %v5690
    %v5692 = vpop.f32.mrb[0].mxu0
    %v5693 = vadd.f32 %v5650, %v5692
    %v5694 = vpop.f32.mrb[0].mxu0
    %v5695 = vadd.f32 %v5652, %v5694
    %5696 = vdwg.mxu0
    %vm5697 = vcmp.gt.f32.partialorder %v5517, 0.0
    %vm5698 = vcmp.gt.f32.partialorder %v5519, 0.0
    %vm5699 = vcmp.gt.f32.partialorder %v5689, 0.0
    %vm5700 = vcmp.gt.f32.partialorder %v5691, 0.0
    %vm5701 = vcmp.gt.f32.partialorder %v5521, 0.0
    %vm5702 = vcmp.gt.f32.partialorder %v5523, 0.0
    %vm5703 = vcmp.gt.f32.partialorder %v5693, 0.0
    %vm5704 = vcmp.gt.f32.partialorder %v5695, 0.0
    %v5705 = vmul.f32 %v5517, 0.2
    %v5706 = vmul.f32 %v5519, 0.2
    %v5707 = vmul.f32 %v5689, 0.2
    %v5708 = vmul.f32 %v5691, 0.2
    %v5709 = vmul.f32 %v5521, 0.2
    %v5710 = vmul.f32 %v5523, 0.2
    %v5711 = vmul.f32 %v5693, 0.2
    %v5712 = vmul.f32 %v5695, 0.2
    %v5713 = vsel %vm5697, %v5517, %v5705
    %v5714 = vsel %vm5698, %v5519, %v5706
    %v5715 = vsel %vm5699, %v5689, %v5707
    %v5716 = vsel %vm5700, %v5691, %v5708
    %v5717 = vsel %vm5701, %v5521, %v5709
    %v5718 = vsel %vm5702, %v5523, %v5710
    %v5719 = vsel %vm5703, %v5693, %v5711
    %v5720 = vsel %vm5704, %v5695, %v5712
    %v5721 = vld [vmem:[#allocation15] sm:$0xf]
    %v5722 = vpack.c.bf16 %v5717, %v5713
    %v5723 = vpack.c.bf16 %v5718, %v5714
    %v5724 = vpack.c.bf16 %v5719, %v5715
    %v5725 = vpack.c.bf16 %v5720, %v5716
    %v5726 = vld [vmem:[#allocation7] sm:$0x1]
    %5728 = vset.pattern.permute.xlu0 0
    %5729 = vperm.xlu0 %5728, %v5726
    %v5730 = vpop.permute.xlu0 %5729
    %v5732 = vlaneseq
    %v5733 = vshrl.u32 %v5732, 7
    %v5734 = vsub.s32 0, %v5733
    %v5735 = vrot.slane %v5730, %v5734
    %v5738 = vunpack.c.l.s4 1966171168
    %v5739 = vunpack.c.0.s8 %v5738
    %v5740 = vlaneseq
    %v5741 = vshrl.u32 %v5740, 7
    %v5742 = vsub.s32 %v5739, %v5741
    %v5743 = vrot.slane %v5721, %v5742
    %v5744 = vcombine.high %v5743, %v5743
    %v5746 = vunpack.c.l.s4 1966171168
    %v5747 = vunpack.c.0.s8 %v5746
    %v5748 = vlaneseq
    %v5749 = vshrl.u32 %v5748, 7
    %v5750 = vsub.s32 %v5747, %v5749
    %v5751 = vrot.slane %v5743, %v5750
    %v5753 = vunpack.c.l.s4 1966171168
    %v5754 = vunpack.c.0.s8 %v5753
    %v5755 = vlaneseq
    %v5756 = vshrl.u32 %v5755, 7
    %v5757 = vsub.s32 %v5754, %v5756
    %v5758 = vrot.slane %v5744, %v5757
    %v5759 = vcombine.high %v5751, %v5751
    %v5760 = vcombine.high %v5758, %v5758
    %5765 = vmatprep.subr.bf16.mxu0 %v5723
    %5766 = vmatpush1.bf16.xpose.msra.mxu0 %v5722
    %5767 = vmatprep.subr.bf16.mxu0 0
    %5768 = vmatpush1.bf16.xpose.msra.mxu0 0
    %5769 = vmatprep.subr.bf16.mxu0 0
    %5770 = vmatpush1.bf16.xpose.msra.mxu0 0
    %5771 = vmatprep.subr.bf16.mxu0 0
    %5772 = vmatpush1.bf16.xpose.msra.mxu0 0
    %5773 = vmatprep.subr.bf16.mxu0 0
    %5774 = vmatpush1.bf16.xpose.msra.mxu0 0
    %5775 = vmatprep.subr.bf16.mxu0 0
    %5776 = vmatpush1.bf16.xpose.msra.mxu0 0
    %5777 = vmatprep.subr.bf16.mxu0 0
    %5778 = vmatpush1.bf16.xpose.msra.mxu0 0
    %5779 = vmatprep.subr.bf16.mxu0 0
    %5780 = vmatpush1.bf16.xpose.msra.mxu0 0
    %5781 = vmatprep.subr.bf16.mxu0 0
    %5782 = vmatpush1.bf16.xpose.msra.mxu0 0
    %5783 = vmatprep.subr.bf16.mxu0 0
    %5784 = vmatpush1.bf16.xpose.msra.mxu0 0
    %5785 = vmatprep.subr.bf16.mxu0 0
    %5786 = vmatpush1.bf16.xpose.msra.mxu0 0
    %5787 = vmatprep.subr.bf16.mxu0 0
    %5788 = vmatpush1.bf16.xpose.msra.mxu0 0
    %5789 = vmatprep.subr.bf16.mxu0 0
    %5790 = vmatpush1.bf16.xpose.msra.mxu0 0
    %5791 = vmatprep.subr.bf16.mxu0 0
    %5792 = vmatpush1.bf16.xpose.msra.mxu0 0
    %5793 = vmatprep.subr.bf16.mxu0 0
    %5794 = vmatpush1.bf16.xpose.msra.mxu0 0
    %5795 = vmatprep.subr.bf16.mxu0 0
    %5796 = vmatpush1.bf16.xpose.msra.mxu0 0
    %5797 = vmatprep.mubr.bf16.mxu0 %v5758
    %5798 = vmatmul.mubr.bf16.gmra.mrb[0].mxu0 %v5751
    %v5799 = vpop.f32.mrb[0].mxu0
    %v5800 = vadd.f32 %v5735, %v5799
    %v5801 = vpop.f32.mrb[0].mxu0
    %v5802 = vpop.f32.mrb[0].mxu0
    %v5803 = vpop.f32.mrb[0].mxu0
    %5804 = vdwg.mxu0
    %5805 = vmatprep.subr.bf16.mxu0 %v5725
    %5806 = vmatpush1.bf16.xpose.msra.mxu0 %v5724
    %5807 = vmatprep.subr.bf16.mxu0 0
    %5808 = vmatpush1.bf16.xpose.msra.mxu0 0
    %5809 = vmatprep.subr.bf16.mxu0 0
    %5810 = vmatpush1.bf16.xpose.msra.mxu0 0
    %5811 = vmatprep.subr.bf16.mxu0 0
    %5812 = vmatpush1.bf16.xpose.msra.mxu0 0
    %5813 = vmatprep.subr.bf16.mxu0 0
    %5814 = vmatpush1.bf16.xpose.msra.mxu0 0
    %5815 = vmatprep.subr.bf16.mxu0 0
    %5816 = vmatpush1.bf16.xpose.msra.mxu0 0
    %5817 = vmatprep.subr.bf16.mxu0 0
    %5818 = vmatpush1.bf16.xpose.msra.mxu0 0
    %5819 = vmatprep.subr.bf16.mxu0 0
    %5820 = vmatpush1.bf16.xpose.msra.mxu0 0
    %5821 = vmatprep.subr.bf16.mxu0 0
    %5822 = vmatpush1.bf16.xpose.msra.mxu0 0
    %5823 = vmatprep.subr.bf16.mxu0 0
    %5824 = vmatpush1.bf16.xpose.msra.mxu0 0
    %5825 = vmatprep.subr.bf16.mxu0 0
    %5826 = vmatpush1.bf16.xpose.msra.mxu0 0
    %5827 = vmatprep.subr.bf16.mxu0 0
    %5828 = vmatpush1.bf16.xpose.msra.mxu0 0
    %5829 = vmatprep.subr.bf16.mxu0 0
    %5830 = vmatpush1.bf16.xpose.msra.mxu0 0
    %5831 = vmatprep.subr.bf16.mxu0 0
    %5832 = vmatpush1.bf16.xpose.msra.mxu0 0
    %5833 = vmatprep.subr.bf16.mxu0 0
    %5834 = vmatpush1.bf16.xpose.msra.mxu0 0
    %5835 = vmatprep.subr.bf16.mxu0 0
    %5836 = vmatpush1.bf16.xpose.msra.mxu0 0
    %5837 = vmatprep.mubr.bf16.mxu0 %v5760
    %5838 = vmatmul.mubr.bf16.gmra.mrb[0].mxu0 %v5759
    %v5839 = vpop.f32.mrb[0].mxu0
    %v5840 = vadd.f32 %v5800, %v5839
    %v5841 = vpop.f32.mrb[0].mxu0
    %v5842 = vpop.f32.mrb[0].mxu0
    %v5843 = vpop.f32.mrb[0].mxu0
    %5844 = vdwg.mxu0
    %v5845 = vxor.u32 %v5840, 2147483648
    %v5846 = vmul.f32 %v5845, 1.442695
    %v5847 = vpow.pop %v5846
    %v5848 = vadd.f32 %v5847, 1.0
    %v5849 = vrcp.pop %v5848
    %v5850 = vmul.f32 1.0, %v5849
    %vm5851 = vcmask 122880
    %5852 = vst.msk [vmem:[%s8] sm:$0x1] %vm5851, %v5850
    // Predicated region
    $region50: #{_forward.2} parent=1 // pred_check
      _
    $region51: #{_forward.2} parent=1 // pred_check_branch
      %5854 = sbr.rel (0) target = $region53
    $region52: #{_forward.2} parent=1 // pred_region
      _
    $region53: #{_forward.2} parent=1 // pred_fallthru
      _
    // Predicated region
    $region54: #{_forward.2} parent=1 // pred_check
      _
    $region55: #{_forward.2} parent=1 // pred_check_branch
      %5856 = sbr.rel (0) target = $region57
    $region56: #{_forward.2} parent=1 // pred_region
      _
    $region57: #{_forward.2} parent=1 // pred_fallthru
      _
    %5857 = vsyncpa [#allocation9], 1
    %5858 = vsyncpa [#allocation11], 1
    %5859 = vsyncpa [#allocation14], 1

</llo_original>
